<compile_context>
chip_gen: v7x
topology: tpu7x:2x2x1
jax: 0.10.0
libtpu: 0.0.40
codegen_flags: <defaults>
</compile_context>

<pallas_src>
import jax
import jax.numpy as jnp
from jax.experimental import pallas as pl
from jax.experimental.pallas import tpu as pltpu

# ---- model hyper-parameters (small, consistent with Encoder.__init__) -------
N_LAYERS = 2
N_HEAD = 4
D_MODEL = 32
D_INNER = 64
D_K = D_MODEL // N_HEAD
D_V = D_MODEL // N_HEAD
EPS = 1e-6
G_STACK = 2 * N_LAYERS * N_HEAD          # folded (Wq·Wk^T) and (Wv·Wfc) mats


def _layer_norm(x, gamma, beta):
    # PyTorch LayerNorm: biased variance over last dim, eps inside sqrt.
    mu = jnp.mean(x, axis=-1, keepdims=True)
    var = jnp.mean((x - mu) ** 2, axis=-1, keepdims=True)
    return (x - mu) * jax.lax.rsqrt(var + EPS) * gamma + beta


def encoder_kernel(x_ref, mask_ref, au_ref, w1_ref, w2_ref, vec_ref,
                   out_ref, attn_ref):
    bb, L, _ = x_ref.shape
    H = N_HEAD

    x = x_ref[...].astype(jnp.float32)                    # (bb, L, D)
    x2 = x.reshape(bb * L, D_MODEL)                       # residual / FFN rows

    # additive attention-mask bias, computed once, shared by all heads/layers
    mask = mask_ref[...].astype(jnp.float32)              # (bb, L, L), 1 = keep
    bias = (mask - 1.0) * 1e9                             # 0 keep / -1e9 masked
    bias = jnp.broadcast_to(bias[None], (H, bb, L, L)).reshape(H * bb, L, L)

    # x replicated over heads for the score matmuls (hoisted, loop-invariant)
    xh = jnp.broadcast_to(x[None], (H, bb, L, D_MODEL)).reshape(H * bb, L, D_MODEL)

    # ---- hoisted folded projections for ALL layers --------------------------
    # Every layer consumes src_seq (reference quirk), so x·(Wq·Wk^T/sqrt(dk))
    # and x·(Wv·Wfc) for every layer/head are loop-invariant: one batched
    # matmul over the folded-weight stack (no weight replication at all).
    xg = jnp.broadcast_to(x2[None], (G_STACK, bb * L, D_MODEL))
    zau = jnp.einsum('gnd,gde->gne', xg, au_ref[...],
                     preferred_element_type=jnp.float32)  # (G, bb*L, D)
    zau = zau.reshape(G_STACK, bb, L, D_MODEL)
    zq_all = zau[:N_LAYERS * H]                           # x @ (Wq·scale·Wk^T)
    zu_all = zau[N_LAYERS * H:]                           # x @ (Wv·Wfc)

    y = x2
    for layer in range(N_LAYERS):
        # per-layer slices of the hoisted projections, head-major batch (h, b)
        qh = zq_all[layer * H:(layer + 1) * H].reshape(H * bb, L, D_MODEL)
        uh = zu_all[layer * H:(layer + 1) * H].reshape(H * bb, L, D_MODEL)

        # ---- attention scores: x·A_h·x^T  (contraction width D=32)
        s = jnp.einsum('gqd,gkd->gqk', qh, xh,
                       preferred_element_type=jnp.float32)   # (H*bb, L, L)
        s = s + bias
        s = s - jnp.max(s, axis=-1, keepdims=True)            # stable softmax
        e = jnp.exp(s)
        p = e / jnp.sum(e, axis=-1, keepdims=True)             # exact divide
        attn_ref[layer] = p.reshape(H, bb, L, L)               # one slab / layer

        # ---- value path already folded through W_fc: o = sum_h p_h·(x·Wv_h·Wfc_h)
        oh = jnp.einsum('gqk,gkd->gqd', p, uh,
                        preferred_element_type=jnp.float32)   # (H*bb, L, D)
        o = jnp.sum(oh.reshape(H, bb, L, D_MODEL), axis=0)
        o = o.reshape(bb * L, D_MODEL)

        # lane-0-aligned packed LayerNorm gammas/betas and FFN biases
        vec = vec_ref[layer]                                  # (6, 128)
        ln1g, ln1b = vec[0:1, :D_MODEL], vec[1:2, :D_MODEL]
        b1 = vec[2:3, :D_INNER]
        b2 = vec[3:4, :D_MODEL]
        ln2g, ln2b = vec[4:5, :D_MODEL], vec[5:6, :D_MODEL]

        # residual (layer input = src_seq, per the reference forward) + post-LN
        o = _layer_norm(o + x2, ln1g, ln1b)

        # ---- position-wise feed forward
        h1 = jnp.maximum(
            jnp.dot(o, w1_ref[layer], preferred_element_type=jnp.float32) + b1, 0.0)
        h2 = jnp.dot(h1, w2_ref[layer], preferred_element_type=jnp.float32) + b2
        y = _layer_norm(h2 + o, ln2g, ln2b)

    out_ref[...] = y.reshape(bb, L, D_MODEL).astype(out_ref.dtype)


def _num_tensorcores():
    """Dual-TensorCore chips (v4/v5p megacore, v7x) can shard the batch;
    single-TC chips (v5e, v6e) always run a single block."""
    try:
        kind = jax.devices()[0].device_kind.lower()
    except Exception:
        return 1
    if any(tag in kind for tag in ("v4", "v5p", "v7", "7x")):
        return 2
    return 1


def encoder_forward(src_seq, src_mask, packed_params):
    """Matches Encoder.forward: returns (enc_output, [attn per layer])."""
    B, L, D = src_seq.shape
    assert D == D_MODEL
    au, w1, w2, vecs = packed_params

    # Only split across TensorCores when each core gets real work
    # (>= ~256 activation rows); with tiny batches keep grid=(1,).
    n_tc = _num_tensorcores()
    grid_n = 1
    if n_tc > 1 and B % n_tc == 0 and (B // n_tc) * L >= 256:
        grid_n = n_tc
    bb = B // grid_n

    def fixed(shape):
        return pl.BlockSpec(shape, lambda g, _n=len(shape): (0,) * _n)

    in_specs = [
        pl.BlockSpec((bb, L, D_MODEL), lambda g: (g, 0, 0)),   # src_seq block
        pl.BlockSpec((bb, L, L), lambda g: (g, 0, 0)),         # mask block
        fixed((G_STACK, D_MODEL, D_MODEL)),                    # folded A / U stack
        fixed((N_LAYERS, D_MODEL, D_INNER)),                   # FFN w_1
        fixed((N_LAYERS, D_INNER, D_MODEL)),                   # FFN w_2
        fixed((N_LAYERS, 6, 128)),                             # LN + bias pack
    ]
    out_specs = [
        pl.BlockSpec((bb, L, D_MODEL), lambda g: (g, 0, 0)),
        pl.BlockSpec((N_LAYERS, N_HEAD, bb, L, L), lambda g: (0, 0, g, 0, 0)),
    ]
    out_shape = [
        jax.ShapeDtypeStruct((B, L, D_MODEL), jnp.float32),
        jax.ShapeDtypeStruct((N_LAYERS, N_HEAD, B, L, L), jnp.float32),
    ]

    enc_out, attn_all = pl.pallas_call(
        encoder_kernel,
        grid=(grid_n,),
        in_specs=in_specs,
        out_specs=out_specs,
        out_shape=out_shape,
        compiler_params=pltpu.CompilerParams(dimension_semantics=("parallel",)),
    )(src_seq, src_mask.astype(jnp.float32), au, w1, w2, vecs)

    # host-side: (H, B, L, L) -> (B, H, L, L) per layer (cheap XLA transpose)
    attn_list = [jnp.transpose(attn_all[i], (1, 0, 2, 3)) for i in range(N_LAYERS)]
    return enc_out, attn_list


def init_layer_params(key):
    """Natural (PyTorch-equivalent) parameters for one EncoderLayer.
    Linear weights are stored (in_features, out_features) so y = x @ W.
    q/k/v/fc projections carry no bias (attention-is-all-you-need style);
    FFN linears carry biases."""
    ks = jax.random.split(key, 6)

    def lin(k, fan_in, fan_out):
        return jax.random.normal(k, (fan_in, fan_out), jnp.float32) / jnp.sqrt(
            jnp.float32(fan_in))

    return dict(
        wq=lin(ks[0], D_MODEL, N_HEAD * D_K),
        wk=lin(ks[1], D_MODEL, N_HEAD * D_K),
        wv=lin(ks[2], D_MODEL, N_HEAD * D_V),
        wfc=lin(ks[3], N_HEAD * D_V, D_MODEL),
        ln1g=jnp.ones((D_MODEL,), jnp.float32),
        ln1b=jnp.zeros((D_MODEL,), jnp.float32),
        w1=lin(ks[4], D_MODEL, D_INNER),
        b1=jnp.zeros((D_INNER,), jnp.float32),
        w2=lin(ks[5], D_INNER, D_MODEL),
        b2=jnp.zeros((D_MODEL,), jnp.float32),
        ln2g=jnp.ones((D_MODEL,), jnp.float32),
        ln2b=jnp.zeros((D_MODEL,), jnp.float32),
    )


def pack_params(layer_params):
    """One-time host-side packing / folding:
       A[l,h] = (Wq_h / sqrt(d_k)) @ Wk_h^T   (D, D)   -> score kernel
       U[l,h] = Wv_h @ Wfc_h                  (D, D)   -> value path
    stacked into a single (2*N_LAYERS*N_HEAD, D, D) tensor; LN params and FFN
    biases go into lane-0-aligned 128-wide rows."""
    scale = 1.0 / (D_K ** 0.5)

    a_mats, u_mats = [], []
    for p in layer_params:
        for h in range(N_HEAD):
            wq_h = p["wq"][:, h * D_K:(h + 1) * D_K] * scale     # (D, d_k)
            wk_h = p["wk"][:, h * D_K:(h + 1) * D_K]             # (D, d_k)
            a_mats.append(wq_h @ wk_h.T)                         # (D, D)
    for p in layer_params:
        for h in range(N_HEAD):
            wv_h = p["wv"][:, h * D_V:(h + 1) * D_V]             # (D, d_v)
            wfc_h = p["wfc"][h * D_V:(h + 1) * D_V, :]           # (d_v, D)
            u_mats.append(wv_h @ wfc_h)                          # (D, D)
    au = jnp.stack(a_mats + u_mats)                              # (2*NL*H, D, D)

    w1 = jnp.stack([p["w1"] for p in layer_params])              # (NL, D, D_INNER)
    w2 = jnp.stack([p["w2"] for p in layer_params])              # (NL, D_INNER, D)

    def pad128(v):
        return jnp.pad(v, (0, 128 - v.shape[0]))

    vecs = jnp.stack([
        jnp.stack([pad128(p["ln1g"]), pad128(p["ln1b"]), pad128(p["b1"]),
                   pad128(p["b2"]), pad128(p["ln2g"]), pad128(p["ln2b"])])
        for p in layer_params])                                  # (NL, 6, 128)
    return au, w1, w2, vecs


if __name__ == "__main__":
    B, L = 2, 8
    key = jax.random.PRNGKey(0)
    k_x, k_p = jax.random.split(key)

    src_seq = jax.random.normal(k_x, (B, L, D_MODEL), jnp.float32)
    # padding-style mask: last two key positions masked out for every query
    src_mask = jnp.ones((B, L, L), jnp.float32).at[:, :, L - 2:].set(0.0)

    layer_params = [
        init_layer_params(jax.random.fold_in(k_p, i)) for i in range(N_LAYERS)
    ]
    packed = pack_params(layer_params)

    enc_output, attn_list = encoder_forward(src_seq, src_mask, packed)
    jax.block_until_ready(enc_output)
    for a in attn_list:
        jax.block_until_ready(a)

    assert enc_output.shape == (B, L, D_MODEL)
    assert len(attn_list) == N_LAYERS
    assert attn_list[0].shape == (B, N_HEAD, L, L)
    print("KERNEL_OK")
</pallas_src>

<mosaic_0001>
module attributes {stable_mosaic.version = 11 : i64} {
  func.func @encoder_kernel(%arg0: i32, %arg1: memref<2x8x32xf32, #tpu.memory_space<vmem>>, %arg2: memref<2x8x8xf32, #tpu.memory_space<vmem>>, %arg3: memref<16x32x32xf32, #tpu.memory_space<vmem>>, %arg4: memref<2x32x64xf32, #tpu.memory_space<vmem>>, %arg5: memref<2x64x32xf32, #tpu.memory_space<vmem>>, %arg6: memref<2x6x128xf32, #tpu.memory_space<vmem>>, %arg7: memref<2x8x32xf32, #tpu.memory_space<vmem>>, %arg8: memref<2x4x2x8x8xf32, #tpu.memory_space<vmem>>) attributes {dimension_semantics = [#tpu.dimension_semantics<parallel>], iteration_bounds = array<i64: 1>, scalar_prefetch = 0 : i64, scratch_operands = 0 : i64, tpu.core_type = #tpu.core_type<tc>, window_params = [{transform_indices = @transform_0, window_bounds = array<i64: 2, 8, 32>}, {transform_indices = @transform_1, window_bounds = array<i64: 2, 8, 8>}, {pipeline_mode = #tpu.pipeline_mode<synchronous>, transform_indices = @transform_2, window_bounds = array<i64: 16, 32, 32>}, {pipeline_mode = #tpu.pipeline_mode<synchronous>, transform_indices = @transform_3, window_bounds = array<i64: 2, 32, 64>}, {pipeline_mode = #tpu.pipeline_mode<synchronous>, transform_indices = @transform_4, window_bounds = array<i64: 2, 64, 32>}, {pipeline_mode = #tpu.pipeline_mode<synchronous>, transform_indices = @transform_5, window_bounds = array<i64: 2, 6, 128>}, {transform_indices = @transform_6, window_bounds = array<i64: 2, 8, 32>}, {transform_indices = @transform_7, window_bounds = array<i64: 2, 4, 2, 8, 8>}]} {
    %c0 = arith.constant 0 : index
    %c0_0 = arith.constant 0 : index
    %c0_1 = arith.constant 0 : index
    %0 = vector.load %arg1[%c0, %c0_0, %c0_1] : memref<2x8x32xf32, #tpu.memory_space<vmem>>, vector<2x8x32xf32>
    %1 = vector.shape_cast %0 : vector<2x8x32xf32> to vector<16x32xf32>
    %c0_2 = arith.constant 0 : index
    %c0_3 = arith.constant 0 : index
    %c0_4 = arith.constant 0 : index
    %2 = vector.load %arg2[%c0_2, %c0_3, %c0_4] : memref<2x8x8xf32, #tpu.memory_space<vmem>>, vector<2x8x8xf32>
    %cst = arith.constant 1.000000e+00 : f32
    %3 = vector.broadcast %cst : f32 to vector<2x8x8xf32>
    %4 = arith.subf %2, %3 : vector<2x8x8xf32>
    %cst_5 = arith.constant 1.000000e+09 : f32
    %5 = vector.broadcast %cst_5 : f32 to vector<2x8x8xf32>
    %6 = arith.mulf %4, %5 : vector<2x8x8xf32>
    %7 = vector.shape_cast %6 : vector<2x8x8xf32> to vector<1x2x8x8xf32>
    %8 = vector.shape_cast %7 : vector<1x2x8x8xf32> to vector<1x2x8x8xf32>
    %9 = vector.broadcast %8 : vector<1x2x8x8xf32> to vector<4x2x8x8xf32>
    %10 = vector.shape_cast %9 : vector<4x2x8x8xf32> to vector<8x8x8xf32>
    %11 = vector.shape_cast %0 : vector<2x8x32xf32> to vector<1x2x8x32xf32>
    %12 = vector.shape_cast %11 : vector<1x2x8x32xf32> to vector<1x2x8x32xf32>
    %13 = vector.broadcast %12 : vector<1x2x8x32xf32> to vector<4x2x8x32xf32>
    %14 = vector.shape_cast %13 : vector<4x2x8x32xf32> to vector<8x8x32xf32>
    %15 = vector.shape_cast %1 : vector<16x32xf32> to vector<1x16x32xf32>
    %16 = vector.shape_cast %15 : vector<1x16x32xf32> to vector<1x16x32xf32>
    %17 = vector.broadcast %16 : vector<1x16x32xf32> to vector<16x16x32xf32>
    %c0_6 = arith.constant 0 : index
    %c0_7 = arith.constant 0 : index
    %c0_8 = arith.constant 0 : index
    %18 = vector.load %arg3[%c0_6, %c0_7, %c0_8] : memref<16x32x32xf32, #tpu.memory_space<vmem>>, vector<16x32x32xf32>
    "tpu.trace_start"() <{level = 10 : i32, message = "gnd,gde->gne"}> : () -> ()
    %cst_9 = arith.constant dense<0.000000e+00> : vector<16x16x32xf32>
    %19 = tpu.matmul %17, %18, %cst_9 {dimension_numbers = #tpu.dot_dimension_numbers<[2], [1], [1], [2], [0, 0, 0, 1, 1, 2], [0], [0]>} : vector<16x16x32xf32>, vector<16x32x32xf32>, vector<16x16x32xf32> -> vector<16x16x32xf32>
    "tpu.trace_stop"() : () -> ()
    %20 = vector.shape_cast %19 : vector<16x16x32xf32> to vector<16x2x8x32xf32>
    %21 = vector.extract_strided_slice %20 {offsets = [0, 0, 0, 0], sizes = [8, 2, 8, 32], strides = [1, 1, 1, 1]} : vector<16x2x8x32xf32> to vector<8x2x8x32xf32>
    %22 = vector.extract_strided_slice %20 {offsets = [8, 0, 0, 0], sizes = [8, 2, 8, 32], strides = [1, 1, 1, 1]} : vector<16x2x8x32xf32> to vector<8x2x8x32xf32>
    %23 = vector.extract_strided_slice %21 {offsets = [0, 0, 0, 0], sizes = [4, 2, 8, 32], strides = [1, 1, 1, 1]} : vector<8x2x8x32xf32> to vector<4x2x8x32xf32>
    %24 = vector.shape_cast %23 : vector<4x2x8x32xf32> to vector<8x8x32xf32>
    "tpu.trace_start"() <{level = 10 : i32, message = "gqd,gkd->gqk"}> : () -> ()
    %cst_10 = arith.constant dense<0.000000e+00> : vector<8x8x8xf32>
    %25 = tpu.matmul %24, %14, %cst_10 {dimension_numbers = #tpu.dot_dimension_numbers<[2], [2], [1], [1], [0, 0, 0, 1, 1, 1], [0], [0]>} : vector<8x8x32xf32>, vector<8x8x32xf32>, vector<8x8x8xf32> -> vector<8x8x8xf32>
    "tpu.trace_stop"() : () -> ()
    %26 = arith.addf %25, %10 : vector<8x8x8xf32>
    %cst_11 = arith.constant dense<0xFF800000> : vector<8x8xf32>
    %27 = vector.multi_reduction <maximumf>, %26, %cst_11 [2] : vector<8x8x8xf32> to vector<8x8xf32>
    %28 = vector.shape_cast %27 : vector<8x8xf32> to vector<8x8x1xf32>
    %29 = vector.broadcast %28 : vector<8x8x1xf32> to vector<8x8x8xf32>
    %30 = arith.subf %26, %29 : vector<8x8x8xf32>
    %31 = math.exp %30 : vector<8x8x8xf32>
    %cst_12 = arith.constant dense<0.000000e+00> : vector<8x8xf32>
    %32 = vector.multi_reduction <add>, %31, %cst_12 [2] : vector<8x8x8xf32> to vector<8x8xf32>
    %33 = vector.shape_cast %32 : vector<8x8xf32> to vector<8x8x1xf32>
    %34 = vector.broadcast %33 : vector<8x8x1xf32> to vector<8x8x8xf32>
    %35 = arith.divf %31, %34 : vector<8x8x8xf32>
    %36 = vector.shape_cast %35 : vector<8x8x8xf32> to vector<4x2x8x8xf32>
    %c0_13 = arith.constant 0 : index
    %c0_14 = arith.constant 0 : index
    %c0_15 = arith.constant 0 : index
    %c0_16 = arith.constant 0 : index
    %c0_17 = arith.constant 0 : index
    %37 = vector.load %arg8[%c0_13, %c0_14, %c0_15, %c0_16, %c0_17] : memref<2x4x2x8x8xf32, #tpu.memory_space<vmem>>, vector<1x4x2x8x8xf32>
    %38 = vector.shape_cast %37 : vector<1x4x2x8x8xf32> to vector<4x2x8x8xf32>
    %39 = vector.shape_cast %36 : vector<4x2x8x8xf32> to vector<1x4x2x8x8xf32>
    tpu.vector_store %arg8[%c0_13, %c0_14, %c0_15, %c0_16, %c0_17], %39 {strides = array<i32>} : memref<2x4x2x8x8xf32, #tpu.memory_space<vmem>>, vector<1x4x2x8x8xf32>,
    %40 = vector.extract_strided_slice %21 {offsets = [4, 0, 0, 0], sizes = [4, 2, 8, 32], strides = [1, 1, 1, 1]} : vector<8x2x8x32xf32> to vector<4x2x8x32xf32>
    %41 = vector.shape_cast %40 : vector<4x2x8x32xf32> to vector<8x8x32xf32>
    %42 = vector.extract_strided_slice %22 {offsets = [4, 0, 0, 0], sizes = [4, 2, 8, 32], strides = [1, 1, 1, 1]} : vector<8x2x8x32xf32> to vector<4x2x8x32xf32>
    %43 = vector.shape_cast %42 : vector<4x2x8x32xf32> to vector<8x8x32xf32>
    "tpu.trace_start"() <{level = 10 : i32, message = "gqd,gkd->gqk"}> : () -> ()
    %cst_18 = arith.constant dense<0.000000e+00> : vector<8x8x8xf32>
    %44 = tpu.matmul %41, %14, %cst_18 {dimension_numbers = #tpu.dot_dimension_numbers<[2], [2], [1], [1], [0, 0, 0, 1, 1, 1], [0], [0]>} : vector<8x8x32xf32>, vector<8x8x32xf32>, vector<8x8x8xf32> -> vector<8x8x8xf32>
    "tpu.trace_stop"() : () -> ()
    %45 = arith.addf %44, %10 : vector<8x8x8xf32>
    %cst_19 = arith.constant dense<0xFF800000> : vector<8x8xf32>
    %46 = vector.multi_reduction <maximumf>, %45, %cst_19 [2] : vector<8x8x8xf32> to vector<8x8xf32>
    %47 = vector.shape_cast %46 : vector<8x8xf32> to vector<8x8x1xf32>
    %48 = vector.broadcast %47 : vector<8x8x1xf32> to vector<8x8x8xf32>
    %49 = arith.subf %45, %48 : vector<8x8x8xf32>
    %50 = math.exp %49 : vector<8x8x8xf32>
    %cst_20 = arith.constant dense<0.000000e+00> : vector<8x8xf32>
    %51 = vector.multi_reduction <add>, %50, %cst_20 [2] : vector<8x8x8xf32> to vector<8x8xf32>
    %52 = vector.shape_cast %51 : vector<8x8xf32> to vector<8x8x1xf32>
    %53 = vector.broadcast %52 : vector<8x8x1xf32> to vector<8x8x8xf32>
    %54 = arith.divf %50, %53 : vector<8x8x8xf32>
    %55 = vector.shape_cast %54 : vector<8x8x8xf32> to vector<4x2x8x8xf32>
    %c1 = arith.constant 1 : index
    %c0_21 = arith.constant 0 : index
    %c0_22 = arith.constant 0 : index
    %c0_23 = arith.constant 0 : index
    %c0_24 = arith.constant 0 : index
    %56 = vector.load %arg8[%c1, %c0_21, %c0_22, %c0_23, %c0_24] : memref<2x4x2x8x8xf32, #tpu.memory_space<vmem>>, vector<1x4x2x8x8xf32>
    %57 = vector.shape_cast %56 : vector<1x4x2x8x8xf32> to vector<4x2x8x8xf32>
    %58 = vector.shape_cast %55 : vector<4x2x8x8xf32> to vector<1x4x2x8x8xf32>
    tpu.vector_store %arg8[%c1, %c0_21, %c0_22, %c0_23, %c0_24], %58 {strides = array<i32>} : memref<2x4x2x8x8xf32, #tpu.memory_space<vmem>>, vector<1x4x2x8x8xf32>,
    "tpu.trace_start"() <{level = 10 : i32, message = "gqk,gkd->gqd"}> : () -> ()
    %cst_25 = arith.constant dense<0.000000e+00> : vector<8x8x32xf32>
    %59 = tpu.matmul %54, %43, %cst_25 {dimension_numbers = #tpu.dot_dimension_numbers<[2], [1], [1], [2], [0, 0, 0, 1, 1, 2], [0], [0]>} : vector<8x8x8xf32>, vector<8x8x32xf32>, vector<8x8x32xf32> -> vector<8x8x32xf32>
    "tpu.trace_stop"() : () -> ()
    %60 = vector.shape_cast %59 : vector<8x8x32xf32> to vector<4x2x8x32xf32>
    %cst_26 = arith.constant dense<0.000000e+00> : vector<2x8x32xf32>
    %61 = vector.multi_reduction <add>, %60, %cst_26 [0] : vector<4x2x8x32xf32> to vector<2x8x32xf32>
    %62 = vector.shape_cast %61 : vector<2x8x32xf32> to vector<16x32xf32>
    %c1_27 = arith.constant 1 : index
    %c0_28 = arith.constant 0 : index
    %c0_29 = arith.constant 0 : index
    %63 = vector.load %arg6[%c1_27, %c0_28, %c0_29] : memref<2x6x128xf32, #tpu.memory_space<vmem>>, vector<1x6x128xf32>
    %64 = vector.shape_cast %63 : vector<1x6x128xf32> to vector<6x128xf32>
    %65 = vector.extract_strided_slice %64 {offsets = [0, 0], sizes = [1, 32], strides = [1, 1]} : vector<6x128xf32> to vector<1x32xf32>
    %66 = vector.extract_strided_slice %64 {offsets = [1, 0], sizes = [1, 32], strides = [1, 1]} : vector<6x128xf32> to vector<1x32xf32>
    %67 = vector.extract_strided_slice %64 {offsets = [2, 0], sizes = [1, 64], strides = [1, 1]} : vector<6x128xf32> to vector<1x64xf32>
    %68 = vector.extract_strided_slice %64 {offsets = [3, 0], sizes = [1, 32], strides = [1, 1]} : vector<6x128xf32> to vector<1x32xf32>
    %69 = vector.extract_strided_slice %64 {offsets = [4, 0], sizes = [1, 32], strides = [1, 1]} : vector<6x128xf32> to vector<1x32xf32>
    %70 = vector.extract_strided_slice %64 {offsets = [5, 0], sizes = [1, 32], strides = [1, 1]} : vector<6x128xf32> to vector<1x32xf32>
    %71 = arith.addf %62, %1 : vector<16x32xf32>
    %cst_30 = arith.constant dense<0.000000e+00> : vector<16xf32>
    %72 = vector.multi_reduction <add>, %71, %cst_30 [1] : vector<16x32xf32> to vector<16xf32>
    %73 = vector.shape_cast %72 : vector<16xf32> to vector<16x1xf32>
    %cst_31 = arith.constant 3.200000e+01 : f32
    %74 = vector.broadcast %cst_31 : f32 to vector<16x1xf32>
    %75 = arith.divf %73, %74 : vector<16x1xf32>
    %76 = vector.broadcast %75 : vector<16x1xf32> to vector<16x32xf32>
    %77 = arith.subf %71, %76 : vector<16x32xf32>
    %78 = arith.mulf %77, %77 : vector<16x32xf32>
    %cst_32 = arith.constant dense<0.000000e+00> : vector<16xf32>
    %79 = vector.multi_reduction <add>, %78, %cst_32 [1] : vector<16x32xf32> to vector<16xf32>
    %80 = vector.shape_cast %79 : vector<16xf32> to vector<16x1xf32>
    %cst_33 = arith.constant 3.200000e+01 : f32
    %81 = vector.broadcast %cst_33 : f32 to vector<16x1xf32>
    %82 = arith.divf %80, %81 : vector<16x1xf32>
    %83 = vector.broadcast %75 : vector<16x1xf32> to vector<16x32xf32>
    %84 = arith.subf %71, %83 : vector<16x32xf32>
    %cst_34 = arith.constant 9.99999997E-7 : f32
    %85 = vector.broadcast %cst_34 : f32 to vector<16x1xf32>
    %86 = arith.addf %82, %85 : vector<16x1xf32>
    %87 = math.rsqrt %86 : vector<16x1xf32>
    %88 = vector.broadcast %87 : vector<16x1xf32> to vector<16x32xf32>
    %89 = arith.mulf %84, %88 : vector<16x32xf32>
    %90 = vector.broadcast %65 : vector<1x32xf32> to vector<16x32xf32>
    %91 = arith.mulf %89, %90 : vector<16x32xf32>
    %92 = vector.broadcast %66 : vector<1x32xf32> to vector<16x32xf32>
    %93 = arith.addf %91, %92 : vector<16x32xf32>
    %c1_35 = arith.constant 1 : index
    %c0_36 = arith.constant 0 : index
    %c0_37 = arith.constant 0 : index
    %94 = vector.load %arg4[%c1_35, %c0_36, %c0_37] : memref<2x32x64xf32, #tpu.memory_space<vmem>>, vector<1x32x64xf32>
    %95 = vector.shape_cast %94 : vector<1x32x64xf32> to vector<32x64xf32>
    %cst_38 = arith.constant dense<0.000000e+00> : vector<16x64xf32>
    %96 = tpu.matmul %93, %95, %cst_38 {dimension_numbers = #tpu.dot_dimension_numbers<[1], [0], [0], [1], [0, 0, 1, 1], [], []>} : vector<16x32xf32>, vector<32x64xf32>, vector<16x64xf32> -> vector<16x64xf32>
    %97 = vector.broadcast %67 : vector<1x64xf32> to vector<16x64xf32>
    %98 = arith.addf %96, %97 : vector<16x64xf32>
    %cst_39 = arith.constant 0.000000e+00 : f32
    %99 = vector.broadcast %cst_39 : f32 to vector<16x64xf32>
    %100 = arith.maximumf %98, %99 : vector<16x64xf32>
    %c1_40 = arith.constant 1 : index
    %c0_41 = arith.constant 0 : index
    %c0_42 = arith.constant 0 : index
    %101 = vector.load %arg5[%c1_40, %c0_41, %c0_42] : memref<2x64x32xf32, #tpu.memory_space<vmem>>, vector<1x64x32xf32>
    %102 = vector.shape_cast %101 : vector<1x64x32xf32> to vector<64x32xf32>
    %cst_43 = arith.constant dense<0.000000e+00> : vector<16x32xf32>
    %103 = tpu.matmul %100, %102, %cst_43 {dimension_numbers = #tpu.dot_dimension_numbers<[1], [0], [0], [1], [0, 0, 1, 1], [], []>} : vector<16x64xf32>, vector<64x32xf32>, vector<16x32xf32> -> vector<16x32xf32>
    %104 = vector.broadcast %68 : vector<1x32xf32> to vector<16x32xf32>
    %105 = arith.addf %103, %104 : vector<16x32xf32>
    %106 = arith.addf %105, %93 : vector<16x32xf32>
    %cst_44 = arith.constant dense<0.000000e+00> : vector<16xf32>
    %107 = vector.multi_reduction <add>, %106, %cst_44 [1] : vector<16x32xf32> to vector<16xf32>
    %108 = vector.shape_cast %107 : vector<16xf32> to vector<16x1xf32>
    %cst_45 = arith.constant 3.200000e+01 : f32
    %109 = vector.broadcast %cst_45 : f32 to vector<16x1xf32>
    %110 = arith.divf %108, %109 : vector<16x1xf32>
    %111 = vector.broadcast %110 : vector<16x1xf32> to vector<16x32xf32>
    %112 = arith.subf %106, %111 : vector<16x32xf32>
    %113 = arith.mulf %112, %112 : vector<16x32xf32>
    %cst_46 = arith.constant dense<0.000000e+00> : vector<16xf32>
    %114 = vector.multi_reduction <add>, %113, %cst_46 [1] : vector<16x32xf32> to vector<16xf32>
    %115 = vector.shape_cast %114 : vector<16xf32> to vector<16x1xf32>
    %cst_47 = arith.constant 3.200000e+01 : f32
    %116 = vector.broadcast %cst_47 : f32 to vector<16x1xf32>
    %117 = arith.divf %115, %116 : vector<16x1xf32>
    %118 = vector.broadcast %110 : vector<16x1xf32> to vector<16x32xf32>
    %119 = arith.subf %106, %118 : vector<16x32xf32>
    %cst_48 = arith.constant 9.99999997E-7 : f32
    %120 = vector.broadcast %cst_48 : f32 to vector<16x1xf32>
    %121 = arith.addf %117, %120 : vector<16x1xf32>
    %122 = math.rsqrt %121 : vector<16x1xf32>
    %123 = vector.broadcast %122 : vector<16x1xf32> to vector<16x32xf32>
    %124 = arith.mulf %119, %123 : vector<16x32xf32>
    %125 = vector.broadcast %69 : vector<1x32xf32> to vector<16x32xf32>
    %126 = arith.mulf %124, %125 : vector<16x32xf32>
    %127 = vector.broadcast %70 : vector<1x32xf32> to vector<16x32xf32>
    %128 = arith.addf %126, %127 : vector<16x32xf32>
    %129 = vector.shape_cast %128 : vector<16x32xf32> to vector<2x8x32xf32>
    %c0_49 = arith.constant 0 : index
    %c0_50 = arith.constant 0 : index
    %c0_51 = arith.constant 0 : index
    %130 = vector.load %arg7[%c0_49, %c0_50, %c0_51] : memref<2x8x32xf32, #tpu.memory_space<vmem>>, vector<2x8x32xf32>
    tpu.vector_store %arg7[%c0_49, %c0_50, %c0_51], %129 {strides = array<i32>} : memref<2x8x32xf32, #tpu.memory_space<vmem>>, vector<2x8x32xf32>,
    return
  }
  func.func @transform_0(%arg0: i32) -> (i32, i32, i32) {
    %c0_i32 = arith.constant 0 : i32
    %c0_i32_0 = arith.constant 0 : i32
    %c0_i32_1 = arith.constant 0 : i32
    return %arg0, %c0_i32, %c0_i32_0 : i32, i32, i32
  }
  func.func @transform_1(%arg0: i32) -> (i32, i32, i32) {
    %c0_i32 = arith.constant 0 : i32
    %c0_i32_0 = arith.constant 0 : i32
    %c0_i32_1 = arith.constant 0 : i32
    return %arg0, %c0_i32, %c0_i32_0 : i32, i32, i32
  }
  func.func @transform_2(%arg0: i32) -> (i32, i32, i32) {
    %c0_i32 = arith.constant 0 : i32
    %c0_i32_0 = arith.constant 0 : i32
    %c0_i32_1 = arith.constant 0 : i32
    %c0_i32_2 = arith.constant 0 : i32
    return %c0_i32, %c0_i32_0, %c0_i32_1 : i32, i32, i32
  }
  func.func @transform_3(%arg0: i32) -> (i32, i32, i32) {
    %c0_i32 = arith.constant 0 : i32
    %c0_i32_0 = arith.constant 0 : i32
    %c0_i32_1 = arith.constant 0 : i32
    %c0_i32_2 = arith.constant 0 : i32
    return %c0_i32, %c0_i32_0, %c0_i32_1 : i32, i32, i32
  }
  func.func @transform_4(%arg0: i32) -> (i32, i32, i32) {
    %c0_i32 = arith.constant 0 : i32
    %c0_i32_0 = arith.constant 0 : i32
    %c0_i32_1 = arith.constant 0 : i32
    %c0_i32_2 = arith.constant 0 : i32
    return %c0_i32, %c0_i32_0, %c0_i32_1 : i32, i32, i32
  }
  func.func @transform_5(%arg0: i32) -> (i32, i32, i32) {
    %c0_i32 = arith.constant 0 : i32
    %c0_i32_0 = arith.constant 0 : i32
    %c0_i32_1 = arith.constant 0 : i32
    %c0_i32_2 = arith.constant 0 : i32
    return %c0_i32, %c0_i32_0, %c0_i32_1 : i32, i32, i32
  }
  func.func @transform_6(%arg0: i32) -> (i32, i32, i32) {
    %c0_i32 = arith.constant 0 : i32
    %c0_i32_0 = arith.constant 0 : i32
    %c0_i32_1 = arith.constant 0 : i32
    return %arg0, %c0_i32, %c0_i32_0 : i32, i32, i32
  }
  func.func @transform_7(%arg0: i32) -> (i32, i32, i32, i32, i32) {
    %c0_i32 = arith.constant 0 : i32
    %c0_i32_0 = arith.constant 0 : i32
    %c0_i32_1 = arith.constant 0 : i32
    %c0_i32_2 = arith.constant 0 : i32
    %c0_i32_3 = arith.constant 0 : i32
    return %c0_i32, %c0_i32_0, %arg0, %c0_i32_1, %c0_i32_2 : i32, i32, i32, i32, i32
  }
}

</mosaic_0001>

<llo_original>
// kernel: tpu_custom_call.1
$region0: #{tpu_custom_call.1}
  #allocation0 [shape = 'u32[]', space=smem, size = 0x4, offset = 0x4, fixed_abs, tag = 'smem constant byte address 0x4 - core index']
  #allocation1 [shape = 'u32[144,128]{1,0:T(1,128)}', space=vmem, size = 0x12000, scoped, tag = 'internal scratch']
  %s0 = inlined_call_operand.vmem [shape: f32[2,8,32], index: 0, kind: input, shape index: {}]
  %s1 = inlined_call_operand.vmem [shape: f32[2,8,8], index: 1, kind: input, shape index: {}]
  %s2 = inlined_call_operand.hbm [shape: f32[16,32,32], index: 2, kind: input, shape index: {}]
  %s3 = inlined_call_operand.vmem [shape: f32[2,32,64], index: 3, kind: input, shape index: {}]
  %s4 = inlined_call_operand.vmem [shape: f32[2,64,32], index: 4, kind: input, shape index: {}]
  %s5 = inlined_call_operand.vmem [shape: f32[2,6,128], index: 5, kind: input, shape index: {}]
  %s6 = inlined_call_operand.hbm [shape: f32[2,8,32], index: 6, kind: output, shape index: {0}]
  %s7 = inlined_call_operand.hbm [shape: f32[2,4,2,8,8], index: 7, kind: output, shape index: {1}]
  %8 = xla_tuple %s6, %s7
  %s9 = sld [smem:[#allocation0]]
  $region46: #{tpu_custom_call.1} parent=0
    _
  %s11 = ssub.s32 1, %s9
  %s12 = scalar_select 0, %s11, %s9
  $region1: #{tpu_custom_call.1} parent=0
    #allocation2 [shape = 'u8[262144]{0}', space=vmem, size = 0x40000, scoped, tag = 'input window, operand 2, single buffered']
    #allocation3 [shape = 's32[1]{0}', space=sflag, size = 0x4, scoped, tag = 'scoped memory for tpu_custom_call.1']
    #allocation4 [shape = 's32[1]{0}', space=sflag, size = 0x4, scoped, tag = 'scoped memory for tpu_custom_call.1']
    #allocation5 [shape = 'u8[8192]{0}', space=vmem, size = 0x2000, scoped, tag = 'output window, operand 0, single buffered']
    #allocation6 [shape = 'u8[65536]{0}', space=vmem, size = 0x10000, scoped, tag = 'output window, operand 1, single buffered']
    #allocation7 [shape = 's32[1]{0}', space=sflag, size = 0x4, scoped, tag = 'scoped memory for tpu_custom_call.1']
    %13 = vsyncpa [#allocation3], 0
    %14 = vsyncpa [#allocation4], 0
    %15 = vsyncpa [#allocation7], 0
    // Predicated region
    $region2: #{tpu_custom_call.1} parent=1 // pred_check
      _
    $region3: #{tpu_custom_call.1} parent=1 // pred_check_branch
      %17 = sbr.rel (0) target = $region5
    $region4: #{tpu_custom_call.1} parent=1 // pred_region
      _
    $region5: #{tpu_custom_call.1} parent=1 // pred_fallthru
      _
    // Predicated region
    $region6: #{tpu_custom_call.1} parent=1 // pred_check
      _
    $region7: #{tpu_custom_call.1} parent=1 // pred_check_branch
      %19 = sbr.rel (0) target = $region9
    $region8: #{tpu_custom_call.1} parent=1 // pred_region
      _
    $region9: #{tpu_custom_call.1} parent=1 // pred_fallthru
      _
    // Predicated region
    $region10: #{tpu_custom_call.1} parent=1 // pred_check
      _
    $region11: #{tpu_custom_call.1} parent=1 // pred_check_branch
      %21 = sbr.rel (0) target = $region13
    $region12: #{tpu_custom_call.1} parent=1 // pred_region
      %s23 = ssub.s32 8192, 8192
      %24 = vsyncadd [#allocation3], %s23
      %s25 = sshll.u32 [#allocation2], 4
      %s26 = int_to_ptr.vmem [resolvable:$true] %s25
      %31 = dma.hbm_to_vmem [thread:$0]  %s2, 8192, %s26, [#allocation3], 128, 128, 8
    $region13: #{tpu_custom_call.1} parent=1 // pred_fallthru
      _
    // Predicated region
    $region14: #{tpu_custom_call.1} parent=1 // pred_check
      _
    $region15: #{tpu_custom_call.1} parent=1 // pred_check_branch
      %33 = sbr.rel (0) target = $region17
    $region16: #{tpu_custom_call.1} parent=1 // pred_region
      _
    $region17: #{tpu_custom_call.1} parent=1 // pred_fallthru
      _
    // Predicated region
    $region18: #{tpu_custom_call.1} parent=1 // pred_check
      _
    $region19: #{tpu_custom_call.1} parent=1 // pred_check_branch
      %35 = sbr.rel (0) target = $region21
    $region20: #{tpu_custom_call.1} parent=1 // pred_region
      _
    $region21: #{tpu_custom_call.1} parent=1 // pred_fallthru
      _
    // Predicated region
    $region22: #{tpu_custom_call.1} parent=1 // pred_check
      _
    $region23: #{tpu_custom_call.1} parent=1 // pred_check_branch
      %37 = sbr.rel (0) target = $region25
    $region24: #{tpu_custom_call.1} parent=1 // pred_region
      _
    $region25: #{tpu_custom_call.1} parent=1 // pred_fallthru
      _
    // Predicated region
    $region26: #{tpu_custom_call.1} parent=1 // pred_check
      _
    $region27: #{tpu_custom_call.1} parent=1 // pred_check_branch
      %39 = sbr.rel (0) target = $region29
    $region28: #{tpu_custom_call.1} parent=1 // pred_region
      %40 = dma.done [#allocation3], 8192
    $region29: #{tpu_custom_call.1} parent=1 // pred_fallthru
      _
    %v41 = vld [vmem:[%s0] sm:$0xff]
    %v42 = vld [vmem:[%s0 + $0x8] sm:$0xff]
    %v43 = vld [vmem:[%s1] sm:$0xff]
    %v44 = vld [vmem:[%s1 + $0x8] sm:$0xff]
    %v45 = vsub.f32 %v43, 1.0
    %v46 = vsub.f32 %v44, 1.0
    %v47 = vmul.f32 %v45, 1e+09
    %v48 = vmul.f32 %v46, 1e+09
    %v49 = vld [vmem:[#allocation2] sm:$0xff]
    %v50 = vld [vmem:[#allocation2 + $0x8] sm:$0xff]
    %v51 = vld [vmem:[#allocation2 + $0x10] sm:$0xff]
    %v52 = vld [vmem:[#allocation2 + $0x18] sm:$0xff]
    %v53 = vld [vmem:[#allocation2 + $0x20] sm:$0xff]
    %v54 = vld [vmem:[#allocation2 + $0x28] sm:$0xff]
    %v55 = vld [vmem:[#allocation2 + $0x30] sm:$0xff]
    %v56 = vld [vmem:[#allocation2 + $0x38] sm:$0xff]
    %v57 = vld [vmem:[#allocation2 + $0x40] sm:$0xff]
    %v58 = vld [vmem:[#allocation2 + $0x48] sm:$0xff]
    %v59 = vld [vmem:[#allocation2 + $0x50] sm:$0xff]
    %v60 = vld [vmem:[#allocation2 + $0x58] sm:$0xff]
    %v61 = vld [vmem:[#allocation2 + $0x60] sm:$0xff]
    %v62 = vld [vmem:[#allocation2 + $0x68] sm:$0xff]
    %v63 = vld [vmem:[#allocation2 + $0x70] sm:$0xff]
    %v64 = vld [vmem:[#allocation2 + $0x78] sm:$0xff]
    %v65 = vld [vmem:[#allocation2 + $0x80] sm:$0xff]
    %v66 = vld [vmem:[#allocation2 + $0x88] sm:$0xff]
    %v67 = vld [vmem:[#allocation2 + $0x90] sm:$0xff]
    %v68 = vld [vmem:[#allocation2 + $0x98] sm:$0xff]
    %v69 = vld [vmem:[#allocation2 + $0xa0] sm:$0xff]
    %v70 = vld [vmem:[#allocation2 + $0xa8] sm:$0xff]
    %v71 = vld [vmem:[#allocation2 + $0xb0] sm:$0xff]
    %v72 = vld [vmem:[#allocation2 + $0xb8] sm:$0xff]
    %v73 = vld [vmem:[#allocation2 + $0xc0] sm:$0xff]
    %v74 = vld [vmem:[#allocation2 + $0xc8] sm:$0xff]
    %v75 = vld [vmem:[#allocation2 + $0xd0] sm:$0xff]
    %v76 = vld [vmem:[#allocation2 + $0xd8] sm:$0xff]
    %v77 = vld [vmem:[#allocation2 + $0xe0] sm:$0xff]
    %v78 = vld [vmem:[#allocation2 + $0xe8] sm:$0xff]
    %v79 = vld [vmem:[#allocation2 + $0xf0] sm:$0xff]
    %v80 = vld [vmem:[#allocation2 + $0xf8] sm:$0xff]
    %v81 = vld [vmem:[#allocation2 + $0x180] sm:$0xff]
    %v82 = vld [vmem:[#allocation2 + $0x188] sm:$0xff]
    %v83 = vld [vmem:[#allocation2 + $0x190] sm:$0xff]
    %v84 = vld [vmem:[#allocation2 + $0x198] sm:$0xff]
    %v85 = vld [vmem:[#allocation2 + $0x1a0] sm:$0xff]
    %v86 = vld [vmem:[#allocation2 + $0x1a8] sm:$0xff]
    %v87 = vld [vmem:[#allocation2 + $0x1b0] sm:$0xff]
    %v88 = vld [vmem:[#allocation2 + $0x1b8] sm:$0xff]
    %v89 = vld [vmem:[#allocation2 + $0x1c0] sm:$0xff]
    %v90 = vld [vmem:[#allocation2 + $0x1c8] sm:$0xff]
    %v91 = vld [vmem:[#allocation2 + $0x1d0] sm:$0xff]
    %v92 = vld [vmem:[#allocation2 + $0x1d8] sm:$0xff]
    %v93 = vld [vmem:[#allocation2 + $0x1e0] sm:$0xff]
    %v94 = vld [vmem:[#allocation2 + $0x1e8] sm:$0xff]
    %v95 = vld [vmem:[#allocation2 + $0x1f0] sm:$0xff]
    %v96 = vld [vmem:[#allocation2 + $0x1f8] sm:$0xff]
    %vm97 = vcmask 261120
    %v99 = vsel %vm97, %v41, 0
    %v102 = vsel %vm97, %v42, 0
    %104 = vmatprep.subr.mxu0 0.0
    %105 = vmatpush1.msra.mxu0 %v49
    %106 = vmatprep.subr.mxu0 0.0
    %107 = vmatpush1.msra.mxu0 %v50
    %108 = vmatprep.subr.mxu0 0.0
    %109 = vmatpush1.msra.mxu0 %v51
    %110 = vmatprep.subr.mxu0 0.0
    %111 = vmatpush1.msra.mxu0 %v52
    %112 = vmatprep.subr.mxu0 0.0
    %113 = vmatpush1.msra.mxu0 0.0
    %114 = vmatprep.subr.mxu0 0.0
    %115 = vmatpush1.msra.mxu0 0.0
    %116 = vmatprep.subr.mxu0 0.0
    %117 = vmatpush1.msra.mxu0 0.0
    %118 = vmatprep.subr.mxu0 0.0
    %119 = vmatpush1.msra.mxu0 0.0
    %120 = vmatprep.subr.mxu0 0.0
    %121 = vmatpush1.msra.mxu0 0.0
    %122 = vmatprep.subr.mxu0 0.0
    %123 = vmatpush1.msra.mxu0 0.0
    %124 = vmatprep.subr.mxu0 0.0
    %125 = vmatpush1.msra.mxu0 0.0
    %126 = vmatprep.subr.mxu0 0.0
    %127 = vmatpush1.msra.mxu0 0.0
    %128 = vmatprep.subr.mxu0 0.0
    %129 = vmatpush1.msra.mxu0 0.0
    %130 = vmatprep.subr.mxu0 0.0
    %131 = vmatpush1.msra.mxu0 0.0
    %132 = vmatprep.subr.mxu0 0.0
    %133 = vmatpush1.msra.mxu0 0.0
    %134 = vmatprep.subr.mxu0 0.0
    %135 = vmatpush1.msra.mxu0 0.0
    %136 = vmatprep.subr.mxu0 0.0
    %137 = vmatpush1.msra.mxu0 0.0
    %138 = vmatprep.subr.mxu0 0.0
    %139 = vmatpush1.msra.mxu0 0.0
    %140 = vmatprep.subr.mxu0 0.0
    %141 = vmatpush1.msra.mxu0 0.0
    %142 = vmatprep.subr.mxu0 0.0
    %143 = vmatpush1.msra.mxu0 0.0
    %144 = vmatprep.subr.mxu0 0.0
    %145 = vmatpush1.msra.mxu0 0.0
    %146 = vmatprep.subr.mxu0 0.0
    %147 = vmatpush1.msra.mxu0 0.0
    %148 = vmatprep.subr.mxu0 0.0
    %149 = vmatpush1.msra.mxu0 0.0
    %150 = vmatprep.subr.mxu0 0.0
    %151 = vmatpush1.msra.mxu0 0.0
    %152 = vmatprep.subr.mxu0 0.0
    %153 = vmatpush1.msra.mxu0 0.0
    %154 = vmatprep.subr.mxu0 0.0
    %155 = vmatpush1.msra.mxu0 0.0
    %156 = vmatprep.subr.mxu0 0.0
    %157 = vmatpush1.msra.mxu0 0.0
    %158 = vmatprep.subr.mxu0 0.0
    %159 = vmatpush1.msra.mxu0 0.0
    %160 = vmatprep.subr.mxu0 0.0
    %161 = vmatpush1.msra.mxu0 0.0
    %162 = vmatprep.subr.mxu0 0.0
    %163 = vmatpush1.msra.mxu0 0.0
    %164 = vmatprep.subr.mxu0 0.0
    %165 = vmatpush1.msra.mxu0 0.0
    %166 = vmatprep.subr.mxu0 0.0
    %167 = vmatpush1.msra.mxu0 0.0
    %168 = vmatprep.mubr.f32.mxu0 0.0
    %169 = vmatmul.mubr.f32.gmra.mrb[0].mxu0 %v99
    %v170 = vpop.f32.mrb[0].mxu0
    %v171 = vadd.f32 0.0, %v170
    %v172 = vpop.f32.mrb[0].mxu0
    %173 = vmatprep.mubr.f32.mxu0 0.0
    %174 = vmatmul.mubr.f32.gmra.mrb[0].mxu0 %v102
    %v175 = vpop.f32.mrb[0].mxu0
    %v176 = vadd.f32 0.0, %v175
    %v177 = vpop.f32.mrb[0].mxu0
    %178 = vdwg.mxu0
    %179 = vmatprep.subr.mxu0 0.0
    %180 = vmatpush1.msra.mxu0 %v53
    %181 = vmatprep.subr.mxu0 0.0
    %182 = vmatpush1.msra.mxu0 %v54
    %183 = vmatprep.subr.mxu0 0.0
    %184 = vmatpush1.msra.mxu0 %v55
    %185 = vmatprep.subr.mxu0 0.0
    %186 = vmatpush1.msra.mxu0 %v56
    %187 = vmatprep.subr.mxu0 0.0
    %188 = vmatpush1.msra.mxu0 0.0
    %189 = vmatprep.subr.mxu0 0.0
    %190 = vmatpush1.msra.mxu0 0.0
    %191 = vmatprep.subr.mxu0 0.0
    %192 = vmatpush1.msra.mxu0 0.0
    %193 = vmatprep.subr.mxu0 0.0
    %194 = vmatpush1.msra.mxu0 0.0
    %195 = vmatprep.subr.mxu0 0.0
    %196 = vmatpush1.msra.mxu0 0.0
    %197 = vmatprep.subr.mxu0 0.0
    %198 = vmatpush1.msra.mxu0 0.0
    %199 = vmatprep.subr.mxu0 0.0
    %200 = vmatpush1.msra.mxu0 0.0
    %201 = vmatprep.subr.mxu0 0.0
    %202 = vmatpush1.msra.mxu0 0.0
    %203 = vmatprep.subr.mxu0 0.0
    %204 = vmatpush1.msra.mxu0 0.0
    %205 = vmatprep.subr.mxu0 0.0
    %206 = vmatpush1.msra.mxu0 0.0
    %207 = vmatprep.subr.mxu0 0.0
    %208 = vmatpush1.msra.mxu0 0.0
    %209 = vmatprep.subr.mxu0 0.0
    %210 = vmatpush1.msra.mxu0 0.0
    %211 = vmatprep.subr.mxu0 0.0
    %212 = vmatpush1.msra.mxu0 0.0
    %213 = vmatprep.subr.mxu0 0.0
    %214 = vmatpush1.msra.mxu0 0.0
    %215 = vmatprep.subr.mxu0 0.0
    %216 = vmatpush1.msra.mxu0 0.0
    %217 = vmatprep.subr.mxu0 0.0
    %218 = vmatpush1.msra.mxu0 0.0
    %219 = vmatprep.subr.mxu0 0.0
    %220 = vmatpush1.msra.mxu0 0.0
    %221 = vmatprep.subr.mxu0 0.0
    %222 = vmatpush1.msra.mxu0 0.0
    %223 = vmatprep.subr.mxu0 0.0
    %224 = vmatpush1.msra.mxu0 0.0
    %225 = vmatprep.subr.mxu0 0.0
    %226 = vmatpush1.msra.mxu0 0.0
    %227 = vmatprep.subr.mxu0 0.0
    %228 = vmatpush1.msra.mxu0 0.0
    %229 = vmatprep.subr.mxu0 0.0
    %230 = vmatpush1.msra.mxu0 0.0
    %231 = vmatprep.subr.mxu0 0.0
    %232 = vmatpush1.msra.mxu0 0.0
    %233 = vmatprep.subr.mxu0 0.0
    %234 = vmatpush1.msra.mxu0 0.0
    %235 = vmatprep.subr.mxu0 0.0
    %236 = vmatpush1.msra.mxu0 0.0
    %237 = vmatprep.subr.mxu0 0.0
    %238 = vmatpush1.msra.mxu0 0.0
    %239 = vmatprep.subr.mxu0 0.0
    %240 = vmatpush1.msra.mxu0 0.0
    %241 = vmatprep.subr.mxu0 0.0
    %242 = vmatpush1.msra.mxu0 0.0
    %243 = vmatprep.mubr.f32.mxu0 0.0
    %244 = vmatmul.mubr.f32.gmra.mrb[0].mxu0 %v99
    %v245 = vpop.f32.mrb[0].mxu0
    %v246 = vadd.f32 0.0, %v245
    %v247 = vpop.f32.mrb[0].mxu0
    %248 = vmatprep.mubr.f32.mxu0 0.0
    %249 = vmatmul.mubr.f32.gmra.mrb[0].mxu0 %v102
    %v250 = vpop.f32.mrb[0].mxu0
    %v251 = vadd.f32 0.0, %v250
    %v252 = vpop.f32.mrb[0].mxu0
    %253 = vdwg.mxu0
    %254 = vmatprep.subr.mxu0 0.0
    %255 = vmatpush1.msra.mxu0 %v57
    %256 = vmatprep.subr.mxu0 0.0
    %257 = vmatpush1.msra.mxu0 %v58
    %258 = vmatprep.subr.mxu0 0.0
    %259 = vmatpush1.msra.mxu0 %v59
    %260 = vmatprep.subr.mxu0 0.0
    %261 = vmatpush1.msra.mxu0 %v60
    %262 = vmatprep.subr.mxu0 0.0
    %263 = vmatpush1.msra.mxu0 0.0
    %264 = vmatprep.subr.mxu0 0.0
    %265 = vmatpush1.msra.mxu0 0.0
    %266 = vmatprep.subr.mxu0 0.0
    %267 = vmatpush1.msra.mxu0 0.0
    %268 = vmatprep.subr.mxu0 0.0
    %269 = vmatpush1.msra.mxu0 0.0
    %270 = vmatprep.subr.mxu0 0.0
    %271 = vmatpush1.msra.mxu0 0.0
    %272 = vmatprep.subr.mxu0 0.0
    %273 = vmatpush1.msra.mxu0 0.0
    %274 = vmatprep.subr.mxu0 0.0
    %275 = vmatpush1.msra.mxu0 0.0
    %276 = vmatprep.subr.mxu0 0.0
    %277 = vmatpush1.msra.mxu0 0.0
    %278 = vmatprep.subr.mxu0 0.0
    %279 = vmatpush1.msra.mxu0 0.0
    %280 = vmatprep.subr.mxu0 0.0
    %281 = vmatpush1.msra.mxu0 0.0
    %282 = vmatprep.subr.mxu0 0.0
    %283 = vmatpush1.msra.mxu0 0.0
    %284 = vmatprep.subr.mxu0 0.0
    %285 = vmatpush1.msra.mxu0 0.0
    %286 = vmatprep.subr.mxu0 0.0
    %287 = vmatpush1.msra.mxu0 0.0
    %288 = vmatprep.subr.mxu0 0.0
    %289 = vmatpush1.msra.mxu0 0.0
    %290 = vmatprep.subr.mxu0 0.0
    %291 = vmatpush1.msra.mxu0 0.0
    %292 = vmatprep.subr.mxu0 0.0
    %293 = vmatpush1.msra.mxu0 0.0
    %294 = vmatprep.subr.mxu0 0.0
    %295 = vmatpush1.msra.mxu0 0.0
    %296 = vmatprep.subr.mxu0 0.0
    %297 = vmatpush1.msra.mxu0 0.0
    %298 = vmatprep.subr.mxu0 0.0
    %299 = vmatpush1.msra.mxu0 0.0
    %300 = vmatprep.subr.mxu0 0.0
    %301 = vmatpush1.msra.mxu0 0.0
    %302 = vmatprep.subr.mxu0 0.0
    %303 = vmatpush1.msra.mxu0 0.0
    %304 = vmatprep.subr.mxu0 0.0
    %305 = vmatpush1.msra.mxu0 0.0
    %306 = vmatprep.subr.mxu0 0.0
    %307 = vmatpush1.msra.mxu0 0.0
    %308 = vmatprep.subr.mxu0 0.0
    %309 = vmatpush1.msra.mxu0 0.0
    %310 = vmatprep.subr.mxu0 0.0
    %311 = vmatpush1.msra.mxu0 0.0
    %312 = vmatprep.subr.mxu0 0.0
    %313 = vmatpush1.msra.mxu0 0.0
    %314 = vmatprep.subr.mxu0 0.0
    %315 = vmatpush1.msra.mxu0 0.0
    %316 = vmatprep.subr.mxu0 0.0
    %317 = vmatpush1.msra.mxu0 0.0
    %318 = vmatprep.mubr.f32.mxu0 0.0
    %319 = vmatmul.mubr.f32.gmra.mrb[0].mxu0 %v99
    %v320 = vpop.f32.mrb[0].mxu0
    %v321 = vadd.f32 0.0, %v320
    %v322 = vpop.f32.mrb[0].mxu0
    %323 = vmatprep.mubr.f32.mxu0 0.0
    %324 = vmatmul.mubr.f32.gmra.mrb[0].mxu0 %v102
    %v325 = vpop.f32.mrb[0].mxu0
    %v326 = vadd.f32 0.0, %v325
    %v327 = vpop.f32.mrb[0].mxu0
    %328 = vdwg.mxu0
    %329 = vmatprep.subr.mxu0 0.0
    %330 = vmatpush1.msra.mxu0 %v61
    %331 = vmatprep.subr.mxu0 0.0
    %332 = vmatpush1.msra.mxu0 %v62
    %333 = vmatprep.subr.mxu0 0.0
    %334 = vmatpush1.msra.mxu0 %v63
    %335 = vmatprep.subr.mxu0 0.0
    %336 = vmatpush1.msra.mxu0 %v64
    %337 = vmatprep.subr.mxu0 0.0
    %338 = vmatpush1.msra.mxu0 0.0
    %339 = vmatprep.subr.mxu0 0.0
    %340 = vmatpush1.msra.mxu0 0.0
    %341 = vmatprep.subr.mxu0 0.0
    %342 = vmatpush1.msra.mxu0 0.0
    %343 = vmatprep.subr.mxu0 0.0
    %344 = vmatpush1.msra.mxu0 0.0
    %345 = vmatprep.subr.mxu0 0.0
    %346 = vmatpush1.msra.mxu0 0.0
    %347 = vmatprep.subr.mxu0 0.0
    %348 = vmatpush1.msra.mxu0 0.0
    %349 = vmatprep.subr.mxu0 0.0
    %350 = vmatpush1.msra.mxu0 0.0
    %351 = vmatprep.subr.mxu0 0.0
    %352 = vmatpush1.msra.mxu0 0.0
    %353 = vmatprep.subr.mxu0 0.0
    %354 = vmatpush1.msra.mxu0 0.0
    %355 = vmatprep.subr.mxu0 0.0
    %356 = vmatpush1.msra.mxu0 0.0
    %357 = vmatprep.subr.mxu0 0.0
    %358 = vmatpush1.msra.mxu0 0.0
    %359 = vmatprep.subr.mxu0 0.0
    %360 = vmatpush1.msra.mxu0 0.0
    %361 = vmatprep.subr.mxu0 0.0
    %362 = vmatpush1.msra.mxu0 0.0
    %363 = vmatprep.subr.mxu0 0.0
    %364 = vmatpush1.msra.mxu0 0.0
    %365 = vmatprep.subr.mxu0 0.0
    %366 = vmatpush1.msra.mxu0 0.0
    %367 = vmatprep.subr.mxu0 0.0
    %368 = vmatpush1.msra.mxu0 0.0
    %369 = vmatprep.subr.mxu0 0.0
    %370 = vmatpush1.msra.mxu0 0.0
    %371 = vmatprep.subr.mxu0 0.0
    %372 = vmatpush1.msra.mxu0 0.0
    %373 = vmatprep.subr.mxu0 0.0
    %374 = vmatpush1.msra.mxu0 0.0
    %375 = vmatprep.subr.mxu0 0.0
    %376 = vmatpush1.msra.mxu0 0.0
    %377 = vmatprep.subr.mxu0 0.0
    %378 = vmatpush1.msra.mxu0 0.0
    %379 = vmatprep.subr.mxu0 0.0
    %380 = vmatpush1.msra.mxu0 0.0
    %381 = vmatprep.subr.mxu0 0.0
    %382 = vmatpush1.msra.mxu0 0.0
    %383 = vmatprep.subr.mxu0 0.0
    %384 = vmatpush1.msra.mxu0 0.0
    %385 = vmatprep.subr.mxu0 0.0
    %386 = vmatpush1.msra.mxu0 0.0
    %387 = vmatprep.subr.mxu0 0.0
    %388 = vmatpush1.msra.mxu0 0.0
    %389 = vmatprep.subr.mxu0 0.0
    %390 = vmatpush1.msra.mxu0 0.0
    %391 = vmatprep.subr.mxu0 0.0
    %392 = vmatpush1.msra.mxu0 0.0
    %393 = vmatprep.mubr.f32.mxu0 0.0
    %394 = vmatmul.mubr.f32.gmra.mrb[0].mxu0 %v99
    %v395 = vpop.f32.mrb[0].mxu0
    %v396 = vadd.f32 0.0, %v395
    %v397 = vpop.f32.mrb[0].mxu0
    %398 = vmatprep.mubr.f32.mxu0 0.0
    %399 = vmatmul.mubr.f32.gmra.mrb[0].mxu0 %v102
    %v400 = vpop.f32.mrb[0].mxu0
    %v401 = vadd.f32 0.0, %v400
    %v402 = vpop.f32.mrb[0].mxu0
    %403 = vdwg.mxu0
    %404 = vmatprep.subr.mxu0 0.0
    %405 = vmatpush1.msra.mxu0 %v65
    %406 = vmatprep.subr.mxu0 0.0
    %407 = vmatpush1.msra.mxu0 %v66
    %408 = vmatprep.subr.mxu0 0.0
    %409 = vmatpush1.msra.mxu0 %v67
    %410 = vmatprep.subr.mxu0 0.0
    %411 = vmatpush1.msra.mxu0 %v68
    %412 = vmatprep.subr.mxu0 0.0
    %413 = vmatpush1.msra.mxu0 0.0
    %414 = vmatprep.subr.mxu0 0.0
    %415 = vmatpush1.msra.mxu0 0.0
    %416 = vmatprep.subr.mxu0 0.0
    %417 = vmatpush1.msra.mxu0 0.0
    %418 = vmatprep.subr.mxu0 0.0
    %419 = vmatpush1.msra.mxu0 0.0
    %420 = vmatprep.subr.mxu0 0.0
    %421 = vmatpush1.msra.mxu0 0.0
    %422 = vmatprep.subr.mxu0 0.0
    %423 = vmatpush1.msra.mxu0 0.0
    %424 = vmatprep.subr.mxu0 0.0
    %425 = vmatpush1.msra.mxu0 0.0
    %426 = vmatprep.subr.mxu0 0.0
    %427 = vmatpush1.msra.mxu0 0.0
    %428 = vmatprep.subr.mxu0 0.0
    %429 = vmatpush1.msra.mxu0 0.0
    %430 = vmatprep.subr.mxu0 0.0
    %431 = vmatpush1.msra.mxu0 0.0
    %432 = vmatprep.subr.mxu0 0.0
    %433 = vmatpush1.msra.mxu0 0.0
    %434 = vmatprep.subr.mxu0 0.0
    %435 = vmatpush1.msra.mxu0 0.0
    %436 = vmatprep.subr.mxu0 0.0
    %437 = vmatpush1.msra.mxu0 0.0
    %438 = vmatprep.subr.mxu0 0.0
    %439 = vmatpush1.msra.mxu0 0.0
    %440 = vmatprep.subr.mxu0 0.0
    %441 = vmatpush1.msra.mxu0 0.0
    %442 = vmatprep.subr.mxu0 0.0
    %443 = vmatpush1.msra.mxu0 0.0
    %444 = vmatprep.subr.mxu0 0.0
    %445 = vmatpush1.msra.mxu0 0.0
    %446 = vmatprep.subr.mxu0 0.0
    %447 = vmatpush1.msra.mxu0 0.0
    %448 = vmatprep.subr.mxu0 0.0
    %449 = vmatpush1.msra.mxu0 0.0
    %450 = vmatprep.subr.mxu0 0.0
    %451 = vmatpush1.msra.mxu0 0.0
    %452 = vmatprep.subr.mxu0 0.0
    %453 = vmatpush1.msra.mxu0 0.0
    %454 = vmatprep.subr.mxu0 0.0
    %455 = vmatpush1.msra.mxu0 0.0
    %456 = vmatprep.subr.mxu0 0.0
    %457 = vmatpush1.msra.mxu0 0.0
    %458 = vmatprep.subr.mxu0 0.0
    %459 = vmatpush1.msra.mxu0 0.0
    %460 = vmatprep.subr.mxu0 0.0
    %461 = vmatpush1.msra.mxu0 0.0
    %462 = vmatprep.subr.mxu0 0.0
    %463 = vmatpush1.msra.mxu0 0.0
    %464 = vmatprep.subr.mxu0 0.0
    %465 = vmatpush1.msra.mxu0 0.0
    %466 = vmatprep.subr.mxu0 0.0
    %467 = vmatpush1.msra.mxu0 0.0
    %468 = vmatprep.mubr.f32.mxu0 0.0
    %469 = vmatmul.mubr.f32.gmra.mrb[0].mxu0 %v99
    %v470 = vpop.f32.mrb[0].mxu0
    %v471 = vadd.f32 0.0, %v470
    %v472 = vpop.f32.mrb[0].mxu0
    %473 = vmatprep.mubr.f32.mxu0 0.0
    %474 = vmatmul.mubr.f32.gmra.mrb[0].mxu0 %v102
    %v475 = vpop.f32.mrb[0].mxu0
    %v476 = vadd.f32 0.0, %v475
    %v477 = vpop.f32.mrb[0].mxu0
    %478 = vdwg.mxu0
    %479 = vmatprep.subr.mxu0 0.0
    %480 = vmatpush1.msra.mxu0 %v69
    %481 = vmatprep.subr.mxu0 0.0
    %482 = vmatpush1.msra.mxu0 %v70
    %483 = vmatprep.subr.mxu0 0.0
    %484 = vmatpush1.msra.mxu0 %v71
    %485 = vmatprep.subr.mxu0 0.0
    %486 = vmatpush1.msra.mxu0 %v72
    %487 = vmatprep.subr.mxu0 0.0
    %488 = vmatpush1.msra.mxu0 0.0
    %489 = vmatprep.subr.mxu0 0.0
    %490 = vmatpush1.msra.mxu0 0.0
    %491 = vmatprep.subr.mxu0 0.0
    %492 = vmatpush1.msra.mxu0 0.0
    %493 = vmatprep.subr.mxu0 0.0
    %494 = vmatpush1.msra.mxu0 0.0
    %495 = vmatprep.subr.mxu0 0.0
    %496 = vmatpush1.msra.mxu0 0.0
    %497 = vmatprep.subr.mxu0 0.0
    %498 = vmatpush1.msra.mxu0 0.0
    %499 = vmatprep.subr.mxu0 0.0
    %500 = vmatpush1.msra.mxu0 0.0
    %501 = vmatprep.subr.mxu0 0.0
    %502 = vmatpush1.msra.mxu0 0.0
    %503 = vmatprep.subr.mxu0 0.0
    %504 = vmatpush1.msra.mxu0 0.0
    %505 = vmatprep.subr.mxu0 0.0
    %506 = vmatpush1.msra.mxu0 0.0
    %507 = vmatprep.subr.mxu0 0.0
    %508 = vmatpush1.msra.mxu0 0.0
    %509 = vmatprep.subr.mxu0 0.0
    %510 = vmatpush1.msra.mxu0 0.0
    %511 = vmatprep.subr.mxu0 0.0
    %512 = vmatpush1.msra.mxu0 0.0
    %513 = vmatprep.subr.mxu0 0.0
    %514 = vmatpush1.msra.mxu0 0.0
    %515 = vmatprep.subr.mxu0 0.0
    %516 = vmatpush1.msra.mxu0 0.0
    %517 = vmatprep.subr.mxu0 0.0
    %518 = vmatpush1.msra.mxu0 0.0
    %519 = vmatprep.subr.mxu0 0.0
    %520 = vmatpush1.msra.mxu0 0.0
    %521 = vmatprep.subr.mxu0 0.0
    %522 = vmatpush1.msra.mxu0 0.0
    %523 = vmatprep.subr.mxu0 0.0
    %524 = vmatpush1.msra.mxu0 0.0
    %525 = vmatprep.subr.mxu0 0.0
    %526 = vmatpush1.msra.mxu0 0.0
    %527 = vmatprep.subr.mxu0 0.0
    %528 = vmatpush1.msra.mxu0 0.0
    %529 = vmatprep.subr.mxu0 0.0
    %530 = vmatpush1.msra.mxu0 0.0
    %531 = vmatprep.subr.mxu0 0.0
    %532 = vmatpush1.msra.mxu0 0.0
    %533 = vmatprep.subr.mxu0 0.0
    %534 = vmatpush1.msra.mxu0 0.0
    %535 = vmatprep.subr.mxu0 0.0
    %536 = vmatpush1.msra.mxu0 0.0
    %537 = vmatprep.subr.mxu0 0.0
    %538 = vmatpush1.msra.mxu0 0.0
    %539 = vmatprep.subr.mxu0 0.0
    %540 = vmatpush1.msra.mxu0 0.0
    %541 = vmatprep.subr.mxu0 0.0
    %542 = vmatpush1.msra.mxu0 0.0
    %543 = vmatprep.mubr.f32.mxu0 0.0
    %544 = vmatmul.mubr.f32.gmra.mrb[0].mxu0 %v99
    %v545 = vpop.f32.mrb[0].mxu0
    %v546 = vadd.f32 0.0, %v545
    %v547 = vpop.f32.mrb[0].mxu0
    %548 = vmatprep.mubr.f32.mxu0 0.0
    %549 = vmatmul.mubr.f32.gmra.mrb[0].mxu0 %v102
    %v550 = vpop.f32.mrb[0].mxu0
    %v551 = vadd.f32 0.0, %v550
    %v552 = vpop.f32.mrb[0].mxu0
    %553 = vdwg.mxu0
    %554 = vmatprep.subr.mxu0 0.0
    %555 = vmatpush1.msra.mxu0 %v73
    %556 = vmatprep.subr.mxu0 0.0
    %557 = vmatpush1.msra.mxu0 %v74
    %558 = vmatprep.subr.mxu0 0.0
    %559 = vmatpush1.msra.mxu0 %v75
    %560 = vmatprep.subr.mxu0 0.0
    %561 = vmatpush1.msra.mxu0 %v76
    %562 = vmatprep.subr.mxu0 0.0
    %563 = vmatpush1.msra.mxu0 0.0
    %564 = vmatprep.subr.mxu0 0.0
    %565 = vmatpush1.msra.mxu0 0.0
    %566 = vmatprep.subr.mxu0 0.0
    %567 = vmatpush1.msra.mxu0 0.0
    %568 = vmatprep.subr.mxu0 0.0
    %569 = vmatpush1.msra.mxu0 0.0
    %570 = vmatprep.subr.mxu0 0.0
    %571 = vmatpush1.msra.mxu0 0.0
    %572 = vmatprep.subr.mxu0 0.0
    %573 = vmatpush1.msra.mxu0 0.0
    %574 = vmatprep.subr.mxu0 0.0
    %575 = vmatpush1.msra.mxu0 0.0
    %576 = vmatprep.subr.mxu0 0.0
    %577 = vmatpush1.msra.mxu0 0.0
    %578 = vmatprep.subr.mxu0 0.0
    %579 = vmatpush1.msra.mxu0 0.0
    %580 = vmatprep.subr.mxu0 0.0
    %581 = vmatpush1.msra.mxu0 0.0
    %582 = vmatprep.subr.mxu0 0.0
    %583 = vmatpush1.msra.mxu0 0.0
    %584 = vmatprep.subr.mxu0 0.0
    %585 = vmatpush1.msra.mxu0 0.0
    %586 = vmatprep.subr.mxu0 0.0
    %587 = vmatpush1.msra.mxu0 0.0
    %588 = vmatprep.subr.mxu0 0.0
    %589 = vmatpush1.msra.mxu0 0.0
    %590 = vmatprep.subr.mxu0 0.0
    %591 = vmatpush1.msra.mxu0 0.0
    %592 = vmatprep.subr.mxu0 0.0
    %593 = vmatpush1.msra.mxu0 0.0
    %594 = vmatprep.subr.mxu0 0.0
    %595 = vmatpush1.msra.mxu0 0.0
    %596 = vmatprep.subr.mxu0 0.0
    %597 = vmatpush1.msra.mxu0 0.0
    %598 = vmatprep.subr.mxu0 0.0
    %599 = vmatpush1.msra.mxu0 0.0
    %600 = vmatprep.subr.mxu0 0.0
    %601 = vmatpush1.msra.mxu0 0.0
    %602 = vmatprep.subr.mxu0 0.0
    %603 = vmatpush1.msra.mxu0 0.0
    %604 = vmatprep.subr.mxu0 0.0
    %605 = vmatpush1.msra.mxu0 0.0
    %606 = vmatprep.subr.mxu0 0.0
    %607 = vmatpush1.msra.mxu0 0.0
    %608 = vmatprep.subr.mxu0 0.0
    %609 = vmatpush1.msra.mxu0 0.0
    %610 = vmatprep.subr.mxu0 0.0
    %611 = vmatpush1.msra.mxu0 0.0
    %612 = vmatprep.subr.mxu0 0.0
    %613 = vmatpush1.msra.mxu0 0.0
    %614 = vmatprep.subr.mxu0 0.0
    %615 = vmatpush1.msra.mxu0 0.0
    %616 = vmatprep.subr.mxu0 0.0
    %617 = vmatpush1.msra.mxu0 0.0
    %618 = vmatprep.mubr.f32.mxu0 0.0
    %619 = vmatmul.mubr.f32.gmra.mrb[0].mxu0 %v99
    %v620 = vpop.f32.mrb[0].mxu0
    %v621 = vadd.f32 0.0, %v620
    %v622 = vpop.f32.mrb[0].mxu0
    %623 = vmatprep.mubr.f32.mxu0 0.0
    %624 = vmatmul.mubr.f32.gmra.mrb[0].mxu0 %v102
    %v625 = vpop.f32.mrb[0].mxu0
    %v626 = vadd.f32 0.0, %v625
    %v627 = vpop.f32.mrb[0].mxu0
    %628 = vdwg.mxu0
    %629 = vmatprep.subr.mxu0 0.0
    %630 = vmatpush1.msra.mxu0 %v77
    %631 = vmatprep.subr.mxu0 0.0
    %632 = vmatpush1.msra.mxu0 %v78
    %633 = vmatprep.subr.mxu0 0.0
    %634 = vmatpush1.msra.mxu0 %v79
    %635 = vmatprep.subr.mxu0 0.0
    %636 = vmatpush1.msra.mxu0 %v80
    %637 = vmatprep.subr.mxu0 0.0
    %638 = vmatpush1.msra.mxu0 0.0
    %639 = vmatprep.subr.mxu0 0.0
    %640 = vmatpush1.msra.mxu0 0.0
    %641 = vmatprep.subr.mxu0 0.0
    %642 = vmatpush1.msra.mxu0 0.0
    %643 = vmatprep.subr.mxu0 0.0
    %644 = vmatpush1.msra.mxu0 0.0
    %645 = vmatprep.subr.mxu0 0.0
    %646 = vmatpush1.msra.mxu0 0.0
    %647 = vmatprep.subr.mxu0 0.0
    %648 = vmatpush1.msra.mxu0 0.0
    %649 = vmatprep.subr.mxu0 0.0
    %650 = vmatpush1.msra.mxu0 0.0
    %651 = vmatprep.subr.mxu0 0.0
    %652 = vmatpush1.msra.mxu0 0.0
    %653 = vmatprep.subr.mxu0 0.0
    %654 = vmatpush1.msra.mxu0 0.0
    %655 = vmatprep.subr.mxu0 0.0
    %656 = vmatpush1.msra.mxu0 0.0
    %657 = vmatprep.subr.mxu0 0.0
    %658 = vmatpush1.msra.mxu0 0.0
    %659 = vmatprep.subr.mxu0 0.0
    %660 = vmatpush1.msra.mxu0 0.0
    %661 = vmatprep.subr.mxu0 0.0
    %662 = vmatpush1.msra.mxu0 0.0
    %663 = vmatprep.subr.mxu0 0.0
    %664 = vmatpush1.msra.mxu0 0.0
    %665 = vmatprep.subr.mxu0 0.0
    %666 = vmatpush1.msra.mxu0 0.0
    %667 = vmatprep.subr.mxu0 0.0
    %668 = vmatpush1.msra.mxu0 0.0
    %669 = vmatprep.subr.mxu0 0.0
    %670 = vmatpush1.msra.mxu0 0.0
    %671 = vmatprep.subr.mxu0 0.0
    %672 = vmatpush1.msra.mxu0 0.0
    %673 = vmatprep.subr.mxu0 0.0
    %674 = vmatpush1.msra.mxu0 0.0
    %675 = vmatprep.subr.mxu0 0.0
    %676 = vmatpush1.msra.mxu0 0.0
    %677 = vmatprep.subr.mxu0 0.0
    %678 = vmatpush1.msra.mxu0 0.0
    %679 = vmatprep.subr.mxu0 0.0
    %680 = vmatpush1.msra.mxu0 0.0
    %681 = vmatprep.subr.mxu0 0.0
    %682 = vmatpush1.msra.mxu0 0.0
    %683 = vmatprep.subr.mxu0 0.0
    %684 = vmatpush1.msra.mxu0 0.0
    %685 = vmatprep.subr.mxu0 0.0
    %686 = vmatpush1.msra.mxu0 0.0
    %687 = vmatprep.subr.mxu0 0.0
    %688 = vmatpush1.msra.mxu0 0.0
    %689 = vmatprep.subr.mxu0 0.0
    %690 = vmatpush1.msra.mxu0 0.0
    %691 = vmatprep.subr.mxu0 0.0
    %692 = vmatpush1.msra.mxu0 0.0
    %693 = vmatprep.mubr.f32.mxu0 0.0
    %694 = vmatmul.mubr.f32.gmra.mrb[0].mxu0 %v99
    %v695 = vpop.f32.mrb[0].mxu0
    %v696 = vadd.f32 0.0, %v695
    %v697 = vpop.f32.mrb[0].mxu0
    %698 = vmatprep.mubr.f32.mxu0 0.0
    %699 = vmatmul.mubr.f32.gmra.mrb[0].mxu0 %v102
    %v700 = vpop.f32.mrb[0].mxu0
    %v701 = vadd.f32 0.0, %v700
    %v702 = vpop.f32.mrb[0].mxu0
    %703 = vdwg.mxu0
    %704 = vmatprep.subr.mxu0 0.0
    %705 = vmatpush1.msra.mxu0 %v81
    %706 = vmatprep.subr.mxu0 0.0
    %707 = vmatpush1.msra.mxu0 %v82
    %708 = vmatprep.subr.mxu0 0.0
    %709 = vmatpush1.msra.mxu0 %v83
    %710 = vmatprep.subr.mxu0 0.0
    %711 = vmatpush1.msra.mxu0 %v84
    %712 = vmatprep.subr.mxu0 0.0
    %713 = vmatpush1.msra.mxu0 0.0
    %714 = vmatprep.subr.mxu0 0.0
    %715 = vmatpush1.msra.mxu0 0.0
    %716 = vmatprep.subr.mxu0 0.0
    %717 = vmatpush1.msra.mxu0 0.0
    %718 = vmatprep.subr.mxu0 0.0
    %719 = vmatpush1.msra.mxu0 0.0
    %720 = vmatprep.subr.mxu0 0.0
    %721 = vmatpush1.msra.mxu0 0.0
    %722 = vmatprep.subr.mxu0 0.0
    %723 = vmatpush1.msra.mxu0 0.0
    %724 = vmatprep.subr.mxu0 0.0
    %725 = vmatpush1.msra.mxu0 0.0
    %726 = vmatprep.subr.mxu0 0.0
    %727 = vmatpush1.msra.mxu0 0.0
    %728 = vmatprep.subr.mxu0 0.0
    %729 = vmatpush1.msra.mxu0 0.0
    %730 = vmatprep.subr.mxu0 0.0
    %731 = vmatpush1.msra.mxu0 0.0
    %732 = vmatprep.subr.mxu0 0.0
    %733 = vmatpush1.msra.mxu0 0.0
    %734 = vmatprep.subr.mxu0 0.0
    %735 = vmatpush1.msra.mxu0 0.0
    %736 = vmatprep.subr.mxu0 0.0
    %737 = vmatpush1.msra.mxu0 0.0
    %738 = vmatprep.subr.mxu0 0.0
    %739 = vmatpush1.msra.mxu0 0.0
    %740 = vmatprep.subr.mxu0 0.0
    %741 = vmatpush1.msra.mxu0 0.0
    %742 = vmatprep.subr.mxu0 0.0
    %743 = vmatpush1.msra.mxu0 0.0
    %744 = vmatprep.subr.mxu0 0.0
    %745 = vmatpush1.msra.mxu0 0.0
    %746 = vmatprep.subr.mxu0 0.0
    %747 = vmatpush1.msra.mxu0 0.0
    %748 = vmatprep.subr.mxu0 0.0
    %749 = vmatpush1.msra.mxu0 0.0
    %750 = vmatprep.subr.mxu0 0.0
    %751 = vmatpush1.msra.mxu0 0.0
    %752 = vmatprep.subr.mxu0 0.0
    %753 = vmatpush1.msra.mxu0 0.0
    %754 = vmatprep.subr.mxu0 0.0
    %755 = vmatpush1.msra.mxu0 0.0
    %756 = vmatprep.subr.mxu0 0.0
    %757 = vmatpush1.msra.mxu0 0.0
    %758 = vmatprep.subr.mxu0 0.0
    %759 = vmatpush1.msra.mxu0 0.0
    %760 = vmatprep.subr.mxu0 0.0
    %761 = vmatpush1.msra.mxu0 0.0
    %762 = vmatprep.subr.mxu0 0.0
    %763 = vmatpush1.msra.mxu0 0.0
    %764 = vmatprep.subr.mxu0 0.0
    %765 = vmatpush1.msra.mxu0 0.0
    %766 = vmatprep.subr.mxu0 0.0
    %767 = vmatpush1.msra.mxu0 0.0
    %768 = vmatprep.mubr.f32.mxu0 0.0
    %769 = vmatmul.mubr.f32.gmra.mrb[0].mxu0 %v99
    %v770 = vpop.f32.mrb[0].mxu0
    %v771 = vadd.f32 0.0, %v770
    %v772 = vpop.f32.mrb[0].mxu0
    %773 = vmatprep.mubr.f32.mxu0 0.0
    %774 = vmatmul.mubr.f32.gmra.mrb[0].mxu0 %v102
    %v775 = vpop.f32.mrb[0].mxu0
    %v776 = vadd.f32 0.0, %v775
    %v777 = vpop.f32.mrb[0].mxu0
    %778 = vdwg.mxu0
    %779 = vmatprep.subr.mxu0 0.0
    %780 = vmatpush1.msra.mxu0 %v85
    %781 = vmatprep.subr.mxu0 0.0
    %782 = vmatpush1.msra.mxu0 %v86
    %783 = vmatprep.subr.mxu0 0.0
    %784 = vmatpush1.msra.mxu0 %v87
    %785 = vmatprep.subr.mxu0 0.0
    %786 = vmatpush1.msra.mxu0 %v88
    %787 = vmatprep.subr.mxu0 0.0
    %788 = vmatpush1.msra.mxu0 0.0
    %789 = vmatprep.subr.mxu0 0.0
    %790 = vmatpush1.msra.mxu0 0.0
    %791 = vmatprep.subr.mxu0 0.0
    %792 = vmatpush1.msra.mxu0 0.0
    %793 = vmatprep.subr.mxu0 0.0
    %794 = vmatpush1.msra.mxu0 0.0
    %795 = vmatprep.subr.mxu0 0.0
    %796 = vmatpush1.msra.mxu0 0.0
    %797 = vmatprep.subr.mxu0 0.0
    %798 = vmatpush1.msra.mxu0 0.0
    %799 = vmatprep.subr.mxu0 0.0
    %800 = vmatpush1.msra.mxu0 0.0
    %801 = vmatprep.subr.mxu0 0.0
    %802 = vmatpush1.msra.mxu0 0.0
    %803 = vmatprep.subr.mxu0 0.0
    %804 = vmatpush1.msra.mxu0 0.0
    %805 = vmatprep.subr.mxu0 0.0
    %806 = vmatpush1.msra.mxu0 0.0
    %807 = vmatprep.subr.mxu0 0.0
    %808 = vmatpush1.msra.mxu0 0.0
    %809 = vmatprep.subr.mxu0 0.0
    %810 = vmatpush1.msra.mxu0 0.0
    %811 = vmatprep.subr.mxu0 0.0
    %812 = vmatpush1.msra.mxu0 0.0
    %813 = vmatprep.subr.mxu0 0.0
    %814 = vmatpush1.msra.mxu0 0.0
    %815 = vmatprep.subr.mxu0 0.0
    %816 = vmatpush1.msra.mxu0 0.0
    %817 = vmatprep.subr.mxu0 0.0
    %818 = vmatpush1.msra.mxu0 0.0
    %819 = vmatprep.subr.mxu0 0.0
    %820 = vmatpush1.msra.mxu0 0.0
    %821 = vmatprep.subr.mxu0 0.0
    %822 = vmatpush1.msra.mxu0 0.0
    %823 = vmatprep.subr.mxu0 0.0
    %824 = vmatpush1.msra.mxu0 0.0
    %825 = vmatprep.subr.mxu0 0.0
    %826 = vmatpush1.msra.mxu0 0.0
    %827 = vmatprep.subr.mxu0 0.0
    %828 = vmatpush1.msra.mxu0 0.0
    %829 = vmatprep.subr.mxu0 0.0
    %830 = vmatpush1.msra.mxu0 0.0
    %831 = vmatprep.subr.mxu0 0.0
    %832 = vmatpush1.msra.mxu0 0.0
    %833 = vmatprep.subr.mxu0 0.0
    %834 = vmatpush1.msra.mxu0 0.0
    %835 = vmatprep.subr.mxu0 0.0
    %836 = vmatpush1.msra.mxu0 0.0
    %837 = vmatprep.subr.mxu0 0.0
    %838 = vmatpush1.msra.mxu0 0.0
    %839 = vmatprep.subr.mxu0 0.0
    %840 = vmatpush1.msra.mxu0 0.0
    %841 = vmatprep.subr.mxu0 0.0
    %842 = vmatpush1.msra.mxu0 0.0
    %843 = vmatprep.mubr.f32.mxu0 0.0
    %844 = vmatmul.mubr.f32.gmra.mrb[0].mxu0 %v99
    %v845 = vpop.f32.mrb[0].mxu0
    %v846 = vadd.f32 0.0, %v845
    %v847 = vpop.f32.mrb[0].mxu0
    %848 = vmatprep.mubr.f32.mxu0 0.0
    %849 = vmatmul.mubr.f32.gmra.mrb[0].mxu0 %v102
    %v850 = vpop.f32.mrb[0].mxu0
    %v851 = vadd.f32 0.0, %v850
    %v852 = vpop.f32.mrb[0].mxu0
    %853 = vdwg.mxu0
    %854 = vmatprep.subr.mxu0 0.0
    %855 = vmatpush1.msra.mxu0 %v89
    %856 = vmatprep.subr.mxu0 0.0
    %857 = vmatpush1.msra.mxu0 %v90
    %858 = vmatprep.subr.mxu0 0.0
    %859 = vmatpush1.msra.mxu0 %v91
    %860 = vmatprep.subr.mxu0 0.0
    %861 = vmatpush1.msra.mxu0 %v92
    %862 = vmatprep.subr.mxu0 0.0
    %863 = vmatpush1.msra.mxu0 0.0
    %864 = vmatprep.subr.mxu0 0.0
    %865 = vmatpush1.msra.mxu0 0.0
    %866 = vmatprep.subr.mxu0 0.0
    %867 = vmatpush1.msra.mxu0 0.0
    %868 = vmatprep.subr.mxu0 0.0
    %869 = vmatpush1.msra.mxu0 0.0
    %870 = vmatprep.subr.mxu0 0.0
    %871 = vmatpush1.msra.mxu0 0.0
    %872 = vmatprep.subr.mxu0 0.0
    %873 = vmatpush1.msra.mxu0 0.0
    %874 = vmatprep.subr.mxu0 0.0
    %875 = vmatpush1.msra.mxu0 0.0
    %876 = vmatprep.subr.mxu0 0.0
    %877 = vmatpush1.msra.mxu0 0.0
    %878 = vmatprep.subr.mxu0 0.0
    %879 = vmatpush1.msra.mxu0 0.0
    %880 = vmatprep.subr.mxu0 0.0
    %881 = vmatpush1.msra.mxu0 0.0
    %882 = vmatprep.subr.mxu0 0.0
    %883 = vmatpush1.msra.mxu0 0.0
    %884 = vmatprep.subr.mxu0 0.0
    %885 = vmatpush1.msra.mxu0 0.0
    %886 = vmatprep.subr.mxu0 0.0
    %887 = vmatpush1.msra.mxu0 0.0
    %888 = vmatprep.subr.mxu0 0.0
    %889 = vmatpush1.msra.mxu0 0.0
    %890 = vmatprep.subr.mxu0 0.0
    %891 = vmatpush1.msra.mxu0 0.0
    %892 = vmatprep.subr.mxu0 0.0
    %893 = vmatpush1.msra.mxu0 0.0
    %894 = vmatprep.subr.mxu0 0.0
    %895 = vmatpush1.msra.mxu0 0.0
    %896 = vmatprep.subr.mxu0 0.0
    %897 = vmatpush1.msra.mxu0 0.0
    %898 = vmatprep.subr.mxu0 0.0
    %899 = vmatpush1.msra.mxu0 0.0
    %900 = vmatprep.subr.mxu0 0.0
    %901 = vmatpush1.msra.mxu0 0.0
    %902 = vmatprep.subr.mxu0 0.0
    %903 = vmatpush1.msra.mxu0 0.0
    %904 = vmatprep.subr.mxu0 0.0
    %905 = vmatpush1.msra.mxu0 0.0
    %906 = vmatprep.subr.mxu0 0.0
    %907 = vmatpush1.msra.mxu0 0.0
    %908 = vmatprep.subr.mxu0 0.0
    %909 = vmatpush1.msra.mxu0 0.0
    %910 = vmatprep.subr.mxu0 0.0
    %911 = vmatpush1.msra.mxu0 0.0
    %912 = vmatprep.subr.mxu0 0.0
    %913 = vmatpush1.msra.mxu0 0.0
    %914 = vmatprep.subr.mxu0 0.0
    %915 = vmatpush1.msra.mxu0 0.0
    %916 = vmatprep.subr.mxu0 0.0
    %917 = vmatpush1.msra.mxu0 0.0
    %918 = vmatprep.mubr.f32.mxu0 0.0
    %919 = vmatmul.mubr.f32.gmra.mrb[0].mxu0 %v99
    %v920 = vpop.f32.mrb[0].mxu0
    %v921 = vadd.f32 0.0, %v920
    %v922 = vpop.f32.mrb[0].mxu0
    %923 = vmatprep.mubr.f32.mxu0 0.0
    %924 = vmatmul.mubr.f32.gmra.mrb[0].mxu0 %v102
    %v925 = vpop.f32.mrb[0].mxu0
    %v926 = vadd.f32 0.0, %v925
    %v927 = vpop.f32.mrb[0].mxu0
    %928 = vdwg.mxu0
    %929 = vmatprep.subr.mxu0 0.0
    %930 = vmatpush1.msra.mxu0 %v93
    %931 = vmatprep.subr.mxu0 0.0
    %932 = vmatpush1.msra.mxu0 %v94
    %933 = vmatprep.subr.mxu0 0.0
    %934 = vmatpush1.msra.mxu0 %v95
    %935 = vmatprep.subr.mxu0 0.0
    %936 = vmatpush1.msra.mxu0 %v96
    %937 = vmatprep.subr.mxu0 0.0
    %938 = vmatpush1.msra.mxu0 0.0
    %939 = vmatprep.subr.mxu0 0.0
    %940 = vmatpush1.msra.mxu0 0.0
    %941 = vmatprep.subr.mxu0 0.0
    %942 = vmatpush1.msra.mxu0 0.0
    %943 = vmatprep.subr.mxu0 0.0
    %944 = vmatpush1.msra.mxu0 0.0
    %945 = vmatprep.subr.mxu0 0.0
    %946 = vmatpush1.msra.mxu0 0.0
    %947 = vmatprep.subr.mxu0 0.0
    %948 = vmatpush1.msra.mxu0 0.0
    %949 = vmatprep.subr.mxu0 0.0
    %950 = vmatpush1.msra.mxu0 0.0
    %951 = vmatprep.subr.mxu0 0.0
    %952 = vmatpush1.msra.mxu0 0.0
    %953 = vmatprep.subr.mxu0 0.0
    %954 = vmatpush1.msra.mxu0 0.0
    %955 = vmatprep.subr.mxu0 0.0
    %956 = vmatpush1.msra.mxu0 0.0
    %957 = vmatprep.subr.mxu0 0.0
    %958 = vmatpush1.msra.mxu0 0.0
    %959 = vmatprep.subr.mxu0 0.0
    %960 = vmatpush1.msra.mxu0 0.0
    %961 = vmatprep.subr.mxu0 0.0
    %962 = vmatpush1.msra.mxu0 0.0
    %963 = vmatprep.subr.mxu0 0.0
    %964 = vmatpush1.msra.mxu0 0.0
    %965 = vmatprep.subr.mxu0 0.0
    %966 = vmatpush1.msra.mxu0 0.0
    %967 = vmatprep.subr.mxu0 0.0
    %968 = vmatpush1.msra.mxu0 0.0
    %969 = vmatprep.subr.mxu0 0.0
    %970 = vmatpush1.msra.mxu0 0.0
    %971 = vmatprep.subr.mxu0 0.0
    %972 = vmatpush1.msra.mxu0 0.0
    %973 = vmatprep.subr.mxu0 0.0
    %974 = vmatpush1.msra.mxu0 0.0
    %975 = vmatprep.subr.mxu0 0.0
    %976 = vmatpush1.msra.mxu0 0.0
    %977 = vmatprep.subr.mxu0 0.0
    %978 = vmatpush1.msra.mxu0 0.0
    %979 = vmatprep.subr.mxu0 0.0
    %980 = vmatpush1.msra.mxu0 0.0
    %981 = vmatprep.subr.mxu0 0.0
    %982 = vmatpush1.msra.mxu0 0.0
    %983 = vmatprep.subr.mxu0 0.0
    %984 = vmatpush1.msra.mxu0 0.0
    %985 = vmatprep.subr.mxu0 0.0
    %986 = vmatpush1.msra.mxu0 0.0
    %987 = vmatprep.subr.mxu0 0.0
    %988 = vmatpush1.msra.mxu0 0.0
    %989 = vmatprep.subr.mxu0 0.0
    %990 = vmatpush1.msra.mxu0 0.0
    %991 = vmatprep.subr.mxu0 0.0
    %992 = vmatpush1.msra.mxu0 0.0
    %993 = vmatprep.mubr.f32.mxu0 0.0
    %994 = vmatmul.mubr.f32.gmra.mrb[0].mxu0 %v99
    %v995 = vpop.f32.mrb[0].mxu0
    %v996 = vadd.f32 0.0, %v995
    %v997 = vpop.f32.mrb[0].mxu0
    %998 = vmatprep.mubr.f32.mxu0 0.0
    %999 = vmatmul.mubr.f32.gmra.mrb[0].mxu0 %v102
    %v1000 = vpop.f32.mrb[0].mxu0
    %v1001 = vadd.f32 0.0, %v1000
    %v1002 = vpop.f32.mrb[0].mxu0
    %1003 = vdwg.mxu0
    %v1005 = vsel %vm97, %v171, 0
    %1007 = vmatprep.subr.mxu0 0.0
    %1008 = vmatpush1.xpose.msra.mxu0 %v99
    %1009 = vmatprep.subr.mxu0 0.0
    %1010 = vmatpush1.xpose.msra.mxu0 0.0
    %1011 = vmatprep.subr.mxu0 0.0
    %1012 = vmatpush1.xpose.msra.mxu0 0.0
    %1013 = vmatprep.subr.mxu0 0.0
    %1014 = vmatpush1.xpose.msra.mxu0 0.0
    %1015 = vmatprep.subr.mxu0 0.0
    %1016 = vmatpush1.xpose.msra.mxu0 0.0
    %1017 = vmatprep.subr.mxu0 0.0
    %1018 = vmatpush1.xpose.msra.mxu0 0.0
    %1019 = vmatprep.subr.mxu0 0.0
    %1020 = vmatpush1.xpose.msra.mxu0 0.0
    %1021 = vmatprep.subr.mxu0 0.0
    %1022 = vmatpush1.xpose.msra.mxu0 0.0
    %1023 = vmatprep.subr.mxu0 0.0
    %1024 = vmatpush1.xpose.msra.mxu0 0.0
    %1025 = vmatprep.subr.mxu0 0.0
    %1026 = vmatpush1.xpose.msra.mxu0 0.0
    %1027 = vmatprep.subr.mxu0 0.0
    %1028 = vmatpush1.xpose.msra.mxu0 0.0
    %1029 = vmatprep.subr.mxu0 0.0
    %1030 = vmatpush1.xpose.msra.mxu0 0.0
    %1031 = vmatprep.subr.mxu0 0.0
    %1032 = vmatpush1.xpose.msra.mxu0 0.0
    %1033 = vmatprep.subr.mxu0 0.0
    %1034 = vmatpush1.xpose.msra.mxu0 0.0
    %1035 = vmatprep.subr.mxu0 0.0
    %1036 = vmatpush1.xpose.msra.mxu0 0.0
    %1037 = vmatprep.subr.mxu0 0.0
    %1038 = vmatpush1.xpose.msra.mxu0 0.0
    %1039 = vmatprep.subr.mxu0 0.0
    %1040 = vmatpush1.xpose.msra.mxu0 0.0
    %1041 = vmatprep.subr.mxu0 0.0
    %1042 = vmatpush1.xpose.msra.mxu0 0.0
    %1043 = vmatprep.subr.mxu0 0.0
    %1044 = vmatpush1.xpose.msra.mxu0 0.0
    %1045 = vmatprep.subr.mxu0 0.0
    %1046 = vmatpush1.xpose.msra.mxu0 0.0
    %1047 = vmatprep.subr.mxu0 0.0
    %1048 = vmatpush1.xpose.msra.mxu0 0.0
    %1049 = vmatprep.subr.mxu0 0.0
    %1050 = vmatpush1.xpose.msra.mxu0 0.0
    %1051 = vmatprep.subr.mxu0 0.0
    %1052 = vmatpush1.xpose.msra.mxu0 0.0
    %1053 = vmatprep.subr.mxu0 0.0
    %1054 = vmatpush1.xpose.msra.mxu0 0.0
    %1055 = vmatprep.subr.mxu0 0.0
    %1056 = vmatpush1.xpose.msra.mxu0 0.0
    %1057 = vmatprep.subr.mxu0 0.0
    %1058 = vmatpush1.xpose.msra.mxu0 0.0
    %1059 = vmatprep.subr.mxu0 0.0
    %1060 = vmatpush1.xpose.msra.mxu0 0.0
    %1061 = vmatprep.subr.mxu0 0.0
    %1062 = vmatpush1.xpose.msra.mxu0 0.0
    %1063 = vmatprep.subr.mxu0 0.0
    %1064 = vmatpush1.xpose.msra.mxu0 0.0
    %1065 = vmatprep.subr.mxu0 0.0
    %1066 = vmatpush1.xpose.msra.mxu0 0.0
    %1067 = vmatprep.subr.mxu0 0.0
    %1068 = vmatpush1.xpose.msra.mxu0 0.0
    %1069 = vmatprep.subr.mxu0 0.0
    %1070 = vmatpush1.xpose.msra.mxu0 0.0
    %1071 = vmatprep.mubr.f32.mxu0 0.0
    %1072 = vmatmul.mubr.f32.gmra.mrb[0].mxu0 %v1005
    %v1073 = vpop.f32.mrb[0].mxu0
    %v1074 = vadd.f32 %v47, %v1073
    %v1075 = vpop.f32.mrb[0].mxu0
    %1076 = vdwg.mxu0
    %v1078 = vsel %vm97, %v176, 0
    %1080 = vmatprep.subr.mxu0 0.0
    %1081 = vmatpush1.xpose.msra.mxu0 %v102
    %1082 = vmatprep.subr.mxu0 0.0
    %1083 = vmatpush1.xpose.msra.mxu0 0.0
    %1084 = vmatprep.subr.mxu0 0.0
    %1085 = vmatpush1.xpose.msra.mxu0 0.0
    %1086 = vmatprep.subr.mxu0 0.0
    %1087 = vmatpush1.xpose.msra.mxu0 0.0
    %1088 = vmatprep.subr.mxu0 0.0
    %1089 = vmatpush1.xpose.msra.mxu0 0.0
    %1090 = vmatprep.subr.mxu0 0.0
    %1091 = vmatpush1.xpose.msra.mxu0 0.0
    %1092 = vmatprep.subr.mxu0 0.0
    %1093 = vmatpush1.xpose.msra.mxu0 0.0
    %1094 = vmatprep.subr.mxu0 0.0
    %1095 = vmatpush1.xpose.msra.mxu0 0.0
    %1096 = vmatprep.subr.mxu0 0.0
    %1097 = vmatpush1.xpose.msra.mxu0 0.0
    %1098 = vmatprep.subr.mxu0 0.0
    %1099 = vmatpush1.xpose.msra.mxu0 0.0
    %1100 = vmatprep.subr.mxu0 0.0
    %1101 = vmatpush1.xpose.msra.mxu0 0.0
    %1102 = vmatprep.subr.mxu0 0.0
    %1103 = vmatpush1.xpose.msra.mxu0 0.0
    %1104 = vmatprep.subr.mxu0 0.0
    %1105 = vmatpush1.xpose.msra.mxu0 0.0
    %1106 = vmatprep.subr.mxu0 0.0
    %1107 = vmatpush1.xpose.msra.mxu0 0.0
    %1108 = vmatprep.subr.mxu0 0.0
    %1109 = vmatpush1.xpose.msra.mxu0 0.0
    %1110 = vmatprep.subr.mxu0 0.0
    %1111 = vmatpush1.xpose.msra.mxu0 0.0
    %1112 = vmatprep.subr.mxu0 0.0
    %1113 = vmatpush1.xpose.msra.mxu0 0.0
    %1114 = vmatprep.subr.mxu0 0.0
    %1115 = vmatpush1.xpose.msra.mxu0 0.0
    %1116 = vmatprep.subr.mxu0 0.0
    %1117 = vmatpush1.xpose.msra.mxu0 0.0
    %1118 = vmatprep.subr.mxu0 0.0
    %1119 = vmatpush1.xpose.msra.mxu0 0.0
    %1120 = vmatprep.subr.mxu0 0.0
    %1121 = vmatpush1.xpose.msra.mxu0 0.0
    %1122 = vmatprep.subr.mxu0 0.0
    %1123 = vmatpush1.xpose.msra.mxu0 0.0
    %1124 = vmatprep.subr.mxu0 0.0
    %1125 = vmatpush1.xpose.msra.mxu0 0.0
    %1126 = vmatprep.subr.mxu0 0.0
    %1127 = vmatpush1.xpose.msra.mxu0 0.0
    %1128 = vmatprep.subr.mxu0 0.0
    %1129 = vmatpush1.xpose.msra.mxu0 0.0
    %1130 = vmatprep.subr.mxu0 0.0
    %1131 = vmatpush1.xpose.msra.mxu0 0.0
    %1132 = vmatprep.subr.mxu0 0.0
    %1133 = vmatpush1.xpose.msra.mxu0 0.0
    %1134 = vmatprep.subr.mxu0 0.0
    %1135 = vmatpush1.xpose.msra.mxu0 0.0
    %1136 = vmatprep.subr.mxu0 0.0
    %1137 = vmatpush1.xpose.msra.mxu0 0.0
    %1138 = vmatprep.subr.mxu0 0.0
    %1139 = vmatpush1.xpose.msra.mxu0 0.0
    %1140 = vmatprep.subr.mxu0 0.0
    %1141 = vmatpush1.xpose.msra.mxu0 0.0
    %1142 = vmatprep.subr.mxu0 0.0
    %1143 = vmatpush1.xpose.msra.mxu0 0.0
    %1144 = vmatprep.mubr.f32.mxu0 0.0
    %1145 = vmatmul.mubr.f32.gmra.mrb[0].mxu0 %v1078
    %v1146 = vpop.f32.mrb[0].mxu0
    %v1147 = vadd.f32 %v48, %v1146
    %v1148 = vpop.f32.mrb[0].mxu0
    %1149 = vdwg.mxu0
    %v1151 = vsel %vm97, %v246, 0
    %1153 = vmatprep.subr.mxu0 0.0
    %1154 = vmatpush1.xpose.msra.mxu0 %v99
    %1155 = vmatprep.subr.mxu0 0.0
    %1156 = vmatpush1.xpose.msra.mxu0 0.0
    %1157 = vmatprep.subr.mxu0 0.0
    %1158 = vmatpush1.xpose.msra.mxu0 0.0
    %1159 = vmatprep.subr.mxu0 0.0
    %1160 = vmatpush1.xpose.msra.mxu0 0.0
    %1161 = vmatprep.subr.mxu0 0.0
    %1162 = vmatpush1.xpose.msra.mxu0 0.0
    %1163 = vmatprep.subr.mxu0 0.0
    %1164 = vmatpush1.xpose.msra.mxu0 0.0
    %1165 = vmatprep.subr.mxu0 0.0
    %1166 = vmatpush1.xpose.msra.mxu0 0.0
    %1167 = vmatprep.subr.mxu0 0.0
    %1168 = vmatpush1.xpose.msra.mxu0 0.0
    %1169 = vmatprep.subr.mxu0 0.0
    %1170 = vmatpush1.xpose.msra.mxu0 0.0
    %1171 = vmatprep.subr.mxu0 0.0
    %1172 = vmatpush1.xpose.msra.mxu0 0.0
    %1173 = vmatprep.subr.mxu0 0.0
    %1174 = vmatpush1.xpose.msra.mxu0 0.0
    %1175 = vmatprep.subr.mxu0 0.0
    %1176 = vmatpush1.xpose.msra.mxu0 0.0
    %1177 = vmatprep.subr.mxu0 0.0
    %1178 = vmatpush1.xpose.msra.mxu0 0.0
    %1179 = vmatprep.subr.mxu0 0.0
    %1180 = vmatpush1.xpose.msra.mxu0 0.0
    %1181 = vmatprep.subr.mxu0 0.0
    %1182 = vmatpush1.xpose.msra.mxu0 0.0
    %1183 = vmatprep.subr.mxu0 0.0
    %1184 = vmatpush1.xpose.msra.mxu0 0.0
    %1185 = vmatprep.subr.mxu0 0.0
    %1186 = vmatpush1.xpose.msra.mxu0 0.0
    %1187 = vmatprep.subr.mxu0 0.0
    %1188 = vmatpush1.xpose.msra.mxu0 0.0
    %1189 = vmatprep.subr.mxu0 0.0
    %1190 = vmatpush1.xpose.msra.mxu0 0.0
    %1191 = vmatprep.subr.mxu0 0.0
    %1192 = vmatpush1.xpose.msra.mxu0 0.0
    %1193 = vmatprep.subr.mxu0 0.0
    %1194 = vmatpush1.xpose.msra.mxu0 0.0
    %1195 = vmatprep.subr.mxu0 0.0
    %1196 = vmatpush1.xpose.msra.mxu0 0.0
    %1197 = vmatprep.subr.mxu0 0.0
    %1198 = vmatpush1.xpose.msra.mxu0 0.0
    %1199 = vmatprep.subr.mxu0 0.0
    %1200 = vmatpush1.xpose.msra.mxu0 0.0
    %1201 = vmatprep.subr.mxu0 0.0
    %1202 = vmatpush1.xpose.msra.mxu0 0.0
    %1203 = vmatprep.subr.mxu0 0.0
    %1204 = vmatpush1.xpose.msra.mxu0 0.0
    %1205 = vmatprep.subr.mxu0 0.0
    %1206 = vmatpush1.xpose.msra.mxu0 0.0
    %1207 = vmatprep.subr.mxu0 0.0
    %1208 = vmatpush1.xpose.msra.mxu0 0.0
    %1209 = vmatprep.subr.mxu0 0.0
    %1210 = vmatpush1.xpose.msra.mxu0 0.0
    %1211 = vmatprep.subr.mxu0 0.0
    %1212 = vmatpush1.xpose.msra.mxu0 0.0
    %1213 = vmatprep.subr.mxu0 0.0
    %1214 = vmatpush1.xpose.msra.mxu0 0.0
    %1215 = vmatprep.subr.mxu0 0.0
    %1216 = vmatpush1.xpose.msra.mxu0 0.0
    %1217 = vmatprep.mubr.f32.mxu0 0.0
    %1218 = vmatmul.mubr.f32.gmra.mrb[0].mxu0 %v1151
    %v1219 = vpop.f32.mrb[0].mxu0
    %v1220 = vadd.f32 %v47, %v1219
    %v1221 = vpop.f32.mrb[0].mxu0
    %1222 = vdwg.mxu0
    %v1224 = vsel %vm97, %v251, 0
    %1226 = vmatprep.subr.mxu0 0.0
    %1227 = vmatpush1.xpose.msra.mxu0 %v102
    %1228 = vmatprep.subr.mxu0 0.0
    %1229 = vmatpush1.xpose.msra.mxu0 0.0
    %1230 = vmatprep.subr.mxu0 0.0
    %1231 = vmatpush1.xpose.msra.mxu0 0.0
    %1232 = vmatprep.subr.mxu0 0.0
    %1233 = vmatpush1.xpose.msra.mxu0 0.0
    %1234 = vmatprep.subr.mxu0 0.0
    %1235 = vmatpush1.xpose.msra.mxu0 0.0
    %1236 = vmatprep.subr.mxu0 0.0
    %1237 = vmatpush1.xpose.msra.mxu0 0.0
    %1238 = vmatprep.subr.mxu0 0.0
    %1239 = vmatpush1.xpose.msra.mxu0 0.0
    %1240 = vmatprep.subr.mxu0 0.0
    %1241 = vmatpush1.xpose.msra.mxu0 0.0
    %1242 = vmatprep.subr.mxu0 0.0
    %1243 = vmatpush1.xpose.msra.mxu0 0.0
    %1244 = vmatprep.subr.mxu0 0.0
    %1245 = vmatpush1.xpose.msra.mxu0 0.0
    %1246 = vmatprep.subr.mxu0 0.0
    %1247 = vmatpush1.xpose.msra.mxu0 0.0
    %1248 = vmatprep.subr.mxu0 0.0
    %1249 = vmatpush1.xpose.msra.mxu0 0.0
    %1250 = vmatprep.subr.mxu0 0.0
    %1251 = vmatpush1.xpose.msra.mxu0 0.0
    %1252 = vmatprep.subr.mxu0 0.0
    %1253 = vmatpush1.xpose.msra.mxu0 0.0
    %1254 = vmatprep.subr.mxu0 0.0
    %1255 = vmatpush1.xpose.msra.mxu0 0.0
    %1256 = vmatprep.subr.mxu0 0.0
    %1257 = vmatpush1.xpose.msra.mxu0 0.0
    %1258 = vmatprep.subr.mxu0 0.0
    %1259 = vmatpush1.xpose.msra.mxu0 0.0
    %1260 = vmatprep.subr.mxu0 0.0
    %1261 = vmatpush1.xpose.msra.mxu0 0.0
    %1262 = vmatprep.subr.mxu0 0.0
    %1263 = vmatpush1.xpose.msra.mxu0 0.0
    %1264 = vmatprep.subr.mxu0 0.0
    %1265 = vmatpush1.xpose.msra.mxu0 0.0
    %1266 = vmatprep.subr.mxu0 0.0
    %1267 = vmatpush1.xpose.msra.mxu0 0.0
    %1268 = vmatprep.subr.mxu0 0.0
    %1269 = vmatpush1.xpose.msra.mxu0 0.0
    %1270 = vmatprep.subr.mxu0 0.0
    %1271 = vmatpush1.xpose.msra.mxu0 0.0
    %1272 = vmatprep.subr.mxu0 0.0
    %1273 = vmatpush1.xpose.msra.mxu0 0.0
    %1274 = vmatprep.subr.mxu0 0.0
    %1275 = vmatpush1.xpose.msra.mxu0 0.0
    %1276 = vmatprep.subr.mxu0 0.0
    %1277 = vmatpush1.xpose.msra.mxu0 0.0
    %1278 = vmatprep.subr.mxu0 0.0
    %1279 = vmatpush1.xpose.msra.mxu0 0.0
    %1280 = vmatprep.subr.mxu0 0.0
    %1281 = vmatpush1.xpose.msra.mxu0 0.0
    %1282 = vmatprep.subr.mxu0 0.0
    %1283 = vmatpush1.xpose.msra.mxu0 0.0
    %1284 = vmatprep.subr.mxu0 0.0
    %1285 = vmatpush1.xpose.msra.mxu0 0.0
    %1286 = vmatprep.subr.mxu0 0.0
    %1287 = vmatpush1.xpose.msra.mxu0 0.0
    %1288 = vmatprep.subr.mxu0 0.0
    %1289 = vmatpush1.xpose.msra.mxu0 0.0
    %1290 = vmatprep.mubr.f32.mxu0 0.0
    %1291 = vmatmul.mubr.f32.gmra.mrb[0].mxu0 %v1224
    %v1292 = vpop.f32.mrb[0].mxu0
    %v1293 = vadd.f32 %v48, %v1292
    %v1294 = vpop.f32.mrb[0].mxu0
    %1295 = vdwg.mxu0
    %v1297 = vsel %vm97, %v321, 0
    %1299 = vmatprep.subr.mxu0 0.0
    %1300 = vmatpush1.xpose.msra.mxu0 %v99
    %1301 = vmatprep.subr.mxu0 0.0
    %1302 = vmatpush1.xpose.msra.mxu0 0.0
    %1303 = vmatprep.subr.mxu0 0.0
    %1304 = vmatpush1.xpose.msra.mxu0 0.0
    %1305 = vmatprep.subr.mxu0 0.0
    %1306 = vmatpush1.xpose.msra.mxu0 0.0
    %1307 = vmatprep.subr.mxu0 0.0
    %1308 = vmatpush1.xpose.msra.mxu0 0.0
    %1309 = vmatprep.subr.mxu0 0.0
    %1310 = vmatpush1.xpose.msra.mxu0 0.0
    %1311 = vmatprep.subr.mxu0 0.0
    %1312 = vmatpush1.xpose.msra.mxu0 0.0
    %1313 = vmatprep.subr.mxu0 0.0
    %1314 = vmatpush1.xpose.msra.mxu0 0.0
    %1315 = vmatprep.subr.mxu0 0.0
    %1316 = vmatpush1.xpose.msra.mxu0 0.0
    %1317 = vmatprep.subr.mxu0 0.0
    %1318 = vmatpush1.xpose.msra.mxu0 0.0
    %1319 = vmatprep.subr.mxu0 0.0
    %1320 = vmatpush1.xpose.msra.mxu0 0.0
    %1321 = vmatprep.subr.mxu0 0.0
    %1322 = vmatpush1.xpose.msra.mxu0 0.0
    %1323 = vmatprep.subr.mxu0 0.0
    %1324 = vmatpush1.xpose.msra.mxu0 0.0
    %1325 = vmatprep.subr.mxu0 0.0
    %1326 = vmatpush1.xpose.msra.mxu0 0.0
    %1327 = vmatprep.subr.mxu0 0.0
    %1328 = vmatpush1.xpose.msra.mxu0 0.0
    %1329 = vmatprep.subr.mxu0 0.0
    %1330 = vmatpush1.xpose.msra.mxu0 0.0
    %1331 = vmatprep.subr.mxu0 0.0
    %1332 = vmatpush1.xpose.msra.mxu0 0.0
    %1333 = vmatprep.subr.mxu0 0.0
    %1334 = vmatpush1.xpose.msra.mxu0 0.0
    %1335 = vmatprep.subr.mxu0 0.0
    %1336 = vmatpush1.xpose.msra.mxu0 0.0
    %1337 = vmatprep.subr.mxu0 0.0
    %1338 = vmatpush1.xpose.msra.mxu0 0.0
    %1339 = vmatprep.subr.mxu0 0.0
    %1340 = vmatpush1.xpose.msra.mxu0 0.0
    %1341 = vmatprep.subr.mxu0 0.0
    %1342 = vmatpush1.xpose.msra.mxu0 0.0
    %1343 = vmatprep.subr.mxu0 0.0
    %1344 = vmatpush1.xpose.msra.mxu0 0.0
    %1345 = vmatprep.subr.mxu0 0.0
    %1346 = vmatpush1.xpose.msra.mxu0 0.0
    %1347 = vmatprep.subr.mxu0 0.0
    %1348 = vmatpush1.xpose.msra.mxu0 0.0
    %1349 = vmatprep.subr.mxu0 0.0
    %1350 = vmatpush1.xpose.msra.mxu0 0.0
    %1351 = vmatprep.subr.mxu0 0.0
    %1352 = vmatpush1.xpose.msra.mxu0 0.0
    %1353 = vmatprep.subr.mxu0 0.0
    %1354 = vmatpush1.xpose.msra.mxu0 0.0
    %1355 = vmatprep.subr.mxu0 0.0
    %1356 = vmatpush1.xpose.msra.mxu0 0.0
    %1357 = vmatprep.subr.mxu0 0.0
    %1358 = vmatpush1.xpose.msra.mxu0 0.0
    %1359 = vmatprep.subr.mxu0 0.0
    %1360 = vmatpush1.xpose.msra.mxu0 0.0
    %1361 = vmatprep.subr.mxu0 0.0
    %1362 = vmatpush1.xpose.msra.mxu0 0.0
    %1363 = vmatprep.mubr.f32.mxu0 0.0
    %1364 = vmatmul.mubr.f32.gmra.mrb[0].mxu0 %v1297
    %v1365 = vpop.f32.mrb[0].mxu0
    %v1366 = vadd.f32 %v47, %v1365
    %v1367 = vpop.f32.mrb[0].mxu0
    %1368 = vdwg.mxu0
    %v1370 = vsel %vm97, %v326, 0
    %1372 = vmatprep.subr.mxu0 0.0
    %1373 = vmatpush1.xpose.msra.mxu0 %v102
    %1374 = vmatprep.subr.mxu0 0.0
    %1375 = vmatpush1.xpose.msra.mxu0 0.0
    %1376 = vmatprep.subr.mxu0 0.0
    %1377 = vmatpush1.xpose.msra.mxu0 0.0
    %1378 = vmatprep.subr.mxu0 0.0
    %1379 = vmatpush1.xpose.msra.mxu0 0.0
    %1380 = vmatprep.subr.mxu0 0.0
    %1381 = vmatpush1.xpose.msra.mxu0 0.0
    %1382 = vmatprep.subr.mxu0 0.0
    %1383 = vmatpush1.xpose.msra.mxu0 0.0
    %1384 = vmatprep.subr.mxu0 0.0
    %1385 = vmatpush1.xpose.msra.mxu0 0.0
    %1386 = vmatprep.subr.mxu0 0.0
    %1387 = vmatpush1.xpose.msra.mxu0 0.0
    %1388 = vmatprep.subr.mxu0 0.0
    %1389 = vmatpush1.xpose.msra.mxu0 0.0
    %1390 = vmatprep.subr.mxu0 0.0
    %1391 = vmatpush1.xpose.msra.mxu0 0.0
    %1392 = vmatprep.subr.mxu0 0.0
    %1393 = vmatpush1.xpose.msra.mxu0 0.0
    %1394 = vmatprep.subr.mxu0 0.0
    %1395 = vmatpush1.xpose.msra.mxu0 0.0
    %1396 = vmatprep.subr.mxu0 0.0
    %1397 = vmatpush1.xpose.msra.mxu0 0.0
    %1398 = vmatprep.subr.mxu0 0.0
    %1399 = vmatpush1.xpose.msra.mxu0 0.0
    %1400 = vmatprep.subr.mxu0 0.0
    %1401 = vmatpush1.xpose.msra.mxu0 0.0
    %1402 = vmatprep.subr.mxu0 0.0
    %1403 = vmatpush1.xpose.msra.mxu0 0.0
    %1404 = vmatprep.subr.mxu0 0.0
    %1405 = vmatpush1.xpose.msra.mxu0 0.0
    %1406 = vmatprep.subr.mxu0 0.0
    %1407 = vmatpush1.xpose.msra.mxu0 0.0
    %1408 = vmatprep.subr.mxu0 0.0
    %1409 = vmatpush1.xpose.msra.mxu0 0.0
    %1410 = vmatprep.subr.mxu0 0.0
    %1411 = vmatpush1.xpose.msra.mxu0 0.0
    %1412 = vmatprep.subr.mxu0 0.0
    %1413 = vmatpush1.xpose.msra.mxu0 0.0
    %1414 = vmatprep.subr.mxu0 0.0
    %1415 = vmatpush1.xpose.msra.mxu0 0.0
    %1416 = vmatprep.subr.mxu0 0.0
    %1417 = vmatpush1.xpose.msra.mxu0 0.0
    %1418 = vmatprep.subr.mxu0 0.0
    %1419 = vmatpush1.xpose.msra.mxu0 0.0
    %1420 = vmatprep.subr.mxu0 0.0
    %1421 = vmatpush1.xpose.msra.mxu0 0.0
    %1422 = vmatprep.subr.mxu0 0.0
    %1423 = vmatpush1.xpose.msra.mxu0 0.0
    %1424 = vmatprep.subr.mxu0 0.0
    %1425 = vmatpush1.xpose.msra.mxu0 0.0
    %1426 = vmatprep.subr.mxu0 0.0
    %1427 = vmatpush1.xpose.msra.mxu0 0.0
    %1428 = vmatprep.subr.mxu0 0.0
    %1429 = vmatpush1.xpose.msra.mxu0 0.0
    %1430 = vmatprep.subr.mxu0 0.0
    %1431 = vmatpush1.xpose.msra.mxu0 0.0
    %1432 = vmatprep.subr.mxu0 0.0
    %1433 = vmatpush1.xpose.msra.mxu0 0.0
    %1434 = vmatprep.subr.mxu0 0.0
    %1435 = vmatpush1.xpose.msra.mxu0 0.0
    %1436 = vmatprep.mubr.f32.mxu0 0.0
    %1437 = vmatmul.mubr.f32.gmra.mrb[0].mxu0 %v1370
    %v1438 = vpop.f32.mrb[0].mxu0
    %v1439 = vadd.f32 %v48, %v1438
    %v1440 = vpop.f32.mrb[0].mxu0
    %1441 = vdwg.mxu0
    %v1443 = vsel %vm97, %v396, 0
    %1445 = vmatprep.subr.mxu0 0.0
    %1446 = vmatpush1.xpose.msra.mxu0 %v99
    %1447 = vmatprep.subr.mxu0 0.0
    %1448 = vmatpush1.xpose.msra.mxu0 0.0
    %1449 = vmatprep.subr.mxu0 0.0
    %1450 = vmatpush1.xpose.msra.mxu0 0.0
    %1451 = vmatprep.subr.mxu0 0.0
    %1452 = vmatpush1.xpose.msra.mxu0 0.0
    %1453 = vmatprep.subr.mxu0 0.0
    %1454 = vmatpush1.xpose.msra.mxu0 0.0
    %1455 = vmatprep.subr.mxu0 0.0
    %1456 = vmatpush1.xpose.msra.mxu0 0.0
    %1457 = vmatprep.subr.mxu0 0.0
    %1458 = vmatpush1.xpose.msra.mxu0 0.0
    %1459 = vmatprep.subr.mxu0 0.0
    %1460 = vmatpush1.xpose.msra.mxu0 0.0
    %1461 = vmatprep.subr.mxu0 0.0
    %1462 = vmatpush1.xpose.msra.mxu0 0.0
    %1463 = vmatprep.subr.mxu0 0.0
    %1464 = vmatpush1.xpose.msra.mxu0 0.0
    %1465 = vmatprep.subr.mxu0 0.0
    %1466 = vmatpush1.xpose.msra.mxu0 0.0
    %1467 = vmatprep.subr.mxu0 0.0
    %1468 = vmatpush1.xpose.msra.mxu0 0.0
    %1469 = vmatprep.subr.mxu0 0.0
    %1470 = vmatpush1.xpose.msra.mxu0 0.0
    %1471 = vmatprep.subr.mxu0 0.0
    %1472 = vmatpush1.xpose.msra.mxu0 0.0
    %1473 = vmatprep.subr.mxu0 0.0
    %1474 = vmatpush1.xpose.msra.mxu0 0.0
    %1475 = vmatprep.subr.mxu0 0.0
    %1476 = vmatpush1.xpose.msra.mxu0 0.0
    %1477 = vmatprep.subr.mxu0 0.0
    %1478 = vmatpush1.xpose.msra.mxu0 0.0
    %1479 = vmatprep.subr.mxu0 0.0
    %1480 = vmatpush1.xpose.msra.mxu0 0.0
    %1481 = vmatprep.subr.mxu0 0.0
    %1482 = vmatpush1.xpose.msra.mxu0 0.0
    %1483 = vmatprep.subr.mxu0 0.0
    %1484 = vmatpush1.xpose.msra.mxu0 0.0
    %1485 = vmatprep.subr.mxu0 0.0
    %1486 = vmatpush1.xpose.msra.mxu0 0.0
    %1487 = vmatprep.subr.mxu0 0.0
    %1488 = vmatpush1.xpose.msra.mxu0 0.0
    %1489 = vmatprep.subr.mxu0 0.0
    %1490 = vmatpush1.xpose.msra.mxu0 0.0
    %1491 = vmatprep.subr.mxu0 0.0
    %1492 = vmatpush1.xpose.msra.mxu0 0.0
    %1493 = vmatprep.subr.mxu0 0.0
    %1494 = vmatpush1.xpose.msra.mxu0 0.0
    %1495 = vmatprep.subr.mxu0 0.0
    %1496 = vmatpush1.xpose.msra.mxu0 0.0
    %1497 = vmatprep.subr.mxu0 0.0
    %1498 = vmatpush1.xpose.msra.mxu0 0.0
    %1499 = vmatprep.subr.mxu0 0.0
    %1500 = vmatpush1.xpose.msra.mxu0 0.0
    %1501 = vmatprep.subr.mxu0 0.0
    %1502 = vmatpush1.xpose.msra.mxu0 0.0
    %1503 = vmatprep.subr.mxu0 0.0
    %1504 = vmatpush1.xpose.msra.mxu0 0.0
    %1505 = vmatprep.subr.mxu0 0.0
    %1506 = vmatpush1.xpose.msra.mxu0 0.0
    %1507 = vmatprep.subr.mxu0 0.0
    %1508 = vmatpush1.xpose.msra.mxu0 0.0
    %1509 = vmatprep.mubr.f32.mxu0 0.0
    %1510 = vmatmul.mubr.f32.gmra.mrb[0].mxu0 %v1443
    %v1511 = vpop.f32.mrb[0].mxu0
    %v1512 = vadd.f32 %v47, %v1511
    %v1513 = vpop.f32.mrb[0].mxu0
    %1514 = vdwg.mxu0
    %v1516 = vsel %vm97, %v401, 0
    %1518 = vmatprep.subr.mxu0 0.0
    %1519 = vmatpush1.xpose.msra.mxu0 %v102
    %1520 = vmatprep.subr.mxu0 0.0
    %1521 = vmatpush1.xpose.msra.mxu0 0.0
    %1522 = vmatprep.subr.mxu0 0.0
    %1523 = vmatpush1.xpose.msra.mxu0 0.0
    %1524 = vmatprep.subr.mxu0 0.0
    %1525 = vmatpush1.xpose.msra.mxu0 0.0
    %1526 = vmatprep.subr.mxu0 0.0
    %1527 = vmatpush1.xpose.msra.mxu0 0.0
    %1528 = vmatprep.subr.mxu0 0.0
    %1529 = vmatpush1.xpose.msra.mxu0 0.0
    %1530 = vmatprep.subr.mxu0 0.0
    %1531 = vmatpush1.xpose.msra.mxu0 0.0
    %1532 = vmatprep.subr.mxu0 0.0
    %1533 = vmatpush1.xpose.msra.mxu0 0.0
    %1534 = vmatprep.subr.mxu0 0.0
    %1535 = vmatpush1.xpose.msra.mxu0 0.0
    %1536 = vmatprep.subr.mxu0 0.0
    %1537 = vmatpush1.xpose.msra.mxu0 0.0
    %1538 = vmatprep.subr.mxu0 0.0
    %1539 = vmatpush1.xpose.msra.mxu0 0.0
    %1540 = vmatprep.subr.mxu0 0.0
    %1541 = vmatpush1.xpose.msra.mxu0 0.0
    %1542 = vmatprep.subr.mxu0 0.0
    %1543 = vmatpush1.xpose.msra.mxu0 0.0
    %1544 = vmatprep.subr.mxu0 0.0
    %1545 = vmatpush1.xpose.msra.mxu0 0.0
    %1546 = vmatprep.subr.mxu0 0.0
    %1547 = vmatpush1.xpose.msra.mxu0 0.0
    %1548 = vmatprep.subr.mxu0 0.0
    %1549 = vmatpush1.xpose.msra.mxu0 0.0
    %1550 = vmatprep.subr.mxu0 0.0
    %1551 = vmatpush1.xpose.msra.mxu0 0.0
    %1552 = vmatprep.subr.mxu0 0.0
    %1553 = vmatpush1.xpose.msra.mxu0 0.0
    %1554 = vmatprep.subr.mxu0 0.0
    %1555 = vmatpush1.xpose.msra.mxu0 0.0
    %1556 = vmatprep.subr.mxu0 0.0
    %1557 = vmatpush1.xpose.msra.mxu0 0.0
    %1558 = vmatprep.subr.mxu0 0.0
    %1559 = vmatpush1.xpose.msra.mxu0 0.0
    %1560 = vmatprep.subr.mxu0 0.0
    %1561 = vmatpush1.xpose.msra.mxu0 0.0
    %1562 = vmatprep.subr.mxu0 0.0
    %1563 = vmatpush1.xpose.msra.mxu0 0.0
    %1564 = vmatprep.subr.mxu0 0.0
    %1565 = vmatpush1.xpose.msra.mxu0 0.0
    %1566 = vmatprep.subr.mxu0 0.0
    %1567 = vmatpush1.xpose.msra.mxu0 0.0
    %1568 = vmatprep.subr.mxu0 0.0
    %1569 = vmatpush1.xpose.msra.mxu0 0.0
    %1570 = vmatprep.subr.mxu0 0.0
    %1571 = vmatpush1.xpose.msra.mxu0 0.0
    %1572 = vmatprep.subr.mxu0 0.0
    %1573 = vmatpush1.xpose.msra.mxu0 0.0
    %1574 = vmatprep.subr.mxu0 0.0
    %1575 = vmatpush1.xpose.msra.mxu0 0.0
    %1576 = vmatprep.subr.mxu0 0.0
    %1577 = vmatpush1.xpose.msra.mxu0 0.0
    %1578 = vmatprep.subr.mxu0 0.0
    %1579 = vmatpush1.xpose.msra.mxu0 0.0
    %1580 = vmatprep.subr.mxu0 0.0
    %1581 = vmatpush1.xpose.msra.mxu0 0.0
    %1582 = vmatprep.mubr.f32.mxu0 0.0
    %1583 = vmatmul.mubr.f32.gmra.mrb[0].mxu0 %v1516
    %v1584 = vpop.f32.mrb[0].mxu0
    %v1585 = vadd.f32 %v48, %v1584
    %v1586 = vpop.f32.mrb[0].mxu0
    %1587 = vdwg.mxu0
    %vm1588 = vcmask 64512
    %v1589 = vsel %vm1588, %v1074, -inf
    %1590 = vmax.xlane.f32.xlu0 %v1589
    %v1591 = vpop.xlane.xlu0 %1590
    %v1592 = vsel %vm1588, %v1147, -inf
    %1593 = vmax.xlane.f32.xlu0 %v1592
    %v1594 = vpop.xlane.xlu0 %1593
    %v1595 = vsel %vm1588, %v1220, -inf
    %1596 = vmax.xlane.f32.xlu0 %v1595
    %v1597 = vpop.xlane.xlu0 %1596
    %v1598 = vsel %vm1588, %v1293, -inf
    %1599 = vmax.xlane.f32.xlu0 %v1598
    %v1600 = vpop.xlane.xlu0 %1599
    %v1601 = vsel %vm1588, %v1366, -inf
    %1602 = vmax.xlane.f32.xlu0 %v1601
    %v1603 = vpop.xlane.xlu0 %1602
    %v1604 = vsel %vm1588, %v1439, -inf
    %1605 = vmax.xlane.f32.xlu0 %v1604
    %v1606 = vpop.xlane.xlu0 %1605
    %v1607 = vsel %vm1588, %v1512, -inf
    %1608 = vmax.xlane.f32.xlu0 %v1607
    %v1609 = vpop.xlane.xlu0 %1608
    %v1610 = vsel %vm1588, %v1585, -inf
    %1611 = vmax.xlane.f32.xlu0 %v1610
    %v1612 = vpop.xlane.xlu0 %1611
    %v1613 = vsub.f32 %v1074, %v1591
    %v1614 = vsub.f32 %v1147, %v1594
    %v1615 = vsub.f32 %v1220, %v1597
    %v1616 = vsub.f32 %v1293, %v1600
    %v1617 = vsub.f32 %v1366, %v1603
    %v1618 = vsub.f32 %v1439, %v1606
    %v1619 = vsub.f32 %v1512, %v1609
    %v1620 = vsub.f32 %v1585, %v1612
    %v1621 = vmul.f32 %v1613, 1.442695
    %v1622 = vpow.pop %v1621
    %v1623 = vmul.f32 %v1614, 1.442695
    %v1624 = vpow.pop %v1623
    %v1625 = vmul.f32 %v1615, 1.442695
    %v1626 = vpow.pop %v1625
    %v1627 = vmul.f32 %v1616, 1.442695
    %v1628 = vpow.pop %v1627
    %v1629 = vmul.f32 %v1617, 1.442695
    %v1630 = vpow.pop %v1629
    %v1631 = vmul.f32 %v1618, 1.442695
    %v1632 = vpow.pop %v1631
    %v1633 = vmul.f32 %v1619, 1.442695
    %v1634 = vpow.pop %v1633
    %v1635 = vmul.f32 %v1620, 1.442695
    %v1636 = vpow.pop %v1635
    %v1637 = vsel %vm1588, %v1622, 0.0
    %1638 = vadd.xlane.f32.xlu0 %v1637
    %v1639 = vpop.xlane.xlu0 %1638
    %v1640 = vsel %vm1588, %v1624, 0.0
    %1641 = vadd.xlane.f32.xlu0 %v1640
    %v1642 = vpop.xlane.xlu0 %1641
    %v1643 = vsel %vm1588, %v1626, 0.0
    %1644 = vadd.xlane.f32.xlu0 %v1643
    %v1645 = vpop.xlane.xlu0 %1644
    %v1646 = vsel %vm1588, %v1628, 0.0
    %1647 = vadd.xlane.f32.xlu0 %v1646
    %v1648 = vpop.xlane.xlu0 %1647
    %v1649 = vsel %vm1588, %v1630, 0.0
    %1650 = vadd.xlane.f32.xlu0 %v1649
    %v1651 = vpop.xlane.xlu0 %1650
    %v1652 = vsel %vm1588, %v1632, 0.0
    %1653 = vadd.xlane.f32.xlu0 %v1652
    %v1654 = vpop.xlane.xlu0 %1653
    %v1655 = vsel %vm1588, %v1634, 0.0
    %1656 = vadd.xlane.f32.xlu0 %v1655
    %v1657 = vpop.xlane.xlu0 %1656
    %v1658 = vsel %vm1588, %v1636, 0.0
    %1659 = vadd.xlane.f32.xlu0 %v1658
    %v1660 = vpop.xlane.xlu0 %1659
    %v1661 = vrcp.pop %v1639
    %v1662 = vmul.f32 %v1622, %v1661
    %v1663 = vrcp.pop %v1642
    %v1664 = vmul.f32 %v1624, %v1663
    %v1665 = vrcp.pop %v1645
    %v1666 = vmul.f32 %v1626, %v1665
    %v1667 = vrcp.pop %v1648
    %v1668 = vmul.f32 %v1628, %v1667
    %v1669 = vrcp.pop %v1651
    %v1670 = vmul.f32 %v1630, %v1669
    %v1671 = vrcp.pop %v1654
    %v1672 = vmul.f32 %v1632, %v1671
    %v1673 = vrcp.pop %v1657
    %v1674 = vmul.f32 %v1634, %v1673
    %v1675 = vrcp.pop %v1660
    %v1676 = vmul.f32 %v1636, %v1675
    %1677 = vst.msk [vmem:[#allocation6] sm:$0xff] %vm1588, %v1662
    %1678 = vst.msk [vmem:[#allocation6 + $0x8] sm:$0xff] %vm1588, %v1664
    %1679 = vst.msk [vmem:[#allocation6 + $0x10] sm:$0xff] %vm1588, %v1666
    %1680 = vst.msk [vmem:[#allocation6 + $0x18] sm:$0xff] %vm1588, %v1668
    %1681 = vst.msk [vmem:[#allocation6 + $0x20] sm:$0xff] %vm1588, %v1670
    %1682 = vst.msk [vmem:[#allocation6 + $0x28] sm:$0xff] %vm1588, %v1672
    %1683 = vst.msk [vmem:[#allocation6 + $0x30] sm:$0xff] %vm1588, %v1674
    %1684 = vst.msk [vmem:[#allocation6 + $0x38] sm:$0xff] %vm1588, %v1676
    %v1686 = vsel %vm97, %v471, 0
    %1688 = vmatprep.subr.mxu0 0.0
    %1689 = vmatpush1.xpose.msra.mxu0 %v99
    %1690 = vmatprep.subr.mxu0 0.0
    %1691 = vmatpush1.xpose.msra.mxu0 0.0
    %1692 = vmatprep.subr.mxu0 0.0
    %1693 = vmatpush1.xpose.msra.mxu0 0.0
    %1694 = vmatprep.subr.mxu0 0.0
    %1695 = vmatpush1.xpose.msra.mxu0 0.0
    %1696 = vmatprep.subr.mxu0 0.0
    %1697 = vmatpush1.xpose.msra.mxu0 0.0
    %1698 = vmatprep.subr.mxu0 0.0
    %1699 = vmatpush1.xpose.msra.mxu0 0.0
    %1700 = vmatprep.subr.mxu0 0.0
    %1701 = vmatpush1.xpose.msra.mxu0 0.0
    %1702 = vmatprep.subr.mxu0 0.0
    %1703 = vmatpush1.xpose.msra.mxu0 0.0
    %1704 = vmatprep.subr.mxu0 0.0
    %1705 = vmatpush1.xpose.msra.mxu0 0.0
    %1706 = vmatprep.subr.mxu0 0.0
    %1707 = vmatpush1.xpose.msra.mxu0 0.0
    %1708 = vmatprep.subr.mxu0 0.0
    %1709 = vmatpush1.xpose.msra.mxu0 0.0
    %1710 = vmatprep.subr.mxu0 0.0
    %1711 = vmatpush1.xpose.msra.mxu0 0.0
    %1712 = vmatprep.subr.mxu0 0.0
    %1713 = vmatpush1.xpose.msra.mxu0 0.0
    %1714 = vmatprep.subr.mxu0 0.0
    %1715 = vmatpush1.xpose.msra.mxu0 0.0
    %1716 = vmatprep.subr.mxu0 0.0
    %1717 = vmatpush1.xpose.msra.mxu0 0.0
    %1718 = vmatprep.subr.mxu0 0.0
    %1719 = vmatpush1.xpose.msra.mxu0 0.0
    %1720 = vmatprep.subr.mxu0 0.0
    %1721 = vmatpush1.xpose.msra.mxu0 0.0
    %1722 = vmatprep.subr.mxu0 0.0
    %1723 = vmatpush1.xpose.msra.mxu0 0.0
    %1724 = vmatprep.subr.mxu0 0.0
    %1725 = vmatpush1.xpose.msra.mxu0 0.0
    %1726 = vmatprep.subr.mxu0 0.0
    %1727 = vmatpush1.xpose.msra.mxu0 0.0
    %1728 = vmatprep.subr.mxu0 0.0
    %1729 = vmatpush1.xpose.msra.mxu0 0.0
    %1730 = vmatprep.subr.mxu0 0.0
    %1731 = vmatpush1.xpose.msra.mxu0 0.0
    %1732 = vmatprep.subr.mxu0 0.0
    %1733 = vmatpush1.xpose.msra.mxu0 0.0
    %1734 = vmatprep.subr.mxu0 0.0
    %1735 = vmatpush1.xpose.msra.mxu0 0.0
    %1736 = vmatprep.subr.mxu0 0.0
    %1737 = vmatpush1.xpose.msra.mxu0 0.0
    %1738 = vmatprep.subr.mxu0 0.0
    %1739 = vmatpush1.xpose.msra.mxu0 0.0
    %1740 = vmatprep.subr.mxu0 0.0
    %1741 = vmatpush1.xpose.msra.mxu0 0.0
    %1742 = vmatprep.subr.mxu0 0.0
    %1743 = vmatpush1.xpose.msra.mxu0 0.0
    %1744 = vmatprep.subr.mxu0 0.0
    %1745 = vmatpush1.xpose.msra.mxu0 0.0
    %1746 = vmatprep.subr.mxu0 0.0
    %1747 = vmatpush1.xpose.msra.mxu0 0.0
    %1748 = vmatprep.subr.mxu0 0.0
    %1749 = vmatpush1.xpose.msra.mxu0 0.0
    %1750 = vmatprep.subr.mxu0 0.0
    %1751 = vmatpush1.xpose.msra.mxu0 0.0
    %1752 = vmatprep.mubr.f32.mxu0 0.0
    %1753 = vmatmul.mubr.f32.gmra.mrb[0].mxu0 %v1686
    %v1754 = vpop.f32.mrb[0].mxu0
    %v1755 = vadd.f32 %v47, %v1754
    %v1756 = vpop.f32.mrb[0].mxu0
    %1757 = vdwg.mxu0
    %v1759 = vsel %vm97, %v476, 0
    %1761 = vmatprep.subr.mxu0 0.0
    %1762 = vmatpush1.xpose.msra.mxu0 %v102
    %1763 = vmatprep.subr.mxu0 0.0
    %1764 = vmatpush1.xpose.msra.mxu0 0.0
    %1765 = vmatprep.subr.mxu0 0.0
    %1766 = vmatpush1.xpose.msra.mxu0 0.0
    %1767 = vmatprep.subr.mxu0 0.0
    %1768 = vmatpush1.xpose.msra.mxu0 0.0
    %1769 = vmatprep.subr.mxu0 0.0
    %1770 = vmatpush1.xpose.msra.mxu0 0.0
    %1771 = vmatprep.subr.mxu0 0.0
    %1772 = vmatpush1.xpose.msra.mxu0 0.0
    %1773 = vmatprep.subr.mxu0 0.0
    %1774 = vmatpush1.xpose.msra.mxu0 0.0
    %1775 = vmatprep.subr.mxu0 0.0
    %1776 = vmatpush1.xpose.msra.mxu0 0.0
    %1777 = vmatprep.subr.mxu0 0.0
    %1778 = vmatpush1.xpose.msra.mxu0 0.0
    %1779 = vmatprep.subr.mxu0 0.0
    %1780 = vmatpush1.xpose.msra.mxu0 0.0
    %1781 = vmatprep.subr.mxu0 0.0
    %1782 = vmatpush1.xpose.msra.mxu0 0.0
    %1783 = vmatprep.subr.mxu0 0.0
    %1784 = vmatpush1.xpose.msra.mxu0 0.0
    %1785 = vmatprep.subr.mxu0 0.0
    %1786 = vmatpush1.xpose.msra.mxu0 0.0
    %1787 = vmatprep.subr.mxu0 0.0
    %1788 = vmatpush1.xpose.msra.mxu0 0.0
    %1789 = vmatprep.subr.mxu0 0.0
    %1790 = vmatpush1.xpose.msra.mxu0 0.0
    %1791 = vmatprep.subr.mxu0 0.0
    %1792 = vmatpush1.xpose.msra.mxu0 0.0
    %1793 = vmatprep.subr.mxu0 0.0
    %1794 = vmatpush1.xpose.msra.mxu0 0.0
    %1795 = vmatprep.subr.mxu0 0.0
    %1796 = vmatpush1.xpose.msra.mxu0 0.0
    %1797 = vmatprep.subr.mxu0 0.0
    %1798 = vmatpush1.xpose.msra.mxu0 0.0
    %1799 = vmatprep.subr.mxu0 0.0
    %1800 = vmatpush1.xpose.msra.mxu0 0.0
    %1801 = vmatprep.subr.mxu0 0.0
    %1802 = vmatpush1.xpose.msra.mxu0 0.0
    %1803 = vmatprep.subr.mxu0 0.0
    %1804 = vmatpush1.xpose.msra.mxu0 0.0
    %1805 = vmatprep.subr.mxu0 0.0
    %1806 = vmatpush1.xpose.msra.mxu0 0.0
    %1807 = vmatprep.subr.mxu0 0.0
    %1808 = vmatpush1.xpose.msra.mxu0 0.0
    %1809 = vmatprep.subr.mxu0 0.0
    %1810 = vmatpush1.xpose.msra.mxu0 0.0
    %1811 = vmatprep.subr.mxu0 0.0
    %1812 = vmatpush1.xpose.msra.mxu0 0.0
    %1813 = vmatprep.subr.mxu0 0.0
    %1814 = vmatpush1.xpose.msra.mxu0 0.0
    %1815 = vmatprep.subr.mxu0 0.0
    %1816 = vmatpush1.xpose.msra.mxu0 0.0
    %1817 = vmatprep.subr.mxu0 0.0
    %1818 = vmatpush1.xpose.msra.mxu0 0.0
    %1819 = vmatprep.subr.mxu0 0.0
    %1820 = vmatpush1.xpose.msra.mxu0 0.0
    %1821 = vmatprep.subr.mxu0 0.0
    %1822 = vmatpush1.xpose.msra.mxu0 0.0
    %1823 = vmatprep.subr.mxu0 0.0
    %1824 = vmatpush1.xpose.msra.mxu0 0.0
    %1825 = vmatprep.mubr.f32.mxu0 0.0
    %1826 = vmatmul.mubr.f32.gmra.mrb[0].mxu0 %v1759
    %v1827 = vpop.f32.mrb[0].mxu0
    %v1828 = vadd.f32 %v48, %v1827
    %v1829 = vpop.f32.mrb[0].mxu0
    %1830 = vdwg.mxu0
    %v1832 = vsel %vm97, %v546, 0
    %1834 = vmatprep.subr.mxu0 0.0
    %1835 = vmatpush1.xpose.msra.mxu0 %v99
    %1836 = vmatprep.subr.mxu0 0.0
    %1837 = vmatpush1.xpose.msra.mxu0 0.0
    %1838 = vmatprep.subr.mxu0 0.0
    %1839 = vmatpush1.xpose.msra.mxu0 0.0
    %1840 = vmatprep.subr.mxu0 0.0
    %1841 = vmatpush1.xpose.msra.mxu0 0.0
    %1842 = vmatprep.subr.mxu0 0.0
    %1843 = vmatpush1.xpose.msra.mxu0 0.0
    %1844 = vmatprep.subr.mxu0 0.0
    %1845 = vmatpush1.xpose.msra.mxu0 0.0
    %1846 = vmatprep.subr.mxu0 0.0
    %1847 = vmatpush1.xpose.msra.mxu0 0.0
    %1848 = vmatprep.subr.mxu0 0.0
    %1849 = vmatpush1.xpose.msra.mxu0 0.0
    %1850 = vmatprep.subr.mxu0 0.0
    %1851 = vmatpush1.xpose.msra.mxu0 0.0
    %1852 = vmatprep.subr.mxu0 0.0
    %1853 = vmatpush1.xpose.msra.mxu0 0.0
    %1854 = vmatprep.subr.mxu0 0.0
    %1855 = vmatpush1.xpose.msra.mxu0 0.0
    %1856 = vmatprep.subr.mxu0 0.0
    %1857 = vmatpush1.xpose.msra.mxu0 0.0
    %1858 = vmatprep.subr.mxu0 0.0
    %1859 = vmatpush1.xpose.msra.mxu0 0.0
    %1860 = vmatprep.subr.mxu0 0.0
    %1861 = vmatpush1.xpose.msra.mxu0 0.0
    %1862 = vmatprep.subr.mxu0 0.0
    %1863 = vmatpush1.xpose.msra.mxu0 0.0
    %1864 = vmatprep.subr.mxu0 0.0
    %1865 = vmatpush1.xpose.msra.mxu0 0.0
    %1866 = vmatprep.subr.mxu0 0.0
    %1867 = vmatpush1.xpose.msra.mxu0 0.0
    %1868 = vmatprep.subr.mxu0 0.0
    %1869 = vmatpush1.xpose.msra.mxu0 0.0
    %1870 = vmatprep.subr.mxu0 0.0
    %1871 = vmatpush1.xpose.msra.mxu0 0.0
    %1872 = vmatprep.subr.mxu0 0.0
    %1873 = vmatpush1.xpose.msra.mxu0 0.0
    %1874 = vmatprep.subr.mxu0 0.0
    %1875 = vmatpush1.xpose.msra.mxu0 0.0
    %1876 = vmatprep.subr.mxu0 0.0
    %1877 = vmatpush1.xpose.msra.mxu0 0.0
    %1878 = vmatprep.subr.mxu0 0.0
    %1879 = vmatpush1.xpose.msra.mxu0 0.0
    %1880 = vmatprep.subr.mxu0 0.0
    %1881 = vmatpush1.xpose.msra.mxu0 0.0
    %1882 = vmatprep.subr.mxu0 0.0
    %1883 = vmatpush1.xpose.msra.mxu0 0.0
    %1884 = vmatprep.subr.mxu0 0.0
    %1885 = vmatpush1.xpose.msra.mxu0 0.0
    %1886 = vmatprep.subr.mxu0 0.0
    %1887 = vmatpush1.xpose.msra.mxu0 0.0
    %1888 = vmatprep.subr.mxu0 0.0
    %1889 = vmatpush1.xpose.msra.mxu0 0.0
    %1890 = vmatprep.subr.mxu0 0.0
    %1891 = vmatpush1.xpose.msra.mxu0 0.0
    %1892 = vmatprep.subr.mxu0 0.0
    %1893 = vmatpush1.xpose.msra.mxu0 0.0
    %1894 = vmatprep.subr.mxu0 0.0
    %1895 = vmatpush1.xpose.msra.mxu0 0.0
    %1896 = vmatprep.subr.mxu0 0.0
    %1897 = vmatpush1.xpose.msra.mxu0 0.0
    %1898 = vmatprep.mubr.f32.mxu0 0.0
    %1899 = vmatmul.mubr.f32.gmra.mrb[0].mxu0 %v1832
    %v1900 = vpop.f32.mrb[0].mxu0
    %v1901 = vadd.f32 %v47, %v1900
    %v1902 = vpop.f32.mrb[0].mxu0
    %1903 = vdwg.mxu0
    %v1905 = vsel %vm97, %v551, 0
    %1907 = vmatprep.subr.mxu0 0.0
    %1908 = vmatpush1.xpose.msra.mxu0 %v102
    %1909 = vmatprep.subr.mxu0 0.0
    %1910 = vmatpush1.xpose.msra.mxu0 0.0
    %1911 = vmatprep.subr.mxu0 0.0
    %1912 = vmatpush1.xpose.msra.mxu0 0.0
    %1913 = vmatprep.subr.mxu0 0.0
    %1914 = vmatpush1.xpose.msra.mxu0 0.0
    %1915 = vmatprep.subr.mxu0 0.0
    %1916 = vmatpush1.xpose.msra.mxu0 0.0
    %1917 = vmatprep.subr.mxu0 0.0
    %1918 = vmatpush1.xpose.msra.mxu0 0.0
    %1919 = vmatprep.subr.mxu0 0.0
    %1920 = vmatpush1.xpose.msra.mxu0 0.0
    %1921 = vmatprep.subr.mxu0 0.0
    %1922 = vmatpush1.xpose.msra.mxu0 0.0
    %1923 = vmatprep.subr.mxu0 0.0
    %1924 = vmatpush1.xpose.msra.mxu0 0.0
    %1925 = vmatprep.subr.mxu0 0.0
    %1926 = vmatpush1.xpose.msra.mxu0 0.0
    %1927 = vmatprep.subr.mxu0 0.0
    %1928 = vmatpush1.xpose.msra.mxu0 0.0
    %1929 = vmatprep.subr.mxu0 0.0
    %1930 = vmatpush1.xpose.msra.mxu0 0.0
    %1931 = vmatprep.subr.mxu0 0.0
    %1932 = vmatpush1.xpose.msra.mxu0 0.0
    %1933 = vmatprep.subr.mxu0 0.0
    %1934 = vmatpush1.xpose.msra.mxu0 0.0
    %1935 = vmatprep.subr.mxu0 0.0
    %1936 = vmatpush1.xpose.msra.mxu0 0.0
    %1937 = vmatprep.subr.mxu0 0.0
    %1938 = vmatpush1.xpose.msra.mxu0 0.0
    %1939 = vmatprep.subr.mxu0 0.0
    %1940 = vmatpush1.xpose.msra.mxu0 0.0
    %1941 = vmatprep.subr.mxu0 0.0
    %1942 = vmatpush1.xpose.msra.mxu0 0.0
    %1943 = vmatprep.subr.mxu0 0.0
    %1944 = vmatpush1.xpose.msra.mxu0 0.0
    %1945 = vmatprep.subr.mxu0 0.0
    %1946 = vmatpush1.xpose.msra.mxu0 0.0
    %1947 = vmatprep.subr.mxu0 0.0
    %1948 = vmatpush1.xpose.msra.mxu0 0.0
    %1949 = vmatprep.subr.mxu0 0.0
    %1950 = vmatpush1.xpose.msra.mxu0 0.0
    %1951 = vmatprep.subr.mxu0 0.0
    %1952 = vmatpush1.xpose.msra.mxu0 0.0
    %1953 = vmatprep.subr.mxu0 0.0
    %1954 = vmatpush1.xpose.msra.mxu0 0.0
    %1955 = vmatprep.subr.mxu0 0.0
    %1956 = vmatpush1.xpose.msra.mxu0 0.0
    %1957 = vmatprep.subr.mxu0 0.0
    %1958 = vmatpush1.xpose.msra.mxu0 0.0
    %1959 = vmatprep.subr.mxu0 0.0
    %1960 = vmatpush1.xpose.msra.mxu0 0.0
    %1961 = vmatprep.subr.mxu0 0.0
    %1962 = vmatpush1.xpose.msra.mxu0 0.0
    %1963 = vmatprep.subr.mxu0 0.0
    %1964 = vmatpush1.xpose.msra.mxu0 0.0
    %1965 = vmatprep.subr.mxu0 0.0
    %1966 = vmatpush1.xpose.msra.mxu0 0.0
    %1967 = vmatprep.subr.mxu0 0.0
    %1968 = vmatpush1.xpose.msra.mxu0 0.0
    %1969 = vmatprep.subr.mxu0 0.0
    %1970 = vmatpush1.xpose.msra.mxu0 0.0
    %1971 = vmatprep.mubr.f32.mxu0 0.0
    %1972 = vmatmul.mubr.f32.gmra.mrb[0].mxu0 %v1905
    %v1973 = vpop.f32.mrb[0].mxu0
    %v1974 = vadd.f32 %v48, %v1973
    %v1975 = vpop.f32.mrb[0].mxu0
    %1976 = vdwg.mxu0
    %v1978 = vsel %vm97, %v621, 0
    %1980 = vmatprep.subr.mxu0 0.0
    %1981 = vmatpush1.xpose.msra.mxu0 %v99
    %1982 = vmatprep.subr.mxu0 0.0
    %1983 = vmatpush1.xpose.msra.mxu0 0.0
    %1984 = vmatprep.subr.mxu0 0.0
    %1985 = vmatpush1.xpose.msra.mxu0 0.0
    %1986 = vmatprep.subr.mxu0 0.0
    %1987 = vmatpush1.xpose.msra.mxu0 0.0
    %1988 = vmatprep.subr.mxu0 0.0
    %1989 = vmatpush1.xpose.msra.mxu0 0.0
    %1990 = vmatprep.subr.mxu0 0.0
    %1991 = vmatpush1.xpose.msra.mxu0 0.0
    %1992 = vmatprep.subr.mxu0 0.0
    %1993 = vmatpush1.xpose.msra.mxu0 0.0
    %1994 = vmatprep.subr.mxu0 0.0
    %1995 = vmatpush1.xpose.msra.mxu0 0.0
    %1996 = vmatprep.subr.mxu0 0.0
    %1997 = vmatpush1.xpose.msra.mxu0 0.0
    %1998 = vmatprep.subr.mxu0 0.0
    %1999 = vmatpush1.xpose.msra.mxu0 0.0
    %2000 = vmatprep.subr.mxu0 0.0
    %2001 = vmatpush1.xpose.msra.mxu0 0.0
    %2002 = vmatprep.subr.mxu0 0.0
    %2003 = vmatpush1.xpose.msra.mxu0 0.0
    %2004 = vmatprep.subr.mxu0 0.0
    %2005 = vmatpush1.xpose.msra.mxu0 0.0
    %2006 = vmatprep.subr.mxu0 0.0
    %2007 = vmatpush1.xpose.msra.mxu0 0.0
    %2008 = vmatprep.subr.mxu0 0.0
    %2009 = vmatpush1.xpose.msra.mxu0 0.0
    %2010 = vmatprep.subr.mxu0 0.0
    %2011 = vmatpush1.xpose.msra.mxu0 0.0
    %2012 = vmatprep.subr.mxu0 0.0
    %2013 = vmatpush1.xpose.msra.mxu0 0.0
    %2014 = vmatprep.subr.mxu0 0.0
    %2015 = vmatpush1.xpose.msra.mxu0 0.0
    %2016 = vmatprep.subr.mxu0 0.0
    %2017 = vmatpush1.xpose.msra.mxu0 0.0
    %2018 = vmatprep.subr.mxu0 0.0
    %2019 = vmatpush1.xpose.msra.mxu0 0.0
    %2020 = vmatprep.subr.mxu0 0.0
    %2021 = vmatpush1.xpose.msra.mxu0 0.0
    %2022 = vmatprep.subr.mxu0 0.0
    %2023 = vmatpush1.xpose.msra.mxu0 0.0
    %2024 = vmatprep.subr.mxu0 0.0
    %2025 = vmatpush1.xpose.msra.mxu0 0.0
    %2026 = vmatprep.subr.mxu0 0.0
    %2027 = vmatpush1.xpose.msra.mxu0 0.0
    %2028 = vmatprep.subr.mxu0 0.0
    %2029 = vmatpush1.xpose.msra.mxu0 0.0
    %2030 = vmatprep.subr.mxu0 0.0
    %2031 = vmatpush1.xpose.msra.mxu0 0.0
    %2032 = vmatprep.subr.mxu0 0.0
    %2033 = vmatpush1.xpose.msra.mxu0 0.0
    %2034 = vmatprep.subr.mxu0 0.0
    %2035 = vmatpush1.xpose.msra.mxu0 0.0
    %2036 = vmatprep.subr.mxu0 0.0
    %2037 = vmatpush1.xpose.msra.mxu0 0.0
    %2038 = vmatprep.subr.mxu0 0.0
    %2039 = vmatpush1.xpose.msra.mxu0 0.0
    %2040 = vmatprep.subr.mxu0 0.0
    %2041 = vmatpush1.xpose.msra.mxu0 0.0
    %2042 = vmatprep.subr.mxu0 0.0
    %2043 = vmatpush1.xpose.msra.mxu0 0.0
    %2044 = vmatprep.mubr.f32.mxu0 0.0
    %2045 = vmatmul.mubr.f32.gmra.mrb[0].mxu0 %v1978
    %v2046 = vpop.f32.mrb[0].mxu0
    %v2047 = vadd.f32 %v47, %v2046
    %v2048 = vpop.f32.mrb[0].mxu0
    %2049 = vdwg.mxu0
    %v2051 = vsel %vm97, %v626, 0
    %2053 = vmatprep.subr.mxu0 0.0
    %2054 = vmatpush1.xpose.msra.mxu0 %v102
    %2055 = vmatprep.subr.mxu0 0.0
    %2056 = vmatpush1.xpose.msra.mxu0 0.0
    %2057 = vmatprep.subr.mxu0 0.0
    %2058 = vmatpush1.xpose.msra.mxu0 0.0
    %2059 = vmatprep.subr.mxu0 0.0
    %2060 = vmatpush1.xpose.msra.mxu0 0.0
    %2061 = vmatprep.subr.mxu0 0.0
    %2062 = vmatpush1.xpose.msra.mxu0 0.0
    %2063 = vmatprep.subr.mxu0 0.0
    %2064 = vmatpush1.xpose.msra.mxu0 0.0
    %2065 = vmatprep.subr.mxu0 0.0
    %2066 = vmatpush1.xpose.msra.mxu0 0.0
    %2067 = vmatprep.subr.mxu0 0.0
    %2068 = vmatpush1.xpose.msra.mxu0 0.0
    %2069 = vmatprep.subr.mxu0 0.0
    %2070 = vmatpush1.xpose.msra.mxu0 0.0
    %2071 = vmatprep.subr.mxu0 0.0
    %2072 = vmatpush1.xpose.msra.mxu0 0.0
    %2073 = vmatprep.subr.mxu0 0.0
    %2074 = vmatpush1.xpose.msra.mxu0 0.0
    %2075 = vmatprep.subr.mxu0 0.0
    %2076 = vmatpush1.xpose.msra.mxu0 0.0
    %2077 = vmatprep.subr.mxu0 0.0
    %2078 = vmatpush1.xpose.msra.mxu0 0.0
    %2079 = vmatprep.subr.mxu0 0.0
    %2080 = vmatpush1.xpose.msra.mxu0 0.0
    %2081 = vmatprep.subr.mxu0 0.0
    %2082 = vmatpush1.xpose.msra.mxu0 0.0
    %2083 = vmatprep.subr.mxu0 0.0
    %2084 = vmatpush1.xpose.msra.mxu0 0.0
    %2085 = vmatprep.subr.mxu0 0.0
    %2086 = vmatpush1.xpose.msra.mxu0 0.0
    %2087 = vmatprep.subr.mxu0 0.0
    %2088 = vmatpush1.xpose.msra.mxu0 0.0
    %2089 = vmatprep.subr.mxu0 0.0
    %2090 = vmatpush1.xpose.msra.mxu0 0.0
    %2091 = vmatprep.subr.mxu0 0.0
    %2092 = vmatpush1.xpose.msra.mxu0 0.0
    %2093 = vmatprep.subr.mxu0 0.0
    %2094 = vmatpush1.xpose.msra.mxu0 0.0
    %2095 = vmatprep.subr.mxu0 0.0
    %2096 = vmatpush1.xpose.msra.mxu0 0.0
    %2097 = vmatprep.subr.mxu0 0.0
    %2098 = vmatpush1.xpose.msra.mxu0 0.0
    %2099 = vmatprep.subr.mxu0 0.0
    %2100 = vmatpush1.xpose.msra.mxu0 0.0
    %2101 = vmatprep.subr.mxu0 0.0
    %2102 = vmatpush1.xpose.msra.mxu0 0.0
    %2103 = vmatprep.subr.mxu0 0.0
    %2104 = vmatpush1.xpose.msra.mxu0 0.0
    %2105 = vmatprep.subr.mxu0 0.0
    %2106 = vmatpush1.xpose.msra.mxu0 0.0
    %2107 = vmatprep.subr.mxu0 0.0
    %2108 = vmatpush1.xpose.msra.mxu0 0.0
    %2109 = vmatprep.subr.mxu0 0.0
    %2110 = vmatpush1.xpose.msra.mxu0 0.0
    %2111 = vmatprep.subr.mxu0 0.0
    %2112 = vmatpush1.xpose.msra.mxu0 0.0
    %2113 = vmatprep.subr.mxu0 0.0
    %2114 = vmatpush1.xpose.msra.mxu0 0.0
    %2115 = vmatprep.subr.mxu0 0.0
    %2116 = vmatpush1.xpose.msra.mxu0 0.0
    %2117 = vmatprep.mubr.f32.mxu0 0.0
    %2118 = vmatmul.mubr.f32.gmra.mrb[0].mxu0 %v2051
    %v2119 = vpop.f32.mrb[0].mxu0
    %v2120 = vadd.f32 %v48, %v2119
    %v2121 = vpop.f32.mrb[0].mxu0
    %2122 = vdwg.mxu0
    %v2124 = vsel %vm97, %v696, 0
    %2126 = vmatprep.subr.mxu0 0.0
    %2127 = vmatpush1.xpose.msra.mxu0 %v99
    %2128 = vmatprep.subr.mxu0 0.0
    %2129 = vmatpush1.xpose.msra.mxu0 0.0
    %2130 = vmatprep.subr.mxu0 0.0
    %2131 = vmatpush1.xpose.msra.mxu0 0.0
    %2132 = vmatprep.subr.mxu0 0.0
    %2133 = vmatpush1.xpose.msra.mxu0 0.0
    %2134 = vmatprep.subr.mxu0 0.0
    %2135 = vmatpush1.xpose.msra.mxu0 0.0
    %2136 = vmatprep.subr.mxu0 0.0
    %2137 = vmatpush1.xpose.msra.mxu0 0.0
    %2138 = vmatprep.subr.mxu0 0.0
    %2139 = vmatpush1.xpose.msra.mxu0 0.0
    %2140 = vmatprep.subr.mxu0 0.0
    %2141 = vmatpush1.xpose.msra.mxu0 0.0
    %2142 = vmatprep.subr.mxu0 0.0
    %2143 = vmatpush1.xpose.msra.mxu0 0.0
    %2144 = vmatprep.subr.mxu0 0.0
    %2145 = vmatpush1.xpose.msra.mxu0 0.0
    %2146 = vmatprep.subr.mxu0 0.0
    %2147 = vmatpush1.xpose.msra.mxu0 0.0
    %2148 = vmatprep.subr.mxu0 0.0
    %2149 = vmatpush1.xpose.msra.mxu0 0.0
    %2150 = vmatprep.subr.mxu0 0.0
    %2151 = vmatpush1.xpose.msra.mxu0 0.0
    %2152 = vmatprep.subr.mxu0 0.0
    %2153 = vmatpush1.xpose.msra.mxu0 0.0
    %2154 = vmatprep.subr.mxu0 0.0
    %2155 = vmatpush1.xpose.msra.mxu0 0.0
    %2156 = vmatprep.subr.mxu0 0.0
    %2157 = vmatpush1.xpose.msra.mxu0 0.0
    %2158 = vmatprep.subr.mxu0 0.0
    %2159 = vmatpush1.xpose.msra.mxu0 0.0
    %2160 = vmatprep.subr.mxu0 0.0
    %2161 = vmatpush1.xpose.msra.mxu0 0.0
    %2162 = vmatprep.subr.mxu0 0.0
    %2163 = vmatpush1.xpose.msra.mxu0 0.0
    %2164 = vmatprep.subr.mxu0 0.0
    %2165 = vmatpush1.xpose.msra.mxu0 0.0
    %2166 = vmatprep.subr.mxu0 0.0
    %2167 = vmatpush1.xpose.msra.mxu0 0.0
    %2168 = vmatprep.subr.mxu0 0.0
    %2169 = vmatpush1.xpose.msra.mxu0 0.0
    %2170 = vmatprep.subr.mxu0 0.0
    %2171 = vmatpush1.xpose.msra.mxu0 0.0
    %2172 = vmatprep.subr.mxu0 0.0
    %2173 = vmatpush1.xpose.msra.mxu0 0.0
    %2174 = vmatprep.subr.mxu0 0.0
    %2175 = vmatpush1.xpose.msra.mxu0 0.0
    %2176 = vmatprep.subr.mxu0 0.0
    %2177 = vmatpush1.xpose.msra.mxu0 0.0
    %2178 = vmatprep.subr.mxu0 0.0
    %2179 = vmatpush1.xpose.msra.mxu0 0.0
    %2180 = vmatprep.subr.mxu0 0.0
    %2181 = vmatpush1.xpose.msra.mxu0 0.0
    %2182 = vmatprep.subr.mxu0 0.0
    %2183 = vmatpush1.xpose.msra.mxu0 0.0
    %2184 = vmatprep.subr.mxu0 0.0
    %2185 = vmatpush1.xpose.msra.mxu0 0.0
    %2186 = vmatprep.subr.mxu0 0.0
    %2187 = vmatpush1.xpose.msra.mxu0 0.0
    %2188 = vmatprep.subr.mxu0 0.0
    %2189 = vmatpush1.xpose.msra.mxu0 0.0
    %2190 = vmatprep.mubr.f32.mxu0 0.0
    %2191 = vmatmul.mubr.f32.gmra.mrb[0].mxu0 %v2124
    %v2192 = vpop.f32.mrb[0].mxu0
    %v2193 = vadd.f32 %v47, %v2192
    %v2194 = vpop.f32.mrb[0].mxu0
    %2195 = vdwg.mxu0
    %v2197 = vsel %vm97, %v701, 0
    %2199 = vmatprep.subr.mxu0 0.0
    %2200 = vmatpush1.xpose.msra.mxu0 %v102
    %2201 = vmatprep.subr.mxu0 0.0
    %2202 = vmatpush1.xpose.msra.mxu0 0.0
    %2203 = vmatprep.subr.mxu0 0.0
    %2204 = vmatpush1.xpose.msra.mxu0 0.0
    %2205 = vmatprep.subr.mxu0 0.0
    %2206 = vmatpush1.xpose.msra.mxu0 0.0
    %2207 = vmatprep.subr.mxu0 0.0
    %2208 = vmatpush1.xpose.msra.mxu0 0.0
    %2209 = vmatprep.subr.mxu0 0.0
    %2210 = vmatpush1.xpose.msra.mxu0 0.0
    %2211 = vmatprep.subr.mxu0 0.0
    %2212 = vmatpush1.xpose.msra.mxu0 0.0
    %2213 = vmatprep.subr.mxu0 0.0
    %2214 = vmatpush1.xpose.msra.mxu0 0.0
    %2215 = vmatprep.subr.mxu0 0.0
    %2216 = vmatpush1.xpose.msra.mxu0 0.0
    %2217 = vmatprep.subr.mxu0 0.0
    %2218 = vmatpush1.xpose.msra.mxu0 0.0
    %2219 = vmatprep.subr.mxu0 0.0
    %2220 = vmatpush1.xpose.msra.mxu0 0.0
    %2221 = vmatprep.subr.mxu0 0.0
    %2222 = vmatpush1.xpose.msra.mxu0 0.0
    %2223 = vmatprep.subr.mxu0 0.0
    %2224 = vmatpush1.xpose.msra.mxu0 0.0
    %2225 = vmatprep.subr.mxu0 0.0
    %2226 = vmatpush1.xpose.msra.mxu0 0.0
    %2227 = vmatprep.subr.mxu0 0.0
    %2228 = vmatpush1.xpose.msra.mxu0 0.0
    %2229 = vmatprep.subr.mxu0 0.0
    %2230 = vmatpush1.xpose.msra.mxu0 0.0
    %2231 = vmatprep.subr.mxu0 0.0
    %2232 = vmatpush1.xpose.msra.mxu0 0.0
    %2233 = vmatprep.subr.mxu0 0.0
    %2234 = vmatpush1.xpose.msra.mxu0 0.0
    %2235 = vmatprep.subr.mxu0 0.0
    %2236 = vmatpush1.xpose.msra.mxu0 0.0
    %2237 = vmatprep.subr.mxu0 0.0
    %2238 = vmatpush1.xpose.msra.mxu0 0.0
    %2239 = vmatprep.subr.mxu0 0.0
    %2240 = vmatpush1.xpose.msra.mxu0 0.0
    %2241 = vmatprep.subr.mxu0 0.0
    %2242 = vmatpush1.xpose.msra.mxu0 0.0
    %2243 = vmatprep.subr.mxu0 0.0
    %2244 = vmatpush1.xpose.msra.mxu0 0.0
    %2245 = vmatprep.subr.mxu0 0.0
    %2246 = vmatpush1.xpose.msra.mxu0 0.0
    %2247 = vmatprep.subr.mxu0 0.0
    %2248 = vmatpush1.xpose.msra.mxu0 0.0
    %2249 = vmatprep.subr.mxu0 0.0
    %2250 = vmatpush1.xpose.msra.mxu0 0.0
    %2251 = vmatprep.subr.mxu0 0.0
    %2252 = vmatpush1.xpose.msra.mxu0 0.0
    %2253 = vmatprep.subr.mxu0 0.0
    %2254 = vmatpush1.xpose.msra.mxu0 0.0
    %2255 = vmatprep.subr.mxu0 0.0
    %2256 = vmatpush1.xpose.msra.mxu0 0.0
    %2257 = vmatprep.subr.mxu0 0.0
    %2258 = vmatpush1.xpose.msra.mxu0 0.0
    %2259 = vmatprep.subr.mxu0 0.0
    %2260 = vmatpush1.xpose.msra.mxu0 0.0
    %2261 = vmatprep.subr.mxu0 0.0
    %2262 = vmatpush1.xpose.msra.mxu0 0.0
    %2263 = vmatprep.mubr.f32.mxu0 0.0
    %2264 = vmatmul.mubr.f32.gmra.mrb[0].mxu0 %v2197
    %v2265 = vpop.f32.mrb[0].mxu0
    %v2266 = vadd.f32 %v48, %v2265
    %v2267 = vpop.f32.mrb[0].mxu0
    %2268 = vdwg.mxu0
    %v2269 = vsel %vm1588, %v1755, -inf
    %2270 = vmax.xlane.f32.xlu0 %v2269
    %v2271 = vpop.xlane.xlu0 %2270
    %v2272 = vsel %vm1588, %v1828, -inf
    %2273 = vmax.xlane.f32.xlu0 %v2272
    %v2274 = vpop.xlane.xlu0 %2273
    %v2275 = vsel %vm1588, %v1901, -inf
    %2276 = vmax.xlane.f32.xlu0 %v2275
    %v2277 = vpop.xlane.xlu0 %2276
    %v2278 = vsel %vm1588, %v1974, -inf
    %2279 = vmax.xlane.f32.xlu0 %v2278
    %v2280 = vpop.xlane.xlu0 %2279
    %v2281 = vsel %vm1588, %v2047, -inf
    %2282 = vmax.xlane.f32.xlu0 %v2281
    %v2283 = vpop.xlane.xlu0 %2282
    %v2284 = vsel %vm1588, %v2120, -inf
    %2285 = vmax.xlane.f32.xlu0 %v2284
    %v2286 = vpop.xlane.xlu0 %2285
    %v2287 = vsel %vm1588, %v2193, -inf
    %2288 = vmax.xlane.f32.xlu0 %v2287
    %v2289 = vpop.xlane.xlu0 %2288
    %v2290 = vsel %vm1588, %v2266, -inf
    %2291 = vmax.xlane.f32.xlu0 %v2290
    %v2292 = vpop.xlane.xlu0 %2291
    %v2293 = vsub.f32 %v1755, %v2271
    %v2294 = vsub.f32 %v1828, %v2274
    %v2295 = vsub.f32 %v1901, %v2277
    %v2296 = vsub.f32 %v1974, %v2280
    %v2297 = vsub.f32 %v2047, %v2283
    %v2298 = vsub.f32 %v2120, %v2286
    %v2299 = vsub.f32 %v2193, %v2289
    %v2300 = vsub.f32 %v2266, %v2292
    %v2301 = vmul.f32 %v2293, 1.442695
    %v2302 = vpow.pop %v2301
    %v2303 = vmul.f32 %v2294, 1.442695
    %v2304 = vpow.pop %v2303
    %v2305 = vmul.f32 %v2295, 1.442695
    %v2306 = vpow.pop %v2305
    %v2307 = vmul.f32 %v2296, 1.442695
    %v2308 = vpow.pop %v2307
    %v2309 = vmul.f32 %v2297, 1.442695
    %v2310 = vpow.pop %v2309
    %v2311 = vmul.f32 %v2298, 1.442695
    %v2312 = vpow.pop %v2311
    %v2313 = vmul.f32 %v2299, 1.442695
    %v2314 = vpow.pop %v2313
    %v2315 = vmul.f32 %v2300, 1.442695
    %v2316 = vpow.pop %v2315
    %v2317 = vsel %vm1588, %v2302, 0.0
    %2318 = vadd.xlane.f32.xlu0 %v2317
    %v2319 = vpop.xlane.xlu0 %2318
    %v2320 = vsel %vm1588, %v2304, 0.0
    %2321 = vadd.xlane.f32.xlu0 %v2320
    %v2322 = vpop.xlane.xlu0 %2321
    %v2323 = vsel %vm1588, %v2306, 0.0
    %2324 = vadd.xlane.f32.xlu0 %v2323
    %v2325 = vpop.xlane.xlu0 %2324
    %v2326 = vsel %vm1588, %v2308, 0.0
    %2327 = vadd.xlane.f32.xlu0 %v2326
    %v2328 = vpop.xlane.xlu0 %2327
    %v2329 = vsel %vm1588, %v2310, 0.0
    %2330 = vadd.xlane.f32.xlu0 %v2329
    %v2331 = vpop.xlane.xlu0 %2330
    %v2332 = vsel %vm1588, %v2312, 0.0
    %2333 = vadd.xlane.f32.xlu0 %v2332
    %v2334 = vpop.xlane.xlu0 %2333
    %v2335 = vsel %vm1588, %v2314, 0.0
    %2336 = vadd.xlane.f32.xlu0 %v2335
    %v2337 = vpop.xlane.xlu0 %2336
    %v2338 = vsel %vm1588, %v2316, 0.0
    %2339 = vadd.xlane.f32.xlu0 %v2338
    %v2340 = vpop.xlane.xlu0 %2339
    %v2341 = vrcp.pop %v2319
    %v2342 = vmul.f32 %v2302, %v2341
    %v2343 = vrcp.pop %v2322
    %v2344 = vmul.f32 %v2304, %v2343
    %v2345 = vrcp.pop %v2325
    %v2346 = vmul.f32 %v2306, %v2345
    %v2347 = vrcp.pop %v2328
    %v2348 = vmul.f32 %v2308, %v2347
    %v2349 = vrcp.pop %v2331
    %v2350 = vmul.f32 %v2310, %v2349
    %v2351 = vrcp.pop %v2334
    %v2352 = vmul.f32 %v2312, %v2351
    %v2353 = vrcp.pop %v2337
    %v2354 = vmul.f32 %v2314, %v2353
    %v2355 = vrcp.pop %v2340
    %v2356 = vmul.f32 %v2316, %v2355
    %s2357 = scalar_lea.vmem [#allocation6], 64
    %2358 = vst.msk [vmem:[%s2357] sm:$0xff] %vm1588, %v2342
    %2359 = vst.msk [vmem:[%s2357 + $0x8] sm:$0xff] %vm1588, %v2344
    %2360 = vst.msk [vmem:[%s2357 + $0x10] sm:$0xff] %vm1588, %v2346
    %2361 = vst.msk [vmem:[%s2357 + $0x18] sm:$0xff] %vm1588, %v2348
    %2362 = vst.msk [vmem:[%s2357 + $0x20] sm:$0xff] %vm1588, %v2350
    %2363 = vst.msk [vmem:[%s2357 + $0x28] sm:$0xff] %vm1588, %v2352
    %2364 = vst.msk [vmem:[%s2357 + $0x30] sm:$0xff] %vm1588, %v2354
    %2365 = vst.msk [vmem:[%s2357 + $0x38] sm:$0xff] %vm1588, %v2356
    %v2367 = vsel %vm1588, %v2342, 0
    %2369 = vmatprep.subr.mxu0 0.0
    %2370 = vmatpush1.msra.mxu0 %v771
    %2371 = vmatprep.subr.mxu0 0.0
    %2372 = vmatpush1.msra.mxu0 0.0
    %2373 = vmatprep.subr.mxu0 0.0
    %2374 = vmatpush1.msra.mxu0 0.0
    %2375 = vmatprep.subr.mxu0 0.0
    %2376 = vmatpush1.msra.mxu0 0.0
    %2377 = vmatprep.subr.mxu0 0.0
    %2378 = vmatpush1.msra.mxu0 0.0
    %2379 = vmatprep.subr.mxu0 0.0
    %2380 = vmatpush1.msra.mxu0 0.0
    %2381 = vmatprep.subr.mxu0 0.0
    %2382 = vmatpush1.msra.mxu0 0.0
    %2383 = vmatprep.subr.mxu0 0.0
    %2384 = vmatpush1.msra.mxu0 0.0
    %2385 = vmatprep.subr.mxu0 0.0
    %2386 = vmatpush1.msra.mxu0 0.0
    %2387 = vmatprep.subr.mxu0 0.0
    %2388 = vmatpush1.msra.mxu0 0.0
    %2389 = vmatprep.subr.mxu0 0.0
    %2390 = vmatpush1.msra.mxu0 0.0
    %2391 = vmatprep.subr.mxu0 0.0
    %2392 = vmatpush1.msra.mxu0 0.0
    %2393 = vmatprep.subr.mxu0 0.0
    %2394 = vmatpush1.msra.mxu0 0.0
    %2395 = vmatprep.subr.mxu0 0.0
    %2396 = vmatpush1.msra.mxu0 0.0
    %2397 = vmatprep.subr.mxu0 0.0
    %2398 = vmatpush1.msra.mxu0 0.0
    %2399 = vmatprep.subr.mxu0 0.0
    %2400 = vmatpush1.msra.mxu0 0.0
    %2401 = vmatprep.subr.mxu0 0.0
    %2402 = vmatpush1.msra.mxu0 0.0
    %2403 = vmatprep.subr.mxu0 0.0
    %2404 = vmatpush1.msra.mxu0 0.0
    %2405 = vmatprep.subr.mxu0 0.0
    %2406 = vmatpush1.msra.mxu0 0.0
    %2407 = vmatprep.subr.mxu0 0.0
    %2408 = vmatpush1.msra.mxu0 0.0
    %2409 = vmatprep.subr.mxu0 0.0
    %2410 = vmatpush1.msra.mxu0 0.0
    %2411 = vmatprep.subr.mxu0 0.0
    %2412 = vmatpush1.msra.mxu0 0.0
    %2413 = vmatprep.subr.mxu0 0.0
    %2414 = vmatpush1.msra.mxu0 0.0
    %2415 = vmatprep.subr.mxu0 0.0
    %2416 = vmatpush1.msra.mxu0 0.0
    %2417 = vmatprep.subr.mxu0 0.0
    %2418 = vmatpush1.msra.mxu0 0.0
    %2419 = vmatprep.subr.mxu0 0.0
    %2420 = vmatpush1.msra.mxu0 0.0
    %2421 = vmatprep.subr.mxu0 0.0
    %2422 = vmatpush1.msra.mxu0 0.0
    %2423 = vmatprep.subr.mxu0 0.0
    %2424 = vmatpush1.msra.mxu0 0.0
    %2425 = vmatprep.subr.mxu0 0.0
    %2426 = vmatpush1.msra.mxu0 0.0
    %2427 = vmatprep.subr.mxu0 0.0
    %2428 = vmatpush1.msra.mxu0 0.0
    %2429 = vmatprep.subr.mxu0 0.0
    %2430 = vmatpush1.msra.mxu0 0.0
    %2431 = vmatprep.subr.mxu0 0.0
    %2432 = vmatpush1.msra.mxu0 0.0
    %2433 = vmatprep.mubr.f32.mxu0 0.0
    %2434 = vmatmul.mubr.f32.gmra.mrb[0].mxu0 %v2367
    %v2435 = vpop.f32.mrb[0].mxu0
    %v2436 = vadd.f32 0.0, %v2435
    %v2437 = vpop.f32.mrb[0].mxu0
    %2438 = vdwg.mxu0
    %v2440 = vsel %vm1588, %v2344, 0
    %2442 = vmatprep.subr.mxu0 0.0
    %2443 = vmatpush1.msra.mxu0 %v776
    %2444 = vmatprep.subr.mxu0 0.0
    %2445 = vmatpush1.msra.mxu0 0.0
    %2446 = vmatprep.subr.mxu0 0.0
    %2447 = vmatpush1.msra.mxu0 0.0
    %2448 = vmatprep.subr.mxu0 0.0
    %2449 = vmatpush1.msra.mxu0 0.0
    %2450 = vmatprep.subr.mxu0 0.0
    %2451 = vmatpush1.msra.mxu0 0.0
    %2452 = vmatprep.subr.mxu0 0.0
    %2453 = vmatpush1.msra.mxu0 0.0
    %2454 = vmatprep.subr.mxu0 0.0
    %2455 = vmatpush1.msra.mxu0 0.0
    %2456 = vmatprep.subr.mxu0 0.0
    %2457 = vmatpush1.msra.mxu0 0.0
    %2458 = vmatprep.subr.mxu0 0.0
    %2459 = vmatpush1.msra.mxu0 0.0
    %2460 = vmatprep.subr.mxu0 0.0
    %2461 = vmatpush1.msra.mxu0 0.0
    %2462 = vmatprep.subr.mxu0 0.0
    %2463 = vmatpush1.msra.mxu0 0.0
    %2464 = vmatprep.subr.mxu0 0.0
    %2465 = vmatpush1.msra.mxu0 0.0
    %2466 = vmatprep.subr.mxu0 0.0
    %2467 = vmatpush1.msra.mxu0 0.0
    %2468 = vmatprep.subr.mxu0 0.0
    %2469 = vmatpush1.msra.mxu0 0.0
    %2470 = vmatprep.subr.mxu0 0.0
    %2471 = vmatpush1.msra.mxu0 0.0
    %2472 = vmatprep.subr.mxu0 0.0
    %2473 = vmatpush1.msra.mxu0 0.0
    %2474 = vmatprep.subr.mxu0 0.0
    %2475 = vmatpush1.msra.mxu0 0.0
    %2476 = vmatprep.subr.mxu0 0.0
    %2477 = vmatpush1.msra.mxu0 0.0
    %2478 = vmatprep.subr.mxu0 0.0
    %2479 = vmatpush1.msra.mxu0 0.0
    %2480 = vmatprep.subr.mxu0 0.0
    %2481 = vmatpush1.msra.mxu0 0.0
    %2482 = vmatprep.subr.mxu0 0.0
    %2483 = vmatpush1.msra.mxu0 0.0
    %2484 = vmatprep.subr.mxu0 0.0
    %2485 = vmatpush1.msra.mxu0 0.0
    %2486 = vmatprep.subr.mxu0 0.0
    %2487 = vmatpush1.msra.mxu0 0.0
    %2488 = vmatprep.subr.mxu0 0.0
    %2489 = vmatpush1.msra.mxu0 0.0
    %2490 = vmatprep.subr.mxu0 0.0
    %2491 = vmatpush1.msra.mxu0 0.0
    %2492 = vmatprep.subr.mxu0 0.0
    %2493 = vmatpush1.msra.mxu0 0.0
    %2494 = vmatprep.subr.mxu0 0.0
    %2495 = vmatpush1.msra.mxu0 0.0
    %2496 = vmatprep.subr.mxu0 0.0
    %2497 = vmatpush1.msra.mxu0 0.0
    %2498 = vmatprep.subr.mxu0 0.0
    %2499 = vmatpush1.msra.mxu0 0.0
    %2500 = vmatprep.subr.mxu0 0.0
    %2501 = vmatpush1.msra.mxu0 0.0
    %2502 = vmatprep.subr.mxu0 0.0
    %2503 = vmatpush1.msra.mxu0 0.0
    %2504 = vmatprep.subr.mxu0 0.0
    %2505 = vmatpush1.msra.mxu0 0.0
    %2506 = vmatprep.mubr.f32.mxu0 0.0
    %2507 = vmatmul.mubr.f32.gmra.mrb[0].mxu0 %v2440
    %v2508 = vpop.f32.mrb[0].mxu0
    %v2509 = vadd.f32 0.0, %v2508
    %v2510 = vpop.f32.mrb[0].mxu0
    %2511 = vdwg.mxu0
    %v2513 = vsel %vm1588, %v2346, 0
    %2515 = vmatprep.subr.mxu0 0.0
    %2516 = vmatpush1.msra.mxu0 %v846
    %2517 = vmatprep.subr.mxu0 0.0
    %2518 = vmatpush1.msra.mxu0 0.0
    %2519 = vmatprep.subr.mxu0 0.0
    %2520 = vmatpush1.msra.mxu0 0.0
    %2521 = vmatprep.subr.mxu0 0.0
    %2522 = vmatpush1.msra.mxu0 0.0
    %2523 = vmatprep.subr.mxu0 0.0
    %2524 = vmatpush1.msra.mxu0 0.0
    %2525 = vmatprep.subr.mxu0 0.0
    %2526 = vmatpush1.msra.mxu0 0.0
    %2527 = vmatprep.subr.mxu0 0.0
    %2528 = vmatpush1.msra.mxu0 0.0
    %2529 = vmatprep.subr.mxu0 0.0
    %2530 = vmatpush1.msra.mxu0 0.0
    %2531 = vmatprep.subr.mxu0 0.0
    %2532 = vmatpush1.msra.mxu0 0.0
    %2533 = vmatprep.subr.mxu0 0.0
    %2534 = vmatpush1.msra.mxu0 0.0
    %2535 = vmatprep.subr.mxu0 0.0
    %2536 = vmatpush1.msra.mxu0 0.0
    %2537 = vmatprep.subr.mxu0 0.0
    %2538 = vmatpush1.msra.mxu0 0.0
    %2539 = vmatprep.subr.mxu0 0.0
    %2540 = vmatpush1.msra.mxu0 0.0
    %2541 = vmatprep.subr.mxu0 0.0
    %2542 = vmatpush1.msra.mxu0 0.0
    %2543 = vmatprep.subr.mxu0 0.0
    %2544 = vmatpush1.msra.mxu0 0.0
    %2545 = vmatprep.subr.mxu0 0.0
    %2546 = vmatpush1.msra.mxu0 0.0
    %2547 = vmatprep.subr.mxu0 0.0
    %2548 = vmatpush1.msra.mxu0 0.0
    %2549 = vmatprep.subr.mxu0 0.0
    %2550 = vmatpush1.msra.mxu0 0.0
    %2551 = vmatprep.subr.mxu0 0.0
    %2552 = vmatpush1.msra.mxu0 0.0
    %2553 = vmatprep.subr.mxu0 0.0
    %2554 = vmatpush1.msra.mxu0 0.0
    %2555 = vmatprep.subr.mxu0 0.0
    %2556 = vmatpush1.msra.mxu0 0.0
    %2557 = vmatprep.subr.mxu0 0.0
    %2558 = vmatpush1.msra.mxu0 0.0
    %2559 = vmatprep.subr.mxu0 0.0
    %2560 = vmatpush1.msra.mxu0 0.0
    %2561 = vmatprep.subr.mxu0 0.0
    %2562 = vmatpush1.msra.mxu0 0.0
    %2563 = vmatprep.subr.mxu0 0.0
    %2564 = vmatpush1.msra.mxu0 0.0
    %2565 = vmatprep.subr.mxu0 0.0
    %2566 = vmatpush1.msra.mxu0 0.0
    %2567 = vmatprep.subr.mxu0 0.0
    %2568 = vmatpush1.msra.mxu0 0.0
    %2569 = vmatprep.subr.mxu0 0.0
    %2570 = vmatpush1.msra.mxu0 0.0
    %2571 = vmatprep.subr.mxu0 0.0
    %2572 = vmatpush1.msra.mxu0 0.0
    %2573 = vmatprep.subr.mxu0 0.0
    %2574 = vmatpush1.msra.mxu0 0.0
    %2575 = vmatprep.subr.mxu0 0.0
    %2576 = vmatpush1.msra.mxu0 0.0
    %2577 = vmatprep.subr.mxu0 0.0
    %2578 = vmatpush1.msra.mxu0 0.0
    %2579 = vmatprep.mubr.f32.mxu0 0.0
    %2580 = vmatmul.mubr.f32.gmra.mrb[0].mxu0 %v2513
    %v2581 = vpop.f32.mrb[0].mxu0
    %v2582 = vadd.f32 0.0, %v2581
    %v2583 = vpop.f32.mrb[0].mxu0
    %2584 = vdwg.mxu0
    %v2586 = vsel %vm1588, %v2348, 0
    %2588 = vmatprep.subr.mxu0 0.0
    %2589 = vmatpush1.msra.mxu0 %v851
    %2590 = vmatprep.subr.mxu0 0.0
    %2591 = vmatpush1.msra.mxu0 0.0
    %2592 = vmatprep.subr.mxu0 0.0
    %2593 = vmatpush1.msra.mxu0 0.0
    %2594 = vmatprep.subr.mxu0 0.0
    %2595 = vmatpush1.msra.mxu0 0.0
    %2596 = vmatprep.subr.mxu0 0.0
    %2597 = vmatpush1.msra.mxu0 0.0
    %2598 = vmatprep.subr.mxu0 0.0
    %2599 = vmatpush1.msra.mxu0 0.0
    %2600 = vmatprep.subr.mxu0 0.0
    %2601 = vmatpush1.msra.mxu0 0.0
    %2602 = vmatprep.subr.mxu0 0.0
    %2603 = vmatpush1.msra.mxu0 0.0
    %2604 = vmatprep.subr.mxu0 0.0
    %2605 = vmatpush1.msra.mxu0 0.0
    %2606 = vmatprep.subr.mxu0 0.0
    %2607 = vmatpush1.msra.mxu0 0.0
    %2608 = vmatprep.subr.mxu0 0.0
    %2609 = vmatpush1.msra.mxu0 0.0
    %2610 = vmatprep.subr.mxu0 0.0
    %2611 = vmatpush1.msra.mxu0 0.0
    %2612 = vmatprep.subr.mxu0 0.0
    %2613 = vmatpush1.msra.mxu0 0.0
    %2614 = vmatprep.subr.mxu0 0.0
    %2615 = vmatpush1.msra.mxu0 0.0
    %2616 = vmatprep.subr.mxu0 0.0
    %2617 = vmatpush1.msra.mxu0 0.0
    %2618 = vmatprep.subr.mxu0 0.0
    %2619 = vmatpush1.msra.mxu0 0.0
    %2620 = vmatprep.subr.mxu0 0.0
    %2621 = vmatpush1.msra.mxu0 0.0
    %2622 = vmatprep.subr.mxu0 0.0
    %2623 = vmatpush1.msra.mxu0 0.0
    %2624 = vmatprep.subr.mxu0 0.0
    %2625 = vmatpush1.msra.mxu0 0.0
    %2626 = vmatprep.subr.mxu0 0.0
    %2627 = vmatpush1.msra.mxu0 0.0
    %2628 = vmatprep.subr.mxu0 0.0
    %2629 = vmatpush1.msra.mxu0 0.0
    %2630 = vmatprep.subr.mxu0 0.0
    %2631 = vmatpush1.msra.mxu0 0.0
    %2632 = vmatprep.subr.mxu0 0.0
    %2633 = vmatpush1.msra.mxu0 0.0
    %2634 = vmatprep.subr.mxu0 0.0
    %2635 = vmatpush1.msra.mxu0 0.0
    %2636 = vmatprep.subr.mxu0 0.0
    %2637 = vmatpush1.msra.mxu0 0.0
    %2638 = vmatprep.subr.mxu0 0.0
    %2639 = vmatpush1.msra.mxu0 0.0
    %2640 = vmatprep.subr.mxu0 0.0
    %2641 = vmatpush1.msra.mxu0 0.0
    %2642 = vmatprep.subr.mxu0 0.0
    %2643 = vmatpush1.msra.mxu0 0.0
    %2644 = vmatprep.subr.mxu0 0.0
    %2645 = vmatpush1.msra.mxu0 0.0
    %2646 = vmatprep.subr.mxu0 0.0
    %2647 = vmatpush1.msra.mxu0 0.0
    %2648 = vmatprep.subr.mxu0 0.0
    %2649 = vmatpush1.msra.mxu0 0.0
    %2650 = vmatprep.subr.mxu0 0.0
    %2651 = vmatpush1.msra.mxu0 0.0
    %2652 = vmatprep.mubr.f32.mxu0 0.0
    %2653 = vmatmul.mubr.f32.gmra.mrb[0].mxu0 %v2586
    %v2654 = vpop.f32.mrb[0].mxu0
    %v2655 = vadd.f32 0.0, %v2654
    %v2656 = vpop.f32.mrb[0].mxu0
    %2657 = vdwg.mxu0
    %v2659 = vsel %vm1588, %v2350, 0
    %2661 = vmatprep.subr.mxu0 0.0
    %2662 = vmatpush1.msra.mxu0 %v921
    %2663 = vmatprep.subr.mxu0 0.0
    %2664 = vmatpush1.msra.mxu0 0.0
    %2665 = vmatprep.subr.mxu0 0.0
    %2666 = vmatpush1.msra.mxu0 0.0
    %2667 = vmatprep.subr.mxu0 0.0
    %2668 = vmatpush1.msra.mxu0 0.0
    %2669 = vmatprep.subr.mxu0 0.0
    %2670 = vmatpush1.msra.mxu0 0.0
    %2671 = vmatprep.subr.mxu0 0.0
    %2672 = vmatpush1.msra.mxu0 0.0
    %2673 = vmatprep.subr.mxu0 0.0
    %2674 = vmatpush1.msra.mxu0 0.0
    %2675 = vmatprep.subr.mxu0 0.0
    %2676 = vmatpush1.msra.mxu0 0.0
    %2677 = vmatprep.subr.mxu0 0.0
    %2678 = vmatpush1.msra.mxu0 0.0
    %2679 = vmatprep.subr.mxu0 0.0
    %2680 = vmatpush1.msra.mxu0 0.0
    %2681 = vmatprep.subr.mxu0 0.0
    %2682 = vmatpush1.msra.mxu0 0.0
    %2683 = vmatprep.subr.mxu0 0.0
    %2684 = vmatpush1.msra.mxu0 0.0
    %2685 = vmatprep.subr.mxu0 0.0
    %2686 = vmatpush1.msra.mxu0 0.0
    %2687 = vmatprep.subr.mxu0 0.0
    %2688 = vmatpush1.msra.mxu0 0.0
    %2689 = vmatprep.subr.mxu0 0.0
    %2690 = vmatpush1.msra.mxu0 0.0
    %2691 = vmatprep.subr.mxu0 0.0
    %2692 = vmatpush1.msra.mxu0 0.0
    %2693 = vmatprep.subr.mxu0 0.0
    %2694 = vmatpush1.msra.mxu0 0.0
    %2695 = vmatprep.subr.mxu0 0.0
    %2696 = vmatpush1.msra.mxu0 0.0
    %2697 = vmatprep.subr.mxu0 0.0
    %2698 = vmatpush1.msra.mxu0 0.0
    %2699 = vmatprep.subr.mxu0 0.0
    %2700 = vmatpush1.msra.mxu0 0.0
    %2701 = vmatprep.subr.mxu0 0.0
    %2702 = vmatpush1.msra.mxu0 0.0
    %2703 = vmatprep.subr.mxu0 0.0
    %2704 = vmatpush1.msra.mxu0 0.0
    %2705 = vmatprep.subr.mxu0 0.0
    %2706 = vmatpush1.msra.mxu0 0.0
    %2707 = vmatprep.subr.mxu0 0.0
    %2708 = vmatpush1.msra.mxu0 0.0
    %2709 = vmatprep.subr.mxu0 0.0
    %2710 = vmatpush1.msra.mxu0 0.0
    %2711 = vmatprep.subr.mxu0 0.0
    %2712 = vmatpush1.msra.mxu0 0.0
    %2713 = vmatprep.subr.mxu0 0.0
    %2714 = vmatpush1.msra.mxu0 0.0
    %2715 = vmatprep.subr.mxu0 0.0
    %2716 = vmatpush1.msra.mxu0 0.0
    %2717 = vmatprep.subr.mxu0 0.0
    %2718 = vmatpush1.msra.mxu0 0.0
    %2719 = vmatprep.subr.mxu0 0.0
    %2720 = vmatpush1.msra.mxu0 0.0
    %2721 = vmatprep.subr.mxu0 0.0
    %2722 = vmatpush1.msra.mxu0 0.0
    %2723 = vmatprep.subr.mxu0 0.0
    %2724 = vmatpush1.msra.mxu0 0.0
    %2725 = vmatprep.mubr.f32.mxu0 0.0
    %2726 = vmatmul.mubr.f32.gmra.mrb[0].mxu0 %v2659
    %v2727 = vpop.f32.mrb[0].mxu0
    %v2728 = vadd.f32 0.0, %v2727
    %v2729 = vpop.f32.mrb[0].mxu0
    %2730 = vdwg.mxu0
    %v2732 = vsel %vm1588, %v2352, 0
    %2734 = vmatprep.subr.mxu0 0.0
    %2735 = vmatpush1.msra.mxu0 %v926
    %2736 = vmatprep.subr.mxu0 0.0
    %2737 = vmatpush1.msra.mxu0 0.0
    %2738 = vmatprep.subr.mxu0 0.0
    %2739 = vmatpush1.msra.mxu0 0.0
    %2740 = vmatprep.subr.mxu0 0.0
    %2741 = vmatpush1.msra.mxu0 0.0
    %2742 = vmatprep.subr.mxu0 0.0
    %2743 = vmatpush1.msra.mxu0 0.0
    %2744 = vmatprep.subr.mxu0 0.0
    %2745 = vmatpush1.msra.mxu0 0.0
    %2746 = vmatprep.subr.mxu0 0.0
    %2747 = vmatpush1.msra.mxu0 0.0
    %2748 = vmatprep.subr.mxu0 0.0
    %2749 = vmatpush1.msra.mxu0 0.0
    %2750 = vmatprep.subr.mxu0 0.0
    %2751 = vmatpush1.msra.mxu0 0.0
    %2752 = vmatprep.subr.mxu0 0.0
    %2753 = vmatpush1.msra.mxu0 0.0
    %2754 = vmatprep.subr.mxu0 0.0
    %2755 = vmatpush1.msra.mxu0 0.0
    %2756 = vmatprep.subr.mxu0 0.0
    %2757 = vmatpush1.msra.mxu0 0.0
    %2758 = vmatprep.subr.mxu0 0.0
    %2759 = vmatpush1.msra.mxu0 0.0
    %2760 = vmatprep.subr.mxu0 0.0
    %2761 = vmatpush1.msra.mxu0 0.0
    %2762 = vmatprep.subr.mxu0 0.0
    %2763 = vmatpush1.msra.mxu0 0.0
    %2764 = vmatprep.subr.mxu0 0.0
    %2765 = vmatpush1.msra.mxu0 0.0
    %2766 = vmatprep.subr.mxu0 0.0
    %2767 = vmatpush1.msra.mxu0 0.0
    %2768 = vmatprep.subr.mxu0 0.0
    %2769 = vmatpush1.msra.mxu0 0.0
    %2770 = vmatprep.subr.mxu0 0.0
    %2771 = vmatpush1.msra.mxu0 0.0
    %2772 = vmatprep.subr.mxu0 0.0
    %2773 = vmatpush1.msra.mxu0 0.0
    %2774 = vmatprep.subr.mxu0 0.0
    %2775 = vmatpush1.msra.mxu0 0.0
    %2776 = vmatprep.subr.mxu0 0.0
    %2777 = vmatpush1.msra.mxu0 0.0
    %2778 = vmatprep.subr.mxu0 0.0
    %2779 = vmatpush1.msra.mxu0 0.0
    %2780 = vmatprep.subr.mxu0 0.0
    %2781 = vmatpush1.msra.mxu0 0.0
    %2782 = vmatprep.subr.mxu0 0.0
    %2783 = vmatpush1.msra.mxu0 0.0
    %2784 = vmatprep.subr.mxu0 0.0
    %2785 = vmatpush1.msra.mxu0 0.0
    %2786 = vmatprep.subr.mxu0 0.0
    %2787 = vmatpush1.msra.mxu0 0.0
    %2788 = vmatprep.subr.mxu0 0.0
    %2789 = vmatpush1.msra.mxu0 0.0
    %2790 = vmatprep.subr.mxu0 0.0
    %2791 = vmatpush1.msra.mxu0 0.0
    %2792 = vmatprep.subr.mxu0 0.0
    %2793 = vmatpush1.msra.mxu0 0.0
    %2794 = vmatprep.subr.mxu0 0.0
    %2795 = vmatpush1.msra.mxu0 0.0
    %2796 = vmatprep.subr.mxu0 0.0
    %2797 = vmatpush1.msra.mxu0 0.0
    %2798 = vmatprep.mubr.f32.mxu0 0.0
    %2799 = vmatmul.mubr.f32.gmra.mrb[0].mxu0 %v2732
    %v2800 = vpop.f32.mrb[0].mxu0
    %v2801 = vadd.f32 0.0, %v2800
    %v2802 = vpop.f32.mrb[0].mxu0
    %2803 = vdwg.mxu0
    %v2805 = vsel %vm1588, %v2354, 0
    %2807 = vmatprep.subr.mxu0 0.0
    %2808 = vmatpush1.msra.mxu0 %v996
    %2809 = vmatprep.subr.mxu0 0.0
    %2810 = vmatpush1.msra.mxu0 0.0
    %2811 = vmatprep.subr.mxu0 0.0
    %2812 = vmatpush1.msra.mxu0 0.0
    %2813 = vmatprep.subr.mxu0 0.0
    %2814 = vmatpush1.msra.mxu0 0.0
    %2815 = vmatprep.subr.mxu0 0.0
    %2816 = vmatpush1.msra.mxu0 0.0
    %2817 = vmatprep.subr.mxu0 0.0
    %2818 = vmatpush1.msra.mxu0 0.0
    %2819 = vmatprep.subr.mxu0 0.0
    %2820 = vmatpush1.msra.mxu0 0.0
    %2821 = vmatprep.subr.mxu0 0.0
    %2822 = vmatpush1.msra.mxu0 0.0
    %2823 = vmatprep.subr.mxu0 0.0
    %2824 = vmatpush1.msra.mxu0 0.0
    %2825 = vmatprep.subr.mxu0 0.0
    %2826 = vmatpush1.msra.mxu0 0.0
    %2827 = vmatprep.subr.mxu0 0.0
    %2828 = vmatpush1.msra.mxu0 0.0
    %2829 = vmatprep.subr.mxu0 0.0
    %2830 = vmatpush1.msra.mxu0 0.0
    %2831 = vmatprep.subr.mxu0 0.0
    %2832 = vmatpush1.msra.mxu0 0.0
    %2833 = vmatprep.subr.mxu0 0.0
    %2834 = vmatpush1.msra.mxu0 0.0
    %2835 = vmatprep.subr.mxu0 0.0
    %2836 = vmatpush1.msra.mxu0 0.0
    %2837 = vmatprep.subr.mxu0 0.0
    %2838 = vmatpush1.msra.mxu0 0.0
    %2839 = vmatprep.subr.mxu0 0.0
    %2840 = vmatpush1.msra.mxu0 0.0
    %2841 = vmatprep.subr.mxu0 0.0
    %2842 = vmatpush1.msra.mxu0 0.0
    %2843 = vmatprep.subr.mxu0 0.0
    %2844 = vmatpush1.msra.mxu0 0.0
    %2845 = vmatprep.subr.mxu0 0.0
    %2846 = vmatpush1.msra.mxu0 0.0
    %2847 = vmatprep.subr.mxu0 0.0
    %2848 = vmatpush1.msra.mxu0 0.0
    %2849 = vmatprep.subr.mxu0 0.0
    %2850 = vmatpush1.msra.mxu0 0.0
    %2851 = vmatprep.subr.mxu0 0.0
    %2852 = vmatpush1.msra.mxu0 0.0
    %2853 = vmatprep.subr.mxu0 0.0
    %2854 = vmatpush1.msra.mxu0 0.0
    %2855 = vmatprep.subr.mxu0 0.0
    %2856 = vmatpush1.msra.mxu0 0.0
    %2857 = vmatprep.subr.mxu0 0.0
    %2858 = vmatpush1.msra.mxu0 0.0
    %2859 = vmatprep.subr.mxu0 0.0
    %2860 = vmatpush1.msra.mxu0 0.0
    %2861 = vmatprep.subr.mxu0 0.0
    %2862 = vmatpush1.msra.mxu0 0.0
    %2863 = vmatprep.subr.mxu0 0.0
    %2864 = vmatpush1.msra.mxu0 0.0
    %2865 = vmatprep.subr.mxu0 0.0
    %2866 = vmatpush1.msra.mxu0 0.0
    %2867 = vmatprep.subr.mxu0 0.0
    %2868 = vmatpush1.msra.mxu0 0.0
    %2869 = vmatprep.subr.mxu0 0.0
    %2870 = vmatpush1.msra.mxu0 0.0
    %2871 = vmatprep.mubr.f32.mxu0 0.0
    %2872 = vmatmul.mubr.f32.gmra.mrb[0].mxu0 %v2805
    %v2873 = vpop.f32.mrb[0].mxu0
    %v2874 = vadd.f32 0.0, %v2873
    %v2875 = vpop.f32.mrb[0].mxu0
    %2876 = vdwg.mxu0
    %v2878 = vsel %vm1588, %v2356, 0
    %2880 = vmatprep.subr.mxu0 0.0
    %2881 = vmatpush1.msra.mxu0 %v1001
    %2882 = vmatprep.subr.mxu0 0.0
    %2883 = vmatpush1.msra.mxu0 0.0
    %2884 = vmatprep.subr.mxu0 0.0
    %2885 = vmatpush1.msra.mxu0 0.0
    %2886 = vmatprep.subr.mxu0 0.0
    %2887 = vmatpush1.msra.mxu0 0.0
    %2888 = vmatprep.subr.mxu0 0.0
    %2889 = vmatpush1.msra.mxu0 0.0
    %2890 = vmatprep.subr.mxu0 0.0
    %2891 = vmatpush1.msra.mxu0 0.0
    %2892 = vmatprep.subr.mxu0 0.0
    %2893 = vmatpush1.msra.mxu0 0.0
    %2894 = vmatprep.subr.mxu0 0.0
    %2895 = vmatpush1.msra.mxu0 0.0
    %2896 = vmatprep.subr.mxu0 0.0
    %2897 = vmatpush1.msra.mxu0 0.0
    %2898 = vmatprep.subr.mxu0 0.0
    %2899 = vmatpush1.msra.mxu0 0.0
    %2900 = vmatprep.subr.mxu0 0.0
    %2901 = vmatpush1.msra.mxu0 0.0
    %2902 = vmatprep.subr.mxu0 0.0
    %2903 = vmatpush1.msra.mxu0 0.0
    %2904 = vmatprep.subr.mxu0 0.0
    %2905 = vmatpush1.msra.mxu0 0.0
    %2906 = vmatprep.subr.mxu0 0.0
    %2907 = vmatpush1.msra.mxu0 0.0
    %2908 = vmatprep.subr.mxu0 0.0
    %2909 = vmatpush1.msra.mxu0 0.0
    %2910 = vmatprep.subr.mxu0 0.0
    %2911 = vmatpush1.msra.mxu0 0.0
    %2912 = vmatprep.subr.mxu0 0.0
    %2913 = vmatpush1.msra.mxu0 0.0
    %2914 = vmatprep.subr.mxu0 0.0
    %2915 = vmatpush1.msra.mxu0 0.0
    %2916 = vmatprep.subr.mxu0 0.0
    %2917 = vmatpush1.msra.mxu0 0.0
    %2918 = vmatprep.subr.mxu0 0.0
    %2919 = vmatpush1.msra.mxu0 0.0
    %2920 = vmatprep.subr.mxu0 0.0
    %2921 = vmatpush1.msra.mxu0 0.0
    %2922 = vmatprep.subr.mxu0 0.0
    %2923 = vmatpush1.msra.mxu0 0.0
    %2924 = vmatprep.subr.mxu0 0.0
    %2925 = vmatpush1.msra.mxu0 0.0
    %2926 = vmatprep.subr.mxu0 0.0
    %2927 = vmatpush1.msra.mxu0 0.0
    %2928 = vmatprep.subr.mxu0 0.0
    %2929 = vmatpush1.msra.mxu0 0.0
    %2930 = vmatprep.subr.mxu0 0.0
    %2931 = vmatpush1.msra.mxu0 0.0
    %2932 = vmatprep.subr.mxu0 0.0
    %2933 = vmatpush1.msra.mxu0 0.0
    %2934 = vmatprep.subr.mxu0 0.0
    %2935 = vmatpush1.msra.mxu0 0.0
    %2936 = vmatprep.subr.mxu0 0.0
    %2937 = vmatpush1.msra.mxu0 0.0
    %2938 = vmatprep.subr.mxu0 0.0
    %2939 = vmatpush1.msra.mxu0 0.0
    %2940 = vmatprep.subr.mxu0 0.0
    %2941 = vmatpush1.msra.mxu0 0.0
    %2942 = vmatprep.subr.mxu0 0.0
    %2943 = vmatpush1.msra.mxu0 0.0
    %2944 = vmatprep.mubr.f32.mxu0 0.0
    %2945 = vmatmul.mubr.f32.gmra.mrb[0].mxu0 %v2878
    %v2946 = vpop.f32.mrb[0].mxu0
    %v2947 = vadd.f32 0.0, %v2946
    %v2948 = vpop.f32.mrb[0].mxu0
    %2949 = vdwg.mxu0
    %v2950 = vsel %vm97, %v2436, 0.0
    %v2951 = vsel %vm97, %v2582, 0.0
    %v2952 = vadd.f32 %v2950, %v2951
    %v2953 = vsel %vm97, %v2728, 0.0
    %v2954 = vadd.f32 %v2952, %v2953
    %v2955 = vsel %vm97, %v2874, 0.0
    %v2956 = vadd.f32 %v2954, %v2955
    %v2957 = vsel %vm97, %v2509, 0.0
    %v2958 = vsel %vm97, %v2655, 0.0
    %v2959 = vadd.f32 %v2957, %v2958
    %v2960 = vsel %vm97, %v2801, 0.0
    %v2961 = vadd.f32 %v2959, %v2960
    %v2962 = vsel %vm97, %v2947, 0.0
    %v2963 = vadd.f32 %v2961, %v2962
    %s2964 = scalar_lea.vmem %s5, 8
    %v2965 = vld [vmem:[%s2964] sm:$0x3f]
    %v2966 = vadd.f32 %v2956, %v41
    %v2967 = vadd.f32 %v2963, %v42
    %v2968 = vsel %vm97, %v2966, 0.0
    %2969 = vadd.xlane.f32.xlu0 %v2968
    %v2970 = vpop.xlane.xlu0 %2969
    %v2971 = vsel %vm97, %v2967, 0.0
    %2972 = vadd.xlane.f32.xlu0 %v2971
    %v2973 = vpop.xlane.xlu0 %2972
    %v2974 = vrcp.pop 32.0
    %v2975 = vmul.f32 %v2970, %v2974
    %v2976 = vmul.f32 %v2973, %v2974
    %v2977 = vsub.f32 %v2966, %v2975
    %v2978 = vsub.f32 %v2967, %v2976
    %v2979 = vmul.f32 %v2977, %v2977
    %v2980 = vmul.f32 %v2978, %v2978
    %v2981 = vsel %vm97, %v2979, 0.0
    %2982 = vadd.xlane.f32.xlu0 %v2981
    %v2983 = vpop.xlane.xlu0 %2982
    %v2984 = vsel %vm97, %v2980, 0.0
    %2985 = vadd.xlane.f32.xlu0 %v2984
    %v2986 = vpop.xlane.xlu0 %2985
    %v2987 = vmul.f32 %v2983, %v2974
    %v2988 = vmul.f32 %v2986, %v2974
    %v2989 = vadd.f32 %v2987, 1e-06
    %v2990 = vadd.f32 %v2988, 1e-06
    %v2991 = vrsqrt.pop %v2989
    %v2992 = vrsqrt.pop %v2990
    %v2993 = vmul.f32 %v2977, %v2991
    %v2994 = vmul.f32 %v2978, %v2992
    %v2995 = vlaneseq
    %v2996 = vshrl.u32 %v2995, 7
    %v2997 = vsub.s32 0, %v2996
    %v2998 = vrot.slane %v2965, %v2997
    %v2999 = vmul.f32 %v2993, %v2998
    %v3000 = vmul.f32 %v2994, %v2998
    %v3001 = vlaneseq
    %v3002 = vshrl.u32 %v3001, 7
    %v3003 = vsub.s32 1, %v3002
    %v3004 = vrot.slane %v2965, %v3003
    %v3005 = vadd.f32 %v2999, %v3004
    %v3006 = vadd.f32 %v3000, %v3004
    %s3007 = scalar_lea.vmem %s3, 32
    %v3008 = vld [vmem:[%s3007] sm:$0xff]
    %v3009 = vld [vmem:[%s3007 + $0x8] sm:$0xff]
    %v3010 = vld [vmem:[%s3007 + $0x10] sm:$0xff]
    %v3011 = vld [vmem:[%s3007 + $0x18] sm:$0xff]
    %v3012 = vlaneseq
    %v3013 = vshrl.u32 %v3012, 7
    %v3014 = vsub.s32 2, %v3013
    %v3015 = vrot.slane %v2965, %v3014
    %v3017 = vsel %vm97, %v3005, 0
    %v3020 = vsel %vm97, %v3006, 0
    %3022 = vmatprep.subr.mxu0 0.0
    %3023 = vmatpush1.msra.mxu0 %v3008
    %3024 = vmatprep.subr.mxu0 0.0
    %3025 = vmatpush1.msra.mxu0 %v3009
    %3026 = vmatprep.subr.mxu0 0.0
    %3027 = vmatpush1.msra.mxu0 %v3010
    %3028 = vmatprep.subr.mxu0 0.0
    %3029 = vmatpush1.msra.mxu0 %v3011
    %3030 = vmatprep.subr.mxu0 0.0
    %3031 = vmatpush1.msra.mxu0 0.0
    %3032 = vmatprep.subr.mxu0 0.0
    %3033 = vmatpush1.msra.mxu0 0.0
    %3034 = vmatprep.subr.mxu0 0.0
    %3035 = vmatpush1.msra.mxu0 0.0
    %3036 = vmatprep.subr.mxu0 0.0
    %3037 = vmatpush1.msra.mxu0 0.0
    %3038 = vmatprep.subr.mxu0 0.0
    %3039 = vmatpush1.msra.mxu0 0.0
    %3040 = vmatprep.subr.mxu0 0.0
    %3041 = vmatpush1.msra.mxu0 0.0
    %3042 = vmatprep.subr.mxu0 0.0
    %3043 = vmatpush1.msra.mxu0 0.0
    %3044 = vmatprep.subr.mxu0 0.0
    %3045 = vmatpush1.msra.mxu0 0.0
    %3046 = vmatprep.subr.mxu0 0.0
    %3047 = vmatpush1.msra.mxu0 0.0
    %3048 = vmatprep.subr.mxu0 0.0
    %3049 = vmatpush1.msra.mxu0 0.0
    %3050 = vmatprep.subr.mxu0 0.0
    %3051 = vmatpush1.msra.mxu0 0.0
    %3052 = vmatprep.subr.mxu0 0.0
    %3053 = vmatpush1.msra.mxu0 0.0
    %3054 = vmatprep.subr.mxu0 0.0
    %3055 = vmatpush1.msra.mxu0 0.0
    %3056 = vmatprep.subr.mxu0 0.0
    %3057 = vmatpush1.msra.mxu0 0.0
    %3058 = vmatprep.subr.mxu0 0.0
    %3059 = vmatpush1.msra.mxu0 0.0
    %3060 = vmatprep.subr.mxu0 0.0
    %3061 = vmatpush1.msra.mxu0 0.0
    %3062 = vmatprep.subr.mxu0 0.0
    %3063 = vmatpush1.msra.mxu0 0.0
    %3064 = vmatprep.subr.mxu0 0.0
    %3065 = vmatpush1.msra.mxu0 0.0
    %3066 = vmatprep.subr.mxu0 0.0
    %3067 = vmatpush1.msra.mxu0 0.0
    %3068 = vmatprep.subr.mxu0 0.0
    %3069 = vmatpush1.msra.mxu0 0.0
    %3070 = vmatprep.subr.mxu0 0.0
    %3071 = vmatpush1.msra.mxu0 0.0
    %3072 = vmatprep.subr.mxu0 0.0
    %3073 = vmatpush1.msra.mxu0 0.0
    %3074 = vmatprep.subr.mxu0 0.0
    %3075 = vmatpush1.msra.mxu0 0.0
    %3076 = vmatprep.subr.mxu0 0.0
    %3077 = vmatpush1.msra.mxu0 0.0
    %3078 = vmatprep.subr.mxu0 0.0
    %3079 = vmatpush1.msra.mxu0 0.0
    %3080 = vmatprep.subr.mxu0 0.0
    %3081 = vmatpush1.msra.mxu0 0.0
    %3082 = vmatprep.subr.mxu0 0.0
    %3083 = vmatpush1.msra.mxu0 0.0
    %3084 = vmatprep.subr.mxu0 0.0
    %3085 = vmatpush1.msra.mxu0 0.0
    %3086 = vmatprep.mubr.f32.mxu0 0.0
    %3087 = vmatmul.mubr.f32.gmra.mrb[0].mxu0 %v3017
    %v3088 = vpop.f32.mrb[0].mxu0
    %v3089 = vadd.f32 %v3015, %v3088
    %v3090 = vpop.f32.mrb[0].mxu0
    %3091 = vmatprep.mubr.f32.mxu0 0.0
    %3092 = vmatmul.mubr.f32.gmra.mrb[0].mxu0 %v3020
    %v3093 = vpop.f32.mrb[0].mxu0
    %v3094 = vadd.f32 %v3015, %v3093
    %v3095 = vpop.f32.mrb[0].mxu0
    %3096 = vdwg.mxu0
    %v3097 = vmax.f32 %v3089, 0.0
    %v3098 = vmax.f32 %v3094, 0.0
    %s3099 = scalar_lea.vmem %s4, 64
    %v3100 = vld [vmem:[%s3099] sm:$0xff]
    %v3101 = vld [vmem:[%s3099 + $0x8] sm:$0xff]
    %v3102 = vld [vmem:[%s3099 + $0x10] sm:$0xff]
    %v3103 = vld [vmem:[%s3099 + $0x18] sm:$0xff]
    %v3104 = vld [vmem:[%s3099 + $0x20] sm:$0xff]
    %v3105 = vld [vmem:[%s3099 + $0x28] sm:$0xff]
    %v3106 = vld [vmem:[%s3099 + $0x30] sm:$0xff]
    %v3107 = vld [vmem:[%s3099 + $0x38] sm:$0xff]
    %v3108 = vlaneseq
    %v3109 = vshrl.u32 %v3108, 7
    %v3110 = vsub.s32 3, %v3109
    %v3111 = vrot.slane %v2965, %v3110
    %vm3112 = vcmask 523264
    %v3114 = vsel %vm3112, %v3097, 0
    %v3117 = vsel %vm3112, %v3098, 0
    %3119 = vmatprep.subr.mxu0 0.0
    %3120 = vmatpush1.msra.mxu0 %v3100
    %3121 = vmatprep.subr.mxu0 0.0
    %3122 = vmatpush1.msra.mxu0 %v3101
    %3123 = vmatprep.subr.mxu0 0.0
    %3124 = vmatpush1.msra.mxu0 %v3102
    %3125 = vmatprep.subr.mxu0 0.0
    %3126 = vmatpush1.msra.mxu0 %v3103
    %3127 = vmatprep.subr.mxu0 0.0
    %3128 = vmatpush1.msra.mxu0 %v3104
    %3129 = vmatprep.subr.mxu0 0.0
    %3130 = vmatpush1.msra.mxu0 %v3105
    %3131 = vmatprep.subr.mxu0 0.0
    %3132 = vmatpush1.msra.mxu0 %v3106
    %3133 = vmatprep.subr.mxu0 0.0
    %3134 = vmatpush1.msra.mxu0 %v3107
    %3135 = vmatprep.subr.mxu0 0.0
    %3136 = vmatpush1.msra.mxu0 0.0
    %3137 = vmatprep.subr.mxu0 0.0
    %3138 = vmatpush1.msra.mxu0 0.0
    %3139 = vmatprep.subr.mxu0 0.0
    %3140 = vmatpush1.msra.mxu0 0.0
    %3141 = vmatprep.subr.mxu0 0.0
    %3142 = vmatpush1.msra.mxu0 0.0
    %3143 = vmatprep.subr.mxu0 0.0
    %3144 = vmatpush1.msra.mxu0 0.0
    %3145 = vmatprep.subr.mxu0 0.0
    %3146 = vmatpush1.msra.mxu0 0.0
    %3147 = vmatprep.subr.mxu0 0.0
    %3148 = vmatpush1.msra.mxu0 0.0
    %3149 = vmatprep.subr.mxu0 0.0
    %3150 = vmatpush1.msra.mxu0 0.0
    %3151 = vmatprep.subr.mxu0 0.0
    %3152 = vmatpush1.msra.mxu0 0.0
    %3153 = vmatprep.subr.mxu0 0.0
    %3154 = vmatpush1.msra.mxu0 0.0
    %3155 = vmatprep.subr.mxu0 0.0
    %3156 = vmatpush1.msra.mxu0 0.0
    %3157 = vmatprep.subr.mxu0 0.0
    %3158 = vmatpush1.msra.mxu0 0.0
    %3159 = vmatprep.subr.mxu0 0.0
    %3160 = vmatpush1.msra.mxu0 0.0
    %3161 = vmatprep.subr.mxu0 0.0
    %3162 = vmatpush1.msra.mxu0 0.0
    %3163 = vmatprep.subr.mxu0 0.0
    %3164 = vmatpush1.msra.mxu0 0.0
    %3165 = vmatprep.subr.mxu0 0.0
    %3166 = vmatpush1.msra.mxu0 0.0
    %3167 = vmatprep.subr.mxu0 0.0
    %3168 = vmatpush1.msra.mxu0 0.0
    %3169 = vmatprep.subr.mxu0 0.0
    %3170 = vmatpush1.msra.mxu0 0.0
    %3171 = vmatprep.subr.mxu0 0.0
    %3172 = vmatpush1.msra.mxu0 0.0
    %3173 = vmatprep.subr.mxu0 0.0
    %3174 = vmatpush1.msra.mxu0 0.0
    %3175 = vmatprep.subr.mxu0 0.0
    %3176 = vmatpush1.msra.mxu0 0.0
    %3177 = vmatprep.subr.mxu0 0.0
    %3178 = vmatpush1.msra.mxu0 0.0
    %3179 = vmatprep.subr.mxu0 0.0
    %3180 = vmatpush1.msra.mxu0 0.0
    %3181 = vmatprep.subr.mxu0 0.0
    %3182 = vmatpush1.msra.mxu0 0.0
    %3183 = vmatprep.mubr.f32.mxu0 0.0
    %3184 = vmatmul.mubr.f32.gmra.mrb[0].mxu0 %v3114
    %v3185 = vpop.f32.mrb[0].mxu0
    %v3186 = vadd.f32 %v3111, %v3185
    %v3187 = vpop.f32.mrb[0].mxu0
    %3188 = vmatprep.mubr.f32.mxu0 0.0
    %3189 = vmatmul.mubr.f32.gmra.mrb[0].mxu0 %v3117
    %v3190 = vpop.f32.mrb[0].mxu0
    %v3191 = vadd.f32 %v3111, %v3190
    %v3192 = vpop.f32.mrb[0].mxu0
    %3193 = vdwg.mxu0
    %v3194 = vadd.f32 %v3186, %v3005
    %v3195 = vadd.f32 %v3191, %v3006
    %v3196 = vsel %vm97, %v3194, 0.0
    %3197 = vadd.xlane.f32.xlu0 %v3196
    %v3198 = vpop.xlane.xlu0 %3197
    %v3199 = vsel %vm97, %v3195, 0.0
    %3200 = vadd.xlane.f32.xlu0 %v3199
    %v3201 = vpop.xlane.xlu0 %3200
    %v3202 = vmul.f32 %v3198, %v2974
    %v3203 = vmul.f32 %v3201, %v2974
    %v3204 = vsub.f32 %v3194, %v3202
    %v3205 = vsub.f32 %v3195, %v3203
    %v3206 = vmul.f32 %v3204, %v3204
    %v3207 = vmul.f32 %v3205, %v3205
    %v3208 = vsel %vm97, %v3206, 0.0
    %3209 = vadd.xlane.f32.xlu0 %v3208
    %v3210 = vpop.xlane.xlu0 %3209
    %v3211 = vsel %vm97, %v3207, 0.0
    %3212 = vadd.xlane.f32.xlu0 %v3211
    %v3213 = vpop.xlane.xlu0 %3212
    %v3214 = vmul.f32 %v3210, %v2974
    %v3215 = vmul.f32 %v3213, %v2974
    %v3216 = vadd.f32 %v3214, 1e-06
    %v3217 = vadd.f32 %v3215, 1e-06
    %v3218 = vrsqrt.pop %v3216
    %v3219 = vrsqrt.pop %v3217
    %v3220 = vmul.f32 %v3204, %v3218
    %v3221 = vmul.f32 %v3205, %v3219
    %v3222 = vlaneseq
    %v3223 = vshrl.u32 %v3222, 7
    %v3224 = vsub.s32 4, %v3223
    %v3225 = vrot.slane %v2965, %v3224
    %v3226 = vmul.f32 %v3220, %v3225
    %v3227 = vmul.f32 %v3221, %v3225
    %v3228 = vlaneseq
    %v3229 = vshrl.u32 %v3228, 7
    %v3230 = vsub.s32 5, %v3229
    %v3231 = vrot.slane %v2965, %v3230
    %v3232 = vadd.f32 %v3226, %v3231
    %v3233 = vadd.f32 %v3227, %v3231
    %3234 = vst.msk [vmem:[#allocation5] sm:$0xff] %vm97, %v3232
    %3235 = vst.msk [vmem:[#allocation5 + $0x8] sm:$0xff] %vm97, %v3233
    // Predicated region
    $region30: #{tpu_custom_call.1} parent=1 // pred_check
      _
    $region31: #{tpu_custom_call.1} parent=1 // pred_check_branch
      %3237 = sbr.rel (0) target = $region33
    $region32: #{tpu_custom_call.1} parent=1 // pred_region
      %s3239 = ssub.s32 256, 256
      %3240 = vsyncadd [#allocation4], %s3239
      %s3241 = sshll.u32 [#allocation5], 4
      %s3242 = int_to_ptr.vmem [resolvable:$true] %s3241
      %3247 = dma.vmem_to_hbm [thread:$0]  %s3242, 256, %s6, [#allocation4], 128, 128, 8
    $region33: #{tpu_custom_call.1} parent=1 // pred_fallthru
      _
    // Predicated region
    $region34: #{tpu_custom_call.1} parent=1 // pred_check
      _
    $region35: #{tpu_custom_call.1} parent=1 // pred_check_branch
      %3249 = sbr.rel (0) target = $region37
    $region36: #{tpu_custom_call.1} parent=1 // pred_region
      %s3251 = ssub.s32 2048, 2048
      %3252 = vsyncadd [#allocation7], %s3251
      %s3253 = sshll.u32 [#allocation6], 4
      %s3254 = int_to_ptr.vmem [resolvable:$true] %s3253
      %3259 = dma.vmem_to_hbm [thread:$0]  %s3254, 2048, %s7, [#allocation7], 128, 128, 8
    $region37: #{tpu_custom_call.1} parent=1 // pred_fallthru
      _
    // Predicated region
    $region38: #{tpu_custom_call.1} parent=1 // pred_check
      _
    $region39: #{tpu_custom_call.1} parent=1 // pred_check_branch
      %3261 = sbr.rel (0) target = $region41
    $region40: #{tpu_custom_call.1} parent=1 // pred_region
      %3262 = dma.done [#allocation4], 256
    $region41: #{tpu_custom_call.1} parent=1 // pred_fallthru
      _
    // Predicated region
    $region42: #{tpu_custom_call.1} parent=1 // pred_check
      _
    $region43: #{tpu_custom_call.1} parent=1 // pred_check_branch
      %3264 = sbr.rel (0) target = $region45
    $region44: #{tpu_custom_call.1} parent=1 // pred_region
      %3265 = dma.done [#allocation7], 2048
    $region45: #{tpu_custom_call.1} parent=1 // pred_fallthru
      _
    %3266 = vsyncpa [#allocation3], 1
    %3267 = vsyncpa [#allocation4], 1
    %3268 = vsyncpa [#allocation7], 1

</llo_original>
